<compile_context>
chip_gen: v7x
topology: tpu7x:2x2x1
jax: 0.10.0
libtpu: 0.0.40
codegen_flags: <defaults>
</compile_context>

<pallas_src>
import functools
import math

import jax
import jax.numpy as jnp
from jax import lax
from jax.experimental import pallas as pl
from jax.experimental.pallas import tpu as pltpu


# --------------------------------------------------------------------------- kernel
def _encoder_layer_kernel(x_ref, mask_ref,
                          wqkv_ref, bqkv_ref, wo_ref, bo_ref,
                          w1_ref, b1_ref, w2_ref, b2_ref,
                          out_ref, *, num_heads, head_dim, precise_softmax):
    Bblk = mask_ref.shape[0]
    S = mask_ref.shape[1]
    H, dq = num_heads, head_dim
    HD = H * dq

    xf = x_ref[...]                              # (Mblk, D), compute dtype (f32/bf16)
    cdt = xf.dtype

    # Fused Q/K/V projection: ONE (Mblk, D) @ (D, 3*HD) MXU GEMM, f32 accumulation.
    # The 1/sqrt(S) score scale is already folded into the q columns of wqkv/bqkv.
    qkv = jnp.dot(xf, wqkv_ref[...], preferred_element_type=jnp.float32)
    qkv = qkv + bqkv_ref[...]                    # (Mblk, 3*HD), f32

    nt_dims = (((1,), (1,)), ((), ()))           # q @ k^T without a separate transpose

    ctx_rows = []
    for b in range(Bblk):                        # static; Bblk is small by construction
        tok = qkv[b * S:(b + 1) * S, :]          # (S, 3*HD), static row slice
        mb = mask_ref[b] != 0                    # (S, S) bool; nonzero == masked
        head_ctx = []
        for h in range(H):                       # static; scores are block-diag per head
            q = tok[:, h * dq:(h + 1) * dq].astype(cdt)
            k = tok[:, HD + h * dq:HD + (h + 1) * dq].astype(cdt)
            v = tok[:, 2 * HD + h * dq:2 * HD + (h + 1) * dq].astype(cdt)

            s = lax.dot_general(q, k, nt_dims,
                                preferred_element_type=jnp.float32)      # (S, S)
            s = jnp.where(mb, jnp.float32(-1e9), s)   # exact masked_fill_ semantics

            # numerically stable softmax, kept in f32 (v5e has no bf16 VPU/EUP)
            m = jnp.max(s, axis=-1, keepdims=True)
            e = jnp.exp(s - m)
            den = jnp.sum(e, axis=-1, keepdims=True)
            if precise_softmax:
                p = e / den
            else:
                p = e * pl.reciprocal(den, approx=True)   # EUP slot, ~2^-12 rel err
            head_ctx.append(jnp.dot(p.astype(cdt), v,
                                    preferred_element_type=jnp.float32))  # (S, dq)
        row = head_ctx[0] if H == 1 else jnp.concatenate(head_ctx, axis=-1)
        ctx_rows.append(row)                     # (S, H*dq), head-major like torch.cat

    ctx = ctx_rows[0] if Bblk == 1 else jnp.concatenate(ctx_rows, axis=0)
    ctx = ctx.astype(cdt)                        # (Mblk, H*dq)

    # ONE output projection with K = H*dq (replaces per-head K=dq accumulations).
    attn = jnp.dot(ctx, wo_ref[...], preferred_element_type=jnp.float32) + bo_ref[...]

    # Position-wise FFN on the flattened (Mblk, D) slab.
    h1 = jnp.dot(attn.astype(cdt), w1_ref[...],
                 preferred_element_type=jnp.float32) + b1_ref[...]
    h1 = jnp.maximum(h1, jnp.float32(0.0))
    y = jnp.dot(h1.astype(cdt), w2_ref[...],
                preferred_element_type=jnp.float32) + b2_ref[...]
    # TODO(synk): train-mode dropout not implemented (eval-mode identity).

    out_ref[...] = y.astype(out_ref.dtype)       # (Mblk, D); lane-dense once D >= 128


# ------------------------------------------------------------------ one-time weight prep
def prepare_encoder_weights(params, *, num_heads, seq_len, compute_dtype=jnp.bfloat16):
    """Fuse / fold / cast the weights once; cache the result next to the params.

    Folds the PyTorch `scale = query.size(1) ** 0.5` (i.e. 1/sqrt(seq_len)) into the
    q projection, so prepared weights are tied to this seq_len.
    """
    H = num_heads
    D, dq = params["wq"].shape[1], params["wq"].shape[2]
    HD = H * dq
    F = params["w1"].shape[-1]
    inv_scale = 1.0 / (float(seq_len) ** 0.5)

    def fuse(w):                                  # (H, D, dq) -> (D, H*dq), head-major cols
        return jnp.transpose(w, (1, 0, 2)).reshape(D, HD)

    w_qkv = jnp.concatenate([fuse(params["wq"]) * inv_scale,
                             fuse(params["wk"]),
                             fuse(params["wv"])], axis=-1)            # (D, 3*HD)
    b_qkv = jnp.concatenate([params["bq"].reshape(-1) * inv_scale,
                             params["bk"].reshape(-1),
                             params["bv"].reshape(-1)]).reshape(1, 3 * HD)

    # TODO(synk): on v7x, w1/w2 could additionally be stored in fp8 (bf16 activations,
    # f32 accumulation) to halve FFN weight DMA; not drop-in on v5e/v6e.
    return {
        "num_heads": H, "head_dim": dq, "dim": D, "dim_ff": F,
        "compute_dtype": compute_dtype,
        "wqkv": w_qkv.astype(compute_dtype),
        "bqkv": b_qkv.astype(jnp.float32),
        "wo": params["wo"].astype(compute_dtype),                     # (H*dq, D)
        "bo": params["bo"].reshape(1, D).astype(jnp.float32),
        "w1": params["w1"].astype(compute_dtype),
        "b1": params["b1"].reshape(1, F).astype(jnp.float32),
        "w2": params["w2"].astype(compute_dtype),
        "b2": params["b2"].reshape(1, D).astype(jnp.float32),
    }


# --------------------------------------------------------------------------- wrapper
def _pick_batch_block(B, S):
    # Aim for ~512 M-rows per grid step (large tiles reach ~85% of HBM roofline),
    # but keep enough grid steps to pipeline and to feed both v7x TensorCores.
    rows_target = 512
    bb = max(1, min(B, rows_target // max(S, 1)))
    min_steps = 4 if B >= 4 else (2 if B >= 2 else 1)
    while bb > 1 and B // bb < min_steps:
        bb -= 1
    while B % bb:
        bb -= 1
    return bb


def _derive_vmem_limit(batch_block, S, D, HD, F, cbytes, obytes):
    # Weights (worst case double-buffered) + 2x streamed x/mask/out blocks
    # + f32 intermediates, x1.5 headroom; clamp to [32 MiB, 64 MiB] so the same
    # setting is valid on v7x (64 MiB VMEM) and under-uses nothing on v5e/v6e.
    Mblk = batch_block * S
    weights = ((D * 3 * HD + HD * D + D * F + F * D) * cbytes
               + (3 * HD + 2 * D + F) * 4)
    streamed = 2 * (Mblk * D * cbytes + batch_block * S * S + Mblk * D * obytes)
    interm = 4 * (Mblk * 3 * HD + 2 * batch_block * S * S
                  + Mblk * HD + Mblk * F + 2 * Mblk * D)
    est = int(1.5 * (2 * weights + streamed + interm))
    return min(max(est, 32 * 1024 * 1024), 64 * 1024 * 1024)


def encoder_layer_pallas(x, attention_mask, prepared, *, batch_block=None,
                         out_dtype=jnp.float32, precise_softmax=False):
    B, S, D = x.shape
    H, dq = prepared["num_heads"], prepared["head_dim"]
    HD, F = H * dq, prepared["dim_ff"]
    cdt = prepared["compute_dtype"]
    cbytes = jnp.dtype(cdt).itemsize
    obytes = jnp.dtype(out_dtype).itemsize

    if batch_block is None:
        batch_block = _pick_batch_block(B, S)
    batch_block = max(1, min(batch_block, B))
    while B % batch_block:
        batch_block -= 1
    grid = (B // batch_block,)
    Mblk = batch_block * S

    # Flatten (B,S,D) -> (B*S,D) in the wrapper: the GEMMs see a 2-D M-tile and the
    # kernel never reshapes the streamed activation / output blocks.
    x_flat = x.reshape(B * S, D).astype(cdt)
    # int8 mask: the (B,S,S) mask scales as S^2 -> keep it 1 byte/element in HBM.
    mask_i8 = (attention_mask != 0).astype(jnp.int8)

    weights = (prepared["wqkv"], prepared["bqkv"], prepared["wo"], prepared["bo"],
               prepared["w1"], prepared["b1"], prepared["w2"], prepared["b2"])

    kernel = functools.partial(_encoder_layer_kernel, num_heads=H, head_dim=dq,
                               precise_softmax=precise_softmax)
    vmem_limit = _derive_vmem_limit(batch_block, S, D, HD, F, cbytes, obytes)

    def build(single_buffer_weights):
        def wspec(a):
            nd = a.ndim
            imap = lambda b, _n=nd: (0,) * _n            # grid-invariant block
            if single_buffer_weights:
                # weights never change across the grid -> 1 buffer instead of 2
                return pl.BlockSpec(a.shape, imap, pipeline_mode=pl.Buffered(1))
            return pl.BlockSpec(a.shape, imap)

        return pl.pallas_call(
            kernel,
            out_shape=jax.ShapeDtypeStruct((B * S, D), out_dtype),
            grid=grid,
            in_specs=[pl.BlockSpec((Mblk, D), lambda b: (b, 0)),            # x (flat)
                      pl.BlockSpec((batch_block, S, S), lambda b: (b, 0, 0)),  # mask
                      ] + [wspec(a) for a in weights],
            out_specs=pl.BlockSpec((Mblk, D), lambda b: (b, 0)),
            compiler_params=pltpu.CompilerParams(
                dimension_semantics=("parallel",),
                vmem_limit_bytes=vmem_limit),
        )

    try:
        out_flat = build(True)(x_flat, mask_i8, *weights)
    except Exception:
        # pipeline_mode=pl.Buffered(1) not supported by this jax/libtpu combination:
        # fall back to default double-buffered weight blocks (correctness identical).
        out_flat = build(False)(x_flat, mask_i8, *weights)

    return out_flat.reshape(B, S, D)


# ----------------------------------------------------------------- pure-JAX reference
def encoder_layer_ref(x, attention_mask, params, *, num_heads):
    """Plain-JAX reference mirroring the PyTorch forward (eval mode)."""
    B, S, D = x.shape
    mask = attention_mask != 0
    scale = S ** 0.5                              # PyTorch quirk: query.size(1) ** 0.5
    ctxs = []
    for h in range(num_heads):
        q = x @ params["wq"][h] + params["bq"][h]
        k = x @ params["wk"][h] + params["bk"][h]
        v = x @ params["wv"][h] + params["bv"][h]
        scores = jnp.einsum("bsd,btd->bst", q, k) / scale
        scores = jnp.where(mask, -1e9, scores)
        attn = jax.nn.softmax(scores, axis=-1)
        ctxs.append(jnp.einsum("bst,btd->bsd", attn, v))
    ctx = jnp.concatenate(ctxs, axis=-1)
    out = ctx @ params["wo"] + params["bo"]
    h1 = jax.nn.relu(out @ params["w1"] + params["b1"])
    return h1 @ params["w2"] + params["b2"]


def init_params(key, dim, dim_ff, num_heads):
    dq = max(dim // num_heads, 1)
    ks = jax.random.split(key, 12)

    def lin(k, fan_in, shape):
        bound = 1.0 / math.sqrt(fan_in)
        return jax.random.uniform(k, shape, jnp.float32, -bound, bound)

    return {
        "wq": lin(ks[0], dim, (num_heads, dim, dq)),
        "bq": lin(ks[1], dim, (num_heads, dq)),
        "wk": lin(ks[2], dim, (num_heads, dim, dq)),
        "bk": lin(ks[3], dim, (num_heads, dq)),
        "wv": lin(ks[4], dim, (num_heads, dim, dq)),
        "bv": lin(ks[5], dim, (num_heads, dq)),
        "wo": lin(ks[6], num_heads * dq, (num_heads * dq, dim)),
        "bo": lin(ks[7], num_heads * dq, (1, dim)),
        "w1": lin(ks[8], dim, (dim, dim_ff)),
        "b1": lin(ks[9], dim, (1, dim_ff)),
        "w2": lin(ks[10], dim_ff, (dim_ff, dim)),
        "b2": lin(ks[11], dim_ff, (1, dim)),
    }


if __name__ == "__main__":
    B, S, DIM, DIM_FF, HEADS = 2, 8, 32, 64, 4

    key = jax.random.PRNGKey(0)
    k_x, k_m, k_p = jax.random.split(key, 3)

    x = jax.random.normal(k_x, (B, S, DIM), jnp.float32)
    attention_mask = jax.random.bernoulli(k_m, 0.2, (B, S, S))   # True == masked
    params = init_params(k_p, DIM, DIM_FF, HEADS)

    ref = encoder_layer_ref(x, attention_mask, params, num_heads=HEADS)

    # f32 MXU operands: strict parity with the PyTorch module (softmax uses the
    # approx EUP reciprocal, ~2^-12 relative error -> tolerance below covers it).
    prep_f32 = prepare_encoder_weights(params, num_heads=HEADS, seq_len=S,
                                       compute_dtype=jnp.float32)
    out = jax.block_until_ready(encoder_layer_pallas(x, attention_mask, prep_f32))
    assert out.shape == (B, S, DIM)
    assert jnp.allclose(out, ref, atol=1e-2, rtol=1e-2), "f32 kernel mismatch vs reference"

    # bf16 MXU operands (default prep for real runs): f32 accumulation + f32 softmax.
    prep_bf16 = prepare_encoder_weights(params, num_heads=HEADS, seq_len=S)
    out_bf16 = jax.block_until_ready(encoder_layer_pallas(x, attention_mask, prep_bf16))
    assert jnp.allclose(out_bf16, ref, atol=5e-2, rtol=5e-2), "bf16 kernel mismatch vs reference"

    print("KERNEL_OK")
</pallas_src>

<mosaic_0001>
module attributes {stable_mosaic.version = 11 : i64} {
  func.func @_encoder_layer_kernel(%arg0: i32, %arg1: memref<8x32xf32, #tpu.memory_space<vmem>>, %arg2: memref<1x8x8xi8, #tpu.memory_space<vmem>>, %arg3: memref<32x96xf32, #tpu.memory_space<vmem>>, %arg4: memref<1x96xf32, #tpu.memory_space<vmem>>, %arg5: memref<32x32xf32, #tpu.memory_space<vmem>>, %arg6: memref<1x32xf32, #tpu.memory_space<vmem>>, %arg7: memref<32x64xf32, #tpu.memory_space<vmem>>, %arg8: memref<1x64xf32, #tpu.memory_space<vmem>>, %arg9: memref<64x32xf32, #tpu.memory_space<vmem>>, %arg10: memref<1x32xf32, #tpu.memory_space<vmem>>, %arg11: memref<8x32xf32, #tpu.memory_space<vmem>>) attributes {dimension_semantics = [#tpu.dimension_semantics<parallel>], iteration_bounds = array<i64: 2>, scalar_prefetch = 0 : i64, scratch_operands = 0 : i64, tpu.core_type = #tpu.core_type<tc>, window_params = [{transform_indices = @transform_0, window_bounds = array<i64: 8, 32>}, {transform_indices = @transform_1, window_bounds = array<i64: 1, 8, 8>}, {pipeline_mode = #tpu.pipeline_mode<synchronous>, transform_indices = @transform_2, window_bounds = array<i64: 32, 96>}, {pipeline_mode = #tpu.pipeline_mode<synchronous>, transform_indices = @transform_3, window_bounds = array<i64: 1, 96>}, {pipeline_mode = #tpu.pipeline_mode<synchronous>, transform_indices = @transform_4, window_bounds = array<i64: 32, 32>}, {pipeline_mode = #tpu.pipeline_mode<synchronous>, transform_indices = @transform_5, window_bounds = array<i64: 1, 32>}, {pipeline_mode = #tpu.pipeline_mode<synchronous>, transform_indices = @transform_6, window_bounds = array<i64: 32, 64>}, {pipeline_mode = #tpu.pipeline_mode<synchronous>, transform_indices = @transform_7, window_bounds = array<i64: 1, 64>}, {pipeline_mode = #tpu.pipeline_mode<synchronous>, transform_indices = @transform_8, window_bounds = array<i64: 64, 32>}, {pipeline_mode = #tpu.pipeline_mode<synchronous>, transform_indices = @transform_9, window_bounds = array<i64: 1, 32>}, {transform_indices = @transform_10, window_bounds = array<i64: 8, 32>}]} {
    %c0 = arith.constant 0 : index
    %c0_0 = arith.constant 0 : index
    %0 = vector.load %arg1[%c0, %c0_0] : memref<8x32xf32, #tpu.memory_space<vmem>>, vector<8x32xf32>
    %c0_1 = arith.constant 0 : index
    %c0_2 = arith.constant 0 : index
    %1 = vector.load %arg3[%c0_1, %c0_2] : memref<32x96xf32, #tpu.memory_space<vmem>>, vector<32x96xf32>
    %cst = arith.constant dense<0.000000e+00> : vector<8x96xf32>
    %2 = tpu.matmul %0, %1, %cst {dimension_numbers = #tpu.dot_dimension_numbers<[1], [0], [0], [1], [0, 0, 1, 1], [], []>} : vector<8x32xf32>, vector<32x96xf32>, vector<8x96xf32> -> vector<8x96xf32>
    %c0_3 = arith.constant 0 : index
    %c0_4 = arith.constant 0 : index
    %3 = vector.load %arg4[%c0_3, %c0_4] : memref<1x96xf32, #tpu.memory_space<vmem>>, vector<1x96xf32>
    %4 = vector.broadcast %3 : vector<1x96xf32> to vector<8x96xf32>
    %5 = arith.addf %2, %4 : vector<8x96xf32>
    %c0_5 = arith.constant 0 : index
    %c0_6 = arith.constant 0 : index
    %c0_7 = arith.constant 0 : index
    %6 = vector.load %arg2[%c0_5, %c0_6, %c0_7] : memref<1x8x8xi8, #tpu.memory_space<vmem>>, vector<1x8x8xi8>
    %7 = vector.shape_cast %6 : vector<1x8x8xi8> to vector<8x8xi8>
    %c0_i8 = arith.constant 0 : i8
    %8 = vector.broadcast %c0_i8 : i8 to vector<8x8xi8>
    %9 = arith.cmpi ne, %7, %8 : vector<8x8xi8>
    %10 = vector.extract_strided_slice %5 {offsets = [0, 0], sizes = [8, 8], strides = [1, 1]} : vector<8x96xf32> to vector<8x8xf32>
    %11 = vector.extract_strided_slice %5 {offsets = [0, 32], sizes = [8, 8], strides = [1, 1]} : vector<8x96xf32> to vector<8x8xf32>
    %12 = vector.extract_strided_slice %5 {offsets = [0, 64], sizes = [8, 8], strides = [1, 1]} : vector<8x96xf32> to vector<8x8xf32>
    %cst_8 = arith.constant dense<0.000000e+00> : vector<8x8xf32>
    %13 = tpu.matmul %10, %11, %cst_8 {dimension_numbers = #tpu.dot_dimension_numbers<[1], [1], [0], [0], [0, 0, 1, 0], [], []>} : vector<8x8xf32>, vector<8x8xf32>, vector<8x8xf32> -> vector<8x8xf32>
    %cst_9 = arith.constant -1.000000e+09 : f32
    %14 = vector.broadcast %cst_9 : f32 to vector<8x8xf32>
    %15 = arith.select %9, %14, %13 : vector<8x8xi1>, vector<8x8xf32>
    %cst_10 = arith.constant dense<0xFF800000> : vector<8xf32>
    %16 = vector.multi_reduction <maximumf>, %15, %cst_10 [1] : vector<8x8xf32> to vector<8xf32>
    %17 = vector.shape_cast %16 : vector<8xf32> to vector<8x1xf32>
    %18 = vector.broadcast %17 : vector<8x1xf32> to vector<8x8xf32>
    %19 = arith.subf %15, %18 : vector<8x8xf32>
    %20 = math.exp %19 : vector<8x8xf32>
    %cst_11 = arith.constant dense<0.000000e+00> : vector<8xf32>
    %21 = vector.multi_reduction <add>, %20, %cst_11 [1] : vector<8x8xf32> to vector<8xf32>
    %22 = vector.shape_cast %21 : vector<8xf32> to vector<8x1xf32>
    %23 = tpu.reciprocal %22 {approx = true} : vector<8x1xf32> -> vector<8x1xf32>
    %24 = vector.broadcast %23 : vector<8x1xf32> to vector<8x8xf32>
    %25 = arith.mulf %20, %24 : vector<8x8xf32>
    %cst_12 = arith.constant dense<0.000000e+00> : vector<8x8xf32>
    %26 = tpu.matmul %25, %12, %cst_12 {dimension_numbers = #tpu.dot_dimension_numbers<[1], [0], [0], [1], [0, 0, 1, 1], [], []>} : vector<8x8xf32>, vector<8x8xf32>, vector<8x8xf32> -> vector<8x8xf32>
    %27 = vector.extract_strided_slice %5 {offsets = [0, 8], sizes = [8, 8], strides = [1, 1]} : vector<8x96xf32> to vector<8x8xf32>
    %28 = vector.extract_strided_slice %5 {offsets = [0, 40], sizes = [8, 8], strides = [1, 1]} : vector<8x96xf32> to vector<8x8xf32>
    %29 = vector.extract_strided_slice %5 {offsets = [0, 72], sizes = [8, 8], strides = [1, 1]} : vector<8x96xf32> to vector<8x8xf32>
    %cst_13 = arith.constant dense<0.000000e+00> : vector<8x8xf32>
    %30 = tpu.matmul %27, %28, %cst_13 {dimension_numbers = #tpu.dot_dimension_numbers<[1], [1], [0], [0], [0, 0, 1, 0], [], []>} : vector<8x8xf32>, vector<8x8xf32>, vector<8x8xf32> -> vector<8x8xf32>
    %cst_14 = arith.constant -1.000000e+09 : f32
    %31 = vector.broadcast %cst_14 : f32 to vector<8x8xf32>
    %32 = arith.select %9, %31, %30 : vector<8x8xi1>, vector<8x8xf32>
    %cst_15 = arith.constant dense<0xFF800000> : vector<8xf32>
    %33 = vector.multi_reduction <maximumf>, %32, %cst_15 [1] : vector<8x8xf32> to vector<8xf32>
    %34 = vector.shape_cast %33 : vector<8xf32> to vector<8x1xf32>
    %35 = vector.broadcast %34 : vector<8x1xf32> to vector<8x8xf32>
    %36 = arith.subf %32, %35 : vector<8x8xf32>
    %37 = math.exp %36 : vector<8x8xf32>
    %cst_16 = arith.constant dense<0.000000e+00> : vector<8xf32>
    %38 = vector.multi_reduction <add>, %37, %cst_16 [1] : vector<8x8xf32> to vector<8xf32>
    %39 = vector.shape_cast %38 : vector<8xf32> to vector<8x1xf32>
    %40 = tpu.reciprocal %39 {approx = true} : vector<8x1xf32> -> vector<8x1xf32>
    %41 = vector.broadcast %40 : vector<8x1xf32> to vector<8x8xf32>
    %42 = arith.mulf %37, %41 : vector<8x8xf32>
    %cst_17 = arith.constant dense<0.000000e+00> : vector<8x8xf32>
    %43 = tpu.matmul %42, %29, %cst_17 {dimension_numbers = #tpu.dot_dimension_numbers<[1], [0], [0], [1], [0, 0, 1, 1], [], []>} : vector<8x8xf32>, vector<8x8xf32>, vector<8x8xf32> -> vector<8x8xf32>
    %44 = vector.extract_strided_slice %5 {offsets = [0, 16], sizes = [8, 8], strides = [1, 1]} : vector<8x96xf32> to vector<8x8xf32>
    %45 = vector.extract_strided_slice %5 {offsets = [0, 48], sizes = [8, 8], strides = [1, 1]} : vector<8x96xf32> to vector<8x8xf32>
    %46 = vector.extract_strided_slice %5 {offsets = [0, 80], sizes = [8, 8], strides = [1, 1]} : vector<8x96xf32> to vector<8x8xf32>
    %cst_18 = arith.constant dense<0.000000e+00> : vector<8x8xf32>
    %47 = tpu.matmul %44, %45, %cst_18 {dimension_numbers = #tpu.dot_dimension_numbers<[1], [1], [0], [0], [0, 0, 1, 0], [], []>} : vector<8x8xf32>, vector<8x8xf32>, vector<8x8xf32> -> vector<8x8xf32>
    %cst_19 = arith.constant -1.000000e+09 : f32
    %48 = vector.broadcast %cst_19 : f32 to vector<8x8xf32>
    %49 = arith.select %9, %48, %47 : vector<8x8xi1>, vector<8x8xf32>
    %cst_20 = arith.constant dense<0xFF800000> : vector<8xf32>
    %50 = vector.multi_reduction <maximumf>, %49, %cst_20 [1] : vector<8x8xf32> to vector<8xf32>
    %51 = vector.shape_cast %50 : vector<8xf32> to vector<8x1xf32>
    %52 = vector.broadcast %51 : vector<8x1xf32> to vector<8x8xf32>
    %53 = arith.subf %49, %52 : vector<8x8xf32>
    %54 = math.exp %53 : vector<8x8xf32>
    %cst_21 = arith.constant dense<0.000000e+00> : vector<8xf32>
    %55 = vector.multi_reduction <add>, %54, %cst_21 [1] : vector<8x8xf32> to vector<8xf32>
    %56 = vector.shape_cast %55 : vector<8xf32> to vector<8x1xf32>
    %57 = tpu.reciprocal %56 {approx = true} : vector<8x1xf32> -> vector<8x1xf32>
    %58 = vector.broadcast %57 : vector<8x1xf32> to vector<8x8xf32>
    %59 = arith.mulf %54, %58 : vector<8x8xf32>
    %cst_22 = arith.constant dense<0.000000e+00> : vector<8x8xf32>
    %60 = tpu.matmul %59, %46, %cst_22 {dimension_numbers = #tpu.dot_dimension_numbers<[1], [0], [0], [1], [0, 0, 1, 1], [], []>} : vector<8x8xf32>, vector<8x8xf32>, vector<8x8xf32> -> vector<8x8xf32>
    %61 = vector.extract_strided_slice %5 {offsets = [0, 24], sizes = [8, 8], strides = [1, 1]} : vector<8x96xf32> to vector<8x8xf32>
    %62 = vector.extract_strided_slice %5 {offsets = [0, 56], sizes = [8, 8], strides = [1, 1]} : vector<8x96xf32> to vector<8x8xf32>
    %63 = vector.extract_strided_slice %5 {offsets = [0, 88], sizes = [8, 8], strides = [1, 1]} : vector<8x96xf32> to vector<8x8xf32>
    %cst_23 = arith.constant dense<0.000000e+00> : vector<8x8xf32>
    %64 = tpu.matmul %61, %62, %cst_23 {dimension_numbers = #tpu.dot_dimension_numbers<[1], [1], [0], [0], [0, 0, 1, 0], [], []>} : vector<8x8xf32>, vector<8x8xf32>, vector<8x8xf32> -> vector<8x8xf32>
    %cst_24 = arith.constant -1.000000e+09 : f32
    %65 = vector.broadcast %cst_24 : f32 to vector<8x8xf32>
    %66 = arith.select %9, %65, %64 : vector<8x8xi1>, vector<8x8xf32>
    %cst_25 = arith.constant dense<0xFF800000> : vector<8xf32>
    %67 = vector.multi_reduction <maximumf>, %66, %cst_25 [1] : vector<8x8xf32> to vector<8xf32>
    %68 = vector.shape_cast %67 : vector<8xf32> to vector<8x1xf32>
    %69 = vector.broadcast %68 : vector<8x1xf32> to vector<8x8xf32>
    %70 = arith.subf %66, %69 : vector<8x8xf32>
    %71 = math.exp %70 : vector<8x8xf32>
    %cst_26 = arith.constant dense<0.000000e+00> : vector<8xf32>
    %72 = vector.multi_reduction <add>, %71, %cst_26 [1] : vector<8x8xf32> to vector<8xf32>
    %73 = vector.shape_cast %72 : vector<8xf32> to vector<8x1xf32>
    %74 = tpu.reciprocal %73 {approx = true} : vector<8x1xf32> -> vector<8x1xf32>
    %75 = vector.broadcast %74 : vector<8x1xf32> to vector<8x8xf32>
    %76 = arith.mulf %71, %75 : vector<8x8xf32>
    %cst_27 = arith.constant dense<0.000000e+00> : vector<8x8xf32>
    %77 = tpu.matmul %76, %63, %cst_27 {dimension_numbers = #tpu.dot_dimension_numbers<[1], [0], [0], [1], [0, 0, 1, 1], [], []>} : vector<8x8xf32>, vector<8x8xf32>, vector<8x8xf32> -> vector<8x8xf32>
    %78 = tpu.concatenate %26, %43, %60, %77 in 1 : vector<8x8xf32>, vector<8x8xf32>, vector<8x8xf32>, vector<8x8xf32> -> vector<8x32xf32>
    %c0_28 = arith.constant 0 : index
    %c0_29 = arith.constant 0 : index
    %79 = vector.load %arg5[%c0_28, %c0_29] : memref<32x32xf32, #tpu.memory_space<vmem>>, vector<32x32xf32>
    %cst_30 = arith.constant dense<0.000000e+00> : vector<8x32xf32>
    %80 = tpu.matmul %78, %79, %cst_30 {dimension_numbers = #tpu.dot_dimension_numbers<[1], [0], [0], [1], [0, 0, 1, 1], [], []>} : vector<8x32xf32>, vector<32x32xf32>, vector<8x32xf32> -> vector<8x32xf32>
    %c0_31 = arith.constant 0 : index
    %c0_32 = arith.constant 0 : index
    %81 = vector.load %arg6[%c0_31, %c0_32] : memref<1x32xf32, #tpu.memory_space<vmem>>, vector<1x32xf32>
    %82 = vector.broadcast %81 : vector<1x32xf32> to vector<8x32xf32>
    %83 = arith.addf %80, %82 : vector<8x32xf32>
    %c0_33 = arith.constant 0 : index
    %c0_34 = arith.constant 0 : index
    %84 = vector.load %arg7[%c0_33, %c0_34] : memref<32x64xf32, #tpu.memory_space<vmem>>, vector<32x64xf32>
    %cst_35 = arith.constant dense<0.000000e+00> : vector<8x64xf32>
    %85 = tpu.matmul %83, %84, %cst_35 {dimension_numbers = #tpu.dot_dimension_numbers<[1], [0], [0], [1], [0, 0, 1, 1], [], []>} : vector<8x32xf32>, vector<32x64xf32>, vector<8x64xf32> -> vector<8x64xf32>
    %c0_36 = arith.constant 0 : index
    %c0_37 = arith.constant 0 : index
    %86 = vector.load %arg8[%c0_36, %c0_37] : memref<1x64xf32, #tpu.memory_space<vmem>>, vector<1x64xf32>
    %87 = vector.broadcast %86 : vector<1x64xf32> to vector<8x64xf32>
    %88 = arith.addf %85, %87 : vector<8x64xf32>
    %cst_38 = arith.constant 0.000000e+00 : f32
    %89 = vector.broadcast %cst_38 : f32 to vector<8x64xf32>
    %90 = arith.maximumf %88, %89 : vector<8x64xf32>
    %c0_39 = arith.constant 0 : index
    %c0_40 = arith.constant 0 : index
    %91 = vector.load %arg9[%c0_39, %c0_40] : memref<64x32xf32, #tpu.memory_space<vmem>>, vector<64x32xf32>
    %cst_41 = arith.constant dense<0.000000e+00> : vector<8x32xf32>
    %92 = tpu.matmul %90, %91, %cst_41 {dimension_numbers = #tpu.dot_dimension_numbers<[1], [0], [0], [1], [0, 0, 1, 1], [], []>} : vector<8x64xf32>, vector<64x32xf32>, vector<8x32xf32> -> vector<8x32xf32>
    %c0_42 = arith.constant 0 : index
    %c0_43 = arith.constant 0 : index
    %93 = vector.load %arg10[%c0_42, %c0_43] : memref<1x32xf32, #tpu.memory_space<vmem>>, vector<1x32xf32>
    %94 = vector.broadcast %93 : vector<1x32xf32> to vector<8x32xf32>
    %95 = arith.addf %92, %94 : vector<8x32xf32>
    %c0_44 = arith.constant 0 : index
    %c0_45 = arith.constant 0 : index
    %96 = vector.load %arg11[%c0_44, %c0_45] : memref<8x32xf32, #tpu.memory_space<vmem>>, vector<8x32xf32>
    tpu.vector_store %arg11[%c0_44, %c0_45], %95 {strides = array<i32>} : memref<8x32xf32, #tpu.memory_space<vmem>>, vector<8x32xf32>,
    return
  }
  func.func @transform_0(%arg0: i32) -> (i32, i32) {
    %c0_i32 = arith.constant 0 : i32
    %c0_i32_0 = arith.constant 0 : i32
    return %arg0, %c0_i32 : i32, i32
  }
  func.func @transform_1(%arg0: i32) -> (i32, i32, i32) {
    %c0_i32 = arith.constant 0 : i32
    %c0_i32_0 = arith.constant 0 : i32
    %c0_i32_1 = arith.constant 0 : i32
    return %arg0, %c0_i32, %c0_i32_0 : i32, i32, i32
  }
  func.func @transform_2(%arg0: i32) -> (i32, i32) {
    %c0_i32 = arith.constant 0 : i32
    %c0_i32_0 = arith.constant 0 : i32
    %c0_i32_1 = arith.constant 0 : i32
    return %c0_i32, %c0_i32_0 : i32, i32
  }
  func.func @transform_3(%arg0: i32) -> (i32, i32) {
    %c0_i32 = arith.constant 0 : i32
    %c0_i32_0 = arith.constant 0 : i32
    %c0_i32_1 = arith.constant 0 : i32
    return %c0_i32, %c0_i32_0 : i32, i32
  }
  func.func @transform_4(%arg0: i32) -> (i32, i32) {
    %c0_i32 = arith.constant 0 : i32
    %c0_i32_0 = arith.constant 0 : i32
    %c0_i32_1 = arith.constant 0 : i32
    return %c0_i32, %c0_i32_0 : i32, i32
  }
  func.func @transform_5(%arg0: i32) -> (i32, i32) {
    %c0_i32 = arith.constant 0 : i32
    %c0_i32_0 = arith.constant 0 : i32
    %c0_i32_1 = arith.constant 0 : i32
    return %c0_i32, %c0_i32_0 : i32, i32
  }
  func.func @transform_6(%arg0: i32) -> (i32, i32) {
    %c0_i32 = arith.constant 0 : i32
    %c0_i32_0 = arith.constant 0 : i32
    %c0_i32_1 = arith.constant 0 : i32
    return %c0_i32, %c0_i32_0 : i32, i32
  }
  func.func @transform_7(%arg0: i32) -> (i32, i32) {
    %c0_i32 = arith.constant 0 : i32
    %c0_i32_0 = arith.constant 0 : i32
    %c0_i32_1 = arith.constant 0 : i32
    return %c0_i32, %c0_i32_0 : i32, i32
  }
  func.func @transform_8(%arg0: i32) -> (i32, i32) {
    %c0_i32 = arith.constant 0 : i32
    %c0_i32_0 = arith.constant 0 : i32
    %c0_i32_1 = arith.constant 0 : i32
    return %c0_i32, %c0_i32_0 : i32, i32
  }
  func.func @transform_9(%arg0: i32) -> (i32, i32) {
    %c0_i32 = arith.constant 0 : i32
    %c0_i32_0 = arith.constant 0 : i32
    %c0_i32_1 = arith.constant 0 : i32
    return %c0_i32, %c0_i32_0 : i32, i32
  }
  func.func @transform_10(%arg0: i32) -> (i32, i32) {
    %c0_i32 = arith.constant 0 : i32
    %c0_i32_0 = arith.constant 0 : i32
    return %arg0, %c0_i32 : i32, i32
  }
}

module attributes {stable_mosaic.version = 11 : i64} {
  func.func @_encoder_layer_kernel(%arg0: i32, %arg1: memref<8x32xf32, #tpu.memory_space<vmem>>, %arg2: memref<1x8x8xi8, #tpu.memory_space<vmem>>, %arg3: memref<32x96xf32, #tpu.memory_space<vmem>>, %arg4: memref<1x96xf32, #tpu.memory_space<vmem>>, %arg5: memref<32x32xf32, #tpu.memory_space<vmem>>, %arg6: memref<1x32xf32, #tpu.memory_space<vmem>>, %arg7: memref<32x64xf32, #tpu.memory_space<vmem>>, %arg8: memref<1x64xf32, #tpu.memory_space<vmem>>, %arg9: memref<64x32xf32, #tpu.memory_space<vmem>>, %arg10: memref<1x32xf32, #tpu.memory_space<vmem>>, %arg11: memref<8x32xf32, #tpu.memory_space<vmem>>) attributes {dimension_semantics = [#tpu.dimension_semantics<parallel>], iteration_bounds = array<i64: 2>, scalar_prefetch = 0 : i64, scratch_operands = 0 : i64, tpu.core_type = #tpu.core_type<tc>, window_params = [{transform_indices = @transform_0, window_bounds = array<i64: 8, 32>}, {transform_indices = @transform_1, window_bounds = array<i64: 1, 8, 8>}, {pipeline_mode = #tpu.pipeline_mode<synchronous>, transform_indices = @transform_2, window_bounds = array<i64: 32, 96>}, {pipeline_mode = #tpu.pipeline_mode<synchronous>, transform_indices = @transform_3, window_bounds = array<i64: 1, 96>}, {pipeline_mode = #tpu.pipeline_mode<synchronous>, transform_indices = @transform_4, window_bounds = array<i64: 32, 32>}, {pipeline_mode = #tpu.pipeline_mode<synchronous>, transform_indices = @transform_5, window_bounds = array<i64: 1, 32>}, {pipeline_mode = #tpu.pipeline_mode<synchronous>, transform_indices = @transform_6, window_bounds = array<i64: 32, 64>}, {pipeline_mode = #tpu.pipeline_mode<synchronous>, transform_indices = @transform_7, window_bounds = array<i64: 1, 64>}, {pipeline_mode = #tpu.pipeline_mode<synchronous>, transform_indices = @transform_8, window_bounds = array<i64: 64, 32>}, {pipeline_mode = #tpu.pipeline_mode<synchronous>, transform_indices = @transform_9, window_bounds = array<i64: 1, 32>}, {transform_indices = @transform_10, window_bounds = array<i64: 8, 32>}]} {
    %c0 = arith.constant 0 : index
    %c0_0 = arith.constant 0 : index
    %0 = vector.load %arg1[%c0, %c0_0] : memref<8x32xf32, #tpu.memory_space<vmem>>, vector<8x32xf32>
    %c0_1 = arith.constant 0 : index
    %c0_2 = arith.constant 0 : index
    %1 = vector.load %arg3[%c0_1, %c0_2] : memref<32x96xf32, #tpu.memory_space<vmem>>, vector<32x96xf32>
    %cst = arith.constant dense<0.000000e+00> : vector<8x96xf32>
    %2 = tpu.matmul %0, %1, %cst {dimension_numbers = #tpu.dot_dimension_numbers<[1], [0], [0], [1], [0, 0, 1, 1], [], []>} : vector<8x32xf32>, vector<32x96xf32>, vector<8x96xf32> -> vector<8x96xf32>
    %c0_3 = arith.constant 0 : index
    %c0_4 = arith.constant 0 : index
    %3 = vector.load %arg4[%c0_3, %c0_4] : memref<1x96xf32, #tpu.memory_space<vmem>>, vector<1x96xf32>
    %4 = vector.broadcast %3 : vector<1x96xf32> to vector<8x96xf32>
    %5 = arith.addf %2, %4 : vector<8x96xf32>
    %c0_5 = arith.constant 0 : index
    %c0_6 = arith.constant 0 : index
    %c0_7 = arith.constant 0 : index
    %6 = vector.load %arg2[%c0_5, %c0_6, %c0_7] : memref<1x8x8xi8, #tpu.memory_space<vmem>>, vector<1x8x8xi8>
    %7 = vector.shape_cast %6 : vector<1x8x8xi8> to vector<8x8xi8>
    %c0_i8 = arith.constant 0 : i8
    %8 = vector.broadcast %c0_i8 : i8 to vector<8x8xi8>
    %9 = arith.cmpi ne, %7, %8 : vector<8x8xi8>
    %10 = vector.extract_strided_slice %5 {offsets = [0, 0], sizes = [8, 8], strides = [1, 1]} : vector<8x96xf32> to vector<8x8xf32>
    %11 = vector.extract_strided_slice %5 {offsets = [0, 32], sizes = [8, 8], strides = [1, 1]} : vector<8x96xf32> to vector<8x8xf32>
    %12 = vector.extract_strided_slice %5 {offsets = [0, 64], sizes = [8, 8], strides = [1, 1]} : vector<8x96xf32> to vector<8x8xf32>
    %cst_8 = arith.constant dense<0.000000e+00> : vector<8x8xf32>
    %13 = tpu.matmul %10, %11, %cst_8 {dimension_numbers = #tpu.dot_dimension_numbers<[1], [1], [0], [0], [0, 0, 1, 0], [], []>} : vector<8x8xf32>, vector<8x8xf32>, vector<8x8xf32> -> vector<8x8xf32>
    %cst_9 = arith.constant -1.000000e+09 : f32
    %14 = vector.broadcast %cst_9 : f32 to vector<8x8xf32>
    %15 = arith.select %9, %14, %13 : vector<8x8xi1>, vector<8x8xf32>
    %cst_10 = arith.constant dense<0xFF800000> : vector<8xf32>
    %16 = vector.multi_reduction <maximumf>, %15, %cst_10 [1] : vector<8x8xf32> to vector<8xf32>
    %17 = vector.shape_cast %16 : vector<8xf32> to vector<8x1xf32>
    %18 = vector.broadcast %17 : vector<8x1xf32> to vector<8x8xf32>
    %19 = arith.subf %15, %18 : vector<8x8xf32>
    %20 = math.exp %19 : vector<8x8xf32>
    %cst_11 = arith.constant dense<0.000000e+00> : vector<8xf32>
    %21 = vector.multi_reduction <add>, %20, %cst_11 [1] : vector<8x8xf32> to vector<8xf32>
    %22 = vector.shape_cast %21 : vector<8xf32> to vector<8x1xf32>
    %23 = tpu.reciprocal %22 {approx = true} : vector<8x1xf32> -> vector<8x1xf32>
    %24 = vector.broadcast %23 : vector<8x1xf32> to vector<8x8xf32>
    %25 = arith.mulf %20, %24 : vector<8x8xf32>
    %cst_12 = arith.constant dense<0.000000e+00> : vector<8x8xf32>
    %26 = tpu.matmul %25, %12, %cst_12 {dimension_numbers = #tpu.dot_dimension_numbers<[1], [0], [0], [1], [0, 0, 1, 1], [], []>} : vector<8x8xf32>, vector<8x8xf32>, vector<8x8xf32> -> vector<8x8xf32>
    %27 = vector.extract_strided_slice %5 {offsets = [0, 8], sizes = [8, 8], strides = [1, 1]} : vector<8x96xf32> to vector<8x8xf32>
    %28 = vector.extract_strided_slice %5 {offsets = [0, 40], sizes = [8, 8], strides = [1, 1]} : vector<8x96xf32> to vector<8x8xf32>
    %29 = vector.extract_strided_slice %5 {offsets = [0, 72], sizes = [8, 8], strides = [1, 1]} : vector<8x96xf32> to vector<8x8xf32>
    %cst_13 = arith.constant dense<0.000000e+00> : vector<8x8xf32>
    %30 = tpu.matmul %27, %28, %cst_13 {dimension_numbers = #tpu.dot_dimension_numbers<[1], [1], [0], [0], [0, 0, 1, 0], [], []>} : vector<8x8xf32>, vector<8x8xf32>, vector<8x8xf32> -> vector<8x8xf32>
    %cst_14 = arith.constant -1.000000e+09 : f32
    %31 = vector.broadcast %cst_14 : f32 to vector<8x8xf32>
    %32 = arith.select %9, %31, %30 : vector<8x8xi1>, vector<8x8xf32>
    %cst_15 = arith.constant dense<0xFF800000> : vector<8xf32>
    %33 = vector.multi_reduction <maximumf>, %32, %cst_15 [1] : vector<8x8xf32> to vector<8xf32>
    %34 = vector.shape_cast %33 : vector<8xf32> to vector<8x1xf32>
    %35 = vector.broadcast %34 : vector<8x1xf32> to vector<8x8xf32>
    %36 = arith.subf %32, %35 : vector<8x8xf32>
    %37 = math.exp %36 : vector<8x8xf32>
    %cst_16 = arith.constant dense<0.000000e+00> : vector<8xf32>
    %38 = vector.multi_reduction <add>, %37, %cst_16 [1] : vector<8x8xf32> to vector<8xf32>
    %39 = vector.shape_cast %38 : vector<8xf32> to vector<8x1xf32>
    %40 = tpu.reciprocal %39 {approx = true} : vector<8x1xf32> -> vector<8x1xf32>
    %41 = vector.broadcast %40 : vector<8x1xf32> to vector<8x8xf32>
    %42 = arith.mulf %37, %41 : vector<8x8xf32>
    %cst_17 = arith.constant dense<0.000000e+00> : vector<8x8xf32>
    %43 = tpu.matmul %42, %29, %cst_17 {dimension_numbers = #tpu.dot_dimension_numbers<[1], [0], [0], [1], [0, 0, 1, 1], [], []>} : vector<8x8xf32>, vector<8x8xf32>, vector<8x8xf32> -> vector<8x8xf32>
    %44 = vector.extract_strided_slice %5 {offsets = [0, 16], sizes = [8, 8], strides = [1, 1]} : vector<8x96xf32> to vector<8x8xf32>
    %45 = vector.extract_strided_slice %5 {offsets = [0, 48], sizes = [8, 8], strides = [1, 1]} : vector<8x96xf32> to vector<8x8xf32>
    %46 = vector.extract_strided_slice %5 {offsets = [0, 80], sizes = [8, 8], strides = [1, 1]} : vector<8x96xf32> to vector<8x8xf32>
    %cst_18 = arith.constant dense<0.000000e+00> : vector<8x8xf32>
    %47 = tpu.matmul %44, %45, %cst_18 {dimension_numbers = #tpu.dot_dimension_numbers<[1], [1], [0], [0], [0, 0, 1, 0], [], []>} : vector<8x8xf32>, vector<8x8xf32>, vector<8x8xf32> -> vector<8x8xf32>
    %cst_19 = arith.constant -1.000000e+09 : f32
    %48 = vector.broadcast %cst_19 : f32 to vector<8x8xf32>
    %49 = arith.select %9, %48, %47 : vector<8x8xi1>, vector<8x8xf32>
    %cst_20 = arith.constant dense<0xFF800000> : vector<8xf32>
    %50 = vector.multi_reduction <maximumf>, %49, %cst_20 [1] : vector<8x8xf32> to vector<8xf32>
    %51 = vector.shape_cast %50 : vector<8xf32> to vector<8x1xf32>
    %52 = vector.broadcast %51 : vector<8x1xf32> to vector<8x8xf32>
    %53 = arith.subf %49, %52 : vector<8x8xf32>
    %54 = math.exp %53 : vector<8x8xf32>
    %cst_21 = arith.constant dense<0.000000e+00> : vector<8xf32>
    %55 = vector.multi_reduction <add>, %54, %cst_21 [1] : vector<8x8xf32> to vector<8xf32>
    %56 = vector.shape_cast %55 : vector<8xf32> to vector<8x1xf32>
    %57 = tpu.reciprocal %56 {approx = true} : vector<8x1xf32> -> vector<8x1xf32>
    %58 = vector.broadcast %57 : vector<8x1xf32> to vector<8x8xf32>
    %59 = arith.mulf %54, %58 : vector<8x8xf32>
    %cst_22 = arith.constant dense<0.000000e+00> : vector<8x8xf32>
    %60 = tpu.matmul %59, %46, %cst_22 {dimension_numbers = #tpu.dot_dimension_numbers<[1], [0], [0], [1], [0, 0, 1, 1], [], []>} : vector<8x8xf32>, vector<8x8xf32>, vector<8x8xf32> -> vector<8x8xf32>
    %61 = vector.extract_strided_slice %5 {offsets = [0, 24], sizes = [8, 8], strides = [1, 1]} : vector<8x96xf32> to vector<8x8xf32>
    %62 = vector.extract_strided_slice %5 {offsets = [0, 56], sizes = [8, 8], strides = [1, 1]} : vector<8x96xf32> to vector<8x8xf32>
    %63 = vector.extract_strided_slice %5 {offsets = [0, 88], sizes = [8, 8], strides = [1, 1]} : vector<8x96xf32> to vector<8x8xf32>
    %cst_23 = arith.constant dense<0.000000e+00> : vector<8x8xf32>
    %64 = tpu.matmul %61, %62, %cst_23 {dimension_numbers = #tpu.dot_dimension_numbers<[1], [1], [0], [0], [0, 0, 1, 0], [], []>} : vector<8x8xf32>, vector<8x8xf32>, vector<8x8xf32> -> vector<8x8xf32>
    %cst_24 = arith.constant -1.000000e+09 : f32
    %65 = vector.broadcast %cst_24 : f32 to vector<8x8xf32>
    %66 = arith.select %9, %65, %64 : vector<8x8xi1>, vector<8x8xf32>
    %cst_25 = arith.constant dense<0xFF800000> : vector<8xf32>
    %67 = vector.multi_reduction <maximumf>, %66, %cst_25 [1] : vector<8x8xf32> to vector<8xf32>
    %68 = vector.shape_cast %67 : vector<8xf32> to vector<8x1xf32>
    %69 = vector.broadcast %68 : vector<8x1xf32> to vector<8x8xf32>
    %70 = arith.subf %66, %69 : vector<8x8xf32>
    %71 = math.exp %70 : vector<8x8xf32>
    %cst_26 = arith.constant dense<0.000000e+00> : vector<8xf32>
    %72 = vector.multi_reduction <add>, %71, %cst_26 [1] : vector<8x8xf32> to vector<8xf32>
    %73 = vector.shape_cast %72 : vector<8xf32> to vector<8x1xf32>
    %74 = tpu.reciprocal %73 {approx = true} : vector<8x1xf32> -> vector<8x1xf32>
    %75 = vector.broadcast %74 : vector<8x1xf32> to vector<8x8xf32>
    %76 = arith.mulf %71, %75 : vector<8x8xf32>
    %cst_27 = arith.constant dense<0.000000e+00> : vector<8x8xf32>
    %77 = tpu.matmul %76, %63, %cst_27 {dimension_numbers = #tpu.dot_dimension_numbers<[1], [0], [0], [1], [0, 0, 1, 1], [], []>} : vector<8x8xf32>, vector<8x8xf32>, vector<8x8xf32> -> vector<8x8xf32>
    %78 = tpu.concatenate %26, %43, %60, %77 in 1 : vector<8x8xf32>, vector<8x8xf32>, vector<8x8xf32>, vector<8x8xf32> -> vector<8x32xf32>
    %c0_28 = arith.constant 0 : index
    %c0_29 = arith.constant 0 : index
    %79 = vector.load %arg5[%c0_28, %c0_29] : memref<32x32xf32, #tpu.memory_space<vmem>>, vector<32x32xf32>
    %cst_30 = arith.constant dense<0.000000e+00> : vector<8x32xf32>
    %80 = tpu.matmul %78, %79, %cst_30 {dimension_numbers = #tpu.dot_dimension_numbers<[1], [0], [0], [1], [0, 0, 1, 1], [], []>} : vector<8x32xf32>, vector<32x32xf32>, vector<8x32xf32> -> vector<8x32xf32>
    %c0_31 = arith.constant 0 : index
    %c0_32 = arith.constant 0 : index
    %81 = vector.load %arg6[%c0_31, %c0_32] : memref<1x32xf32, #tpu.memory_space<vmem>>, vector<1x32xf32>
    %82 = vector.broadcast %81 : vector<1x32xf32> to vector<8x32xf32>
    %83 = arith.addf %80, %82 : vector<8x32xf32>
    %c0_33 = arith.constant 0 : index
    %c0_34 = arith.constant 0 : index
    %84 = vector.load %arg7[%c0_33, %c0_34] : memref<32x64xf32, #tpu.memory_space<vmem>>, vector<32x64xf32>
    %cst_35 = arith.constant dense<0.000000e+00> : vector<8x64xf32>
    %85 = tpu.matmul %83, %84, %cst_35 {dimension_numbers = #tpu.dot_dimension_numbers<[1], [0], [0], [1], [0, 0, 1, 1], [], []>} : vector<8x32xf32>, vector<32x64xf32>, vector<8x64xf32> -> vector<8x64xf32>
    %c0_36 = arith.constant 0 : index
    %c0_37 = arith.constant 0 : index
    %86 = vector.load %arg8[%c0_36, %c0_37] : memref<1x64xf32, #tpu.memory_space<vmem>>, vector<1x64xf32>
    %87 = vector.broadcast %86 : vector<1x64xf32> to vector<8x64xf32>
    %88 = arith.addf %85, %87 : vector<8x64xf32>
    %cst_38 = arith.constant 0.000000e+00 : f32
    %89 = vector.broadcast %cst_38 : f32 to vector<8x64xf32>
    %90 = arith.maximumf %88, %89 : vector<8x64xf32>
    %c0_39 = arith.constant 0 : index
    %c0_40 = arith.constant 0 : index
    %91 = vector.load %arg9[%c0_39, %c0_40] : memref<64x32xf32, #tpu.memory_space<vmem>>, vector<64x32xf32>
    %cst_41 = arith.constant dense<0.000000e+00> : vector<8x32xf32>
    %92 = tpu.matmul %90, %91, %cst_41 {dimension_numbers = #tpu.dot_dimension_numbers<[1], [0], [0], [1], [0, 0, 1, 1], [], []>} : vector<8x64xf32>, vector<64x32xf32>, vector<8x32xf32> -> vector<8x32xf32>
    %c0_42 = arith.constant 0 : index
    %c0_43 = arith.constant 0 : index
    %93 = vector.load %arg10[%c0_42, %c0_43] : memref<1x32xf32, #tpu.memory_space<vmem>>, vector<1x32xf32>
    %94 = vector.broadcast %93 : vector<1x32xf32> to vector<8x32xf32>
    %95 = arith.addf %92, %94 : vector<8x32xf32>
    %c0_44 = arith.constant 0 : index
    %c0_45 = arith.constant 0 : index
    %96 = vector.load %arg11[%c0_44, %c0_45] : memref<8x32xf32, #tpu.memory_space<vmem>>, vector<8x32xf32>
    tpu.vector_store %arg11[%c0_44, %c0_45], %95 {strides = array<i32>} : memref<8x32xf32, #tpu.memory_space<vmem>>, vector<8x32xf32>,
    return
  }
  func.func @transform_0(%arg0: i32) -> (i32, i32) {
    %c0_i32 = arith.constant 0 : i32
    %c0_i32_0 = arith.constant 0 : i32
    return %arg0, %c0_i32 : i32, i32
  }
  func.func @transform_1(%arg0: i32) -> (i32, i32, i32) {
    %c0_i32 = arith.constant 0 : i32
    %c0_i32_0 = arith.constant 0 : i32
    %c0_i32_1 = arith.constant 0 : i32
    return %arg0, %c0_i32, %c0_i32_0 : i32, i32, i32
  }
  func.func @transform_2(%arg0: i32) -> (i32, i32) {
    %c0_i32 = arith.constant 0 : i32
    %c0_i32_0 = arith.constant 0 : i32
    %c0_i32_1 = arith.constant 0 : i32
    return %c0_i32, %c0_i32_0 : i32, i32
  }
  func.func @transform_3(%arg0: i32) -> (i32, i32) {
    %c0_i32 = arith.constant 0 : i32
    %c0_i32_0 = arith.constant 0 : i32
    %c0_i32_1 = arith.constant 0 : i32
    return %c0_i32, %c0_i32_0 : i32, i32
  }
  func.func @transform_4(%arg0: i32) -> (i32, i32) {
    %c0_i32 = arith.constant 0 : i32
    %c0_i32_0 = arith.constant 0 : i32
    %c0_i32_1 = arith.constant 0 : i32
    return %c0_i32, %c0_i32_0 : i32, i32
  }
  func.func @transform_5(%arg0: i32) -> (i32, i32) {
    %c0_i32 = arith.constant 0 : i32
    %c0_i32_0 = arith.constant 0 : i32
    %c0_i32_1 = arith.constant 0 : i32
    return %c0_i32, %c0_i32_0 : i32, i32
  }
  func.func @transform_6(%arg0: i32) -> (i32, i32) {
    %c0_i32 = arith.constant 0 : i32
    %c0_i32_0 = arith.constant 0 : i32
    %c0_i32_1 = arith.constant 0 : i32
    return %c0_i32, %c0_i32_0 : i32, i32
  }
  func.func @transform_7(%arg0: i32) -> (i32, i32) {
    %c0_i32 = arith.constant 0 : i32
    %c0_i32_0 = arith.constant 0 : i32
    %c0_i32_1 = arith.constant 0 : i32
    return %c0_i32, %c0_i32_0 : i32, i32
  }
  func.func @transform_8(%arg0: i32) -> (i32, i32) {
    %c0_i32 = arith.constant 0 : i32
    %c0_i32_0 = arith.constant 0 : i32
    %c0_i32_1 = arith.constant 0 : i32
    return %c0_i32, %c0_i32_0 : i32, i32
  }
  func.func @transform_9(%arg0: i32) -> (i32, i32) {
    %c0_i32 = arith.constant 0 : i32
    %c0_i32_0 = arith.constant 0 : i32
    %c0_i32_1 = arith.constant 0 : i32
    return %c0_i32, %c0_i32_0 : i32, i32
  }
  func.func @transform_10(%arg0: i32) -> (i32, i32) {
    %c0_i32 = arith.constant 0 : i32
    %c0_i32_0 = arith.constant 0 : i32
    return %arg0, %c0_i32 : i32, i32
  }
}

</mosaic_0001>

<llo_original>
// kernel: tpu_custom_call.1
$region0: #{tpu_custom_call.1}
  #allocation0 [shape = 'u32[]', space=smem, size = 0x4, offset = 0x4, fixed_abs, tag = 'smem constant byte address 0x4 - core index']
  #allocation1 [shape = 'u32[144,128]{1,0:T(1,128)}', space=vmem, size = 0x12000, scoped, tag = 'internal scratch']
  %s0 = inlined_call_operand.hbm [shape: f32[16,32], index: 0, kind: input, shape index: {}]
  %s1 = inlined_call_operand.hbm [shape: s8[2,8,8], index: 1, kind: input, shape index: {}]
  %s2 = inlined_call_operand.vmem [shape: f32[32,96], index: 2, kind: input, shape index: {}]
  %s3 = inlined_call_operand.vmem [shape: f32[1,96], index: 3, kind: input, shape index: {}]
  %s4 = inlined_call_operand.vmem [shape: f32[32,32], index: 4, kind: input, shape index: {}]
  %s5 = inlined_call_operand.vmem [shape: f32[1,32], index: 5, kind: input, shape index: {}]
  %s6 = inlined_call_operand.vmem [shape: f32[32,64], index: 6, kind: input, shape index: {}]
  %s7 = inlined_call_operand.vmem [shape: f32[1,64], index: 7, kind: input, shape index: {}]
  %s8 = inlined_call_operand.vmem [shape: f32[64,32], index: 8, kind: input, shape index: {}]
  %s9 = inlined_call_operand.vmem [shape: f32[1,32], index: 9, kind: input, shape index: {}]
  %s10 = inlined_call_operand.hbm [shape: f32[16,32], index: 10, kind: output, shape index: {}]
  %s11 = sld [smem:[#allocation0]]
  $region81: #{tpu_custom_call.1} parent=0
    _
  %s13 = ssub.s32 1, %s11
  %s14 = scalar_select 0, %s13, %s11
  $region1: #{tpu_custom_call.1} parent=0
    #allocation2 [shape = 'u8[8192]{0}', space=vmem, size = 0x2000, scoped, tag = 'input window, operand 0']
    #allocation3 [shape = 's32[2]{0}', space=sflag, size = 0x8, scoped, tag = 'scoped memory for tpu_custom_call.1']
    #allocation4 [shape = 's32[2]{0}', space=sflag, size = 0x8, scoped, tag = 'scoped memory for tpu_custom_call.1']
    #allocation5 [shape = 'u8[2048]{0}', space=vmem, size = 0x800, scoped, tag = 'input window, operand 1']
    #allocation6 [shape = 's32[2]{0}', space=sflag, size = 0x8, scoped, tag = 'scoped memory for tpu_custom_call.1']
    #allocation7 [shape = 'u8[8192]{0}', space=vmem, size = 0x2000, scoped, tag = 'output window, operand 0']
    %15 = vsyncpa [#allocation3], 0
    %s16 = scalar_lea.sflag [#allocation3], 1
    %17 = vsyncpa %s16, 0
    %18 = vsyncpa [#allocation6], 0
    %s19 = scalar_lea.sflag [#allocation6], 1
    %20 = vsyncpa %s19, 0
    %21 = vsyncpa [#allocation4], 0
    %s22 = scalar_lea.sflag [#allocation4], 1
    %23 = vsyncpa %s22, 0
    loop: start=0, step=1, limit=4
    $region2: #{tpu_custom_call.1} parent=1 // loop_pre_header
      _
    $region3: #{tpu_custom_call.1} parent=1 // loop_header
      %s25 = sphi 0, %s29
      %p26 = scmp.ge.s32.totalorder %s25, 4
      %s35 = sphi 0, %s37
      %s38 = sphi 0, %s35
      %s39 = sphi 0, %s38
      %s55 = sphi 0, %s39
      %s61 = sphi 0, %s63
      %s64 = sphi 0, %s61
      %s65 = sphi 0, %s64
      %s81 = sphi 0, %s65
      %s85 = sphi 0, %s85
      %s87 = sphi 0, %s85
      %s88 = sphi 0, %s87
      %s102 = sphi 0, %s88
      %s106 = sphi 0, %s106
      %s108 = sphi 0, %s106
      %s109 = sphi 0, %s108
      %s123 = sphi 0, %s109
      %s127 = sphi 0, %s127
      %s129 = sphi 0, %s127
      %s130 = sphi 0, %s129
      %s144 = sphi 0, %s130
      %s148 = sphi 0, %s148
      %s150 = sphi 0, %s148
      %s151 = sphi 0, %s150
      %s165 = sphi 0, %s151
      %s169 = sphi 0, %s169
      %s171 = sphi 0, %s169
      %s172 = sphi 0, %s171
      %s186 = sphi 0, %s172
      %s190 = sphi 0, %s190
      %s192 = sphi 0, %s190
      %s193 = sphi 0, %s192
      %s207 = sphi 0, %s193
      %s211 = sphi 0, %s211
      %s213 = sphi 0, %s211
      %s214 = sphi 0, %s213
      %s228 = sphi 0, %s214
      %s232 = sphi 0, %s232
      %s234 = sphi 0, %s232
      %s235 = sphi 0, %s234
      %s249 = sphi 0, %s235
      %s255 = sphi 0, %s257
      %s258 = sphi 0, %s255
      %s259 = sphi 0, %s258
      %s275 = sphi 0, %s259
    $region4: #{tpu_custom_call.1} parent=1 // loop_header_branch
      %28 = sbr.rel (%p26) target = $region8
    $region5: #{tpu_custom_call.1} parent=1 // loop_body
      %s30 = ssub.s32 %s25, 1
      %s31 = ssub.s32 %s25, 2
      %s32 = sadd.s32 %s25, 1
      %s33 = ssub.s32 %s25, %s32
      %p34 = scmp.eq.s32.totalorder %s33, 0
      %s36 = sadd.s32 %s35, 1
      %s37 = scalar_select %p34, %s35, %s36
      %p40 = pneg %p34
      %p41 = scmp.eq.s32.totalorder %s25, 1
      %p42 = por %p40, %p41
      %p43 = scmp.ne.s32.totalorder %s35, %s38
      %p44 = scmp.eq.s32.totalorder %s25, 0
      %p45 = por %p43, %p44
      %p46 = scmp.ne.s32.totalorder %s35, %s38
      %p47 = scmp.eq.s32.totalorder %s30, 1
      %p48 = por %p46, %p47
      %p49 = scmp.ne.s32.totalorder %s38, %s39
      %p50 = scmp.eq.s32.totalorder %s30, 0
      %p51 = por %p49, %p50
      %p52 = scmp.ne.s32.totalorder %s38, %s39
      %p53 = scmp.eq.s32.totalorder %s31, 1
      %p54 = por %p52, %p53
      %p56 = scmp.ne.s32.totalorder %s39, %s55
      %p57 = scmp.eq.s32.totalorder %s31, 0
      %p58 = por %p56, %p57
      %s59 = ssub.s32 %s25, %s32
      %p60 = scmp.eq.s32.totalorder %s59, 0
      %s62 = sadd.s32 %s61, 1
      %s63 = scalar_select %p60, %s61, %s62
      %p66 = pneg %p60
      %p67 = scmp.eq.s32.totalorder %s25, 1
      %p68 = por %p66, %p67
      %p69 = scmp.ne.s32.totalorder %s61, %s64
      %p70 = scmp.eq.s32.totalorder %s25, 0
      %p71 = por %p69, %p70
      %p72 = scmp.ne.s32.totalorder %s61, %s64
      %p73 = scmp.eq.s32.totalorder %s30, 1
      %p74 = por %p72, %p73
      %p75 = scmp.ne.s32.totalorder %s64, %s65
      %p76 = scmp.eq.s32.totalorder %s30, 0
      %p77 = por %p75, %p76
      %p78 = scmp.ne.s32.totalorder %s64, %s65
      %p79 = scmp.eq.s32.totalorder %s31, 1
      %p80 = por %p78, %p79
      %p82 = scmp.ne.s32.totalorder %s65, %s81
      %p83 = scmp.eq.s32.totalorder %s31, 0
      %p84 = por %p82, %p83
      %s86 = sadd.s32 %s85, 1
      %p89 = scmp.eq.s32.totalorder %s25, 1
      %p90 = scmp.ne.s32.totalorder %s85, %s87
      %p91 = scmp.eq.s32.totalorder %s25, 0
      %p92 = por %p90, %p91
      %p93 = scmp.ne.s32.totalorder %s85, %s87
      %p94 = scmp.eq.s32.totalorder %s30, 1
      %p95 = por %p93, %p94
      %p96 = scmp.ne.s32.totalorder %s87, %s88
      %p97 = scmp.eq.s32.totalorder %s30, 0
      %p98 = por %p96, %p97
      %p99 = scmp.ne.s32.totalorder %s87, %s88
      %p100 = scmp.eq.s32.totalorder %s31, 1
      %p101 = por %p99, %p100
      %p103 = scmp.ne.s32.totalorder %s88, %s102
      %p104 = scmp.eq.s32.totalorder %s31, 0
      %p105 = por %p103, %p104
      %s107 = sadd.s32 %s106, 1
      %p110 = scmp.eq.s32.totalorder %s25, 1
      %p111 = scmp.ne.s32.totalorder %s106, %s108
      %p112 = scmp.eq.s32.totalorder %s25, 0
      %p113 = por %p111, %p112
      %p114 = scmp.ne.s32.totalorder %s106, %s108
      %p115 = scmp.eq.s32.totalorder %s30, 1
      %p116 = por %p114, %p115
      %p117 = scmp.ne.s32.totalorder %s108, %s109
      %p118 = scmp.eq.s32.totalorder %s30, 0
      %p119 = por %p117, %p118
      %p120 = scmp.ne.s32.totalorder %s108, %s109
      %p121 = scmp.eq.s32.totalorder %s31, 1
      %p122 = por %p120, %p121
      %p124 = scmp.ne.s32.totalorder %s109, %s123
      %p125 = scmp.eq.s32.totalorder %s31, 0
      %p126 = por %p124, %p125
      %s128 = sadd.s32 %s127, 1
      %p131 = scmp.eq.s32.totalorder %s25, 1
      %p132 = scmp.ne.s32.totalorder %s127, %s129
      %p133 = scmp.eq.s32.totalorder %s25, 0
      %p134 = por %p132, %p133
      %p135 = scmp.ne.s32.totalorder %s127, %s129
      %p136 = scmp.eq.s32.totalorder %s30, 1
      %p137 = por %p135, %p136
      %p138 = scmp.ne.s32.totalorder %s129, %s130
      %p139 = scmp.eq.s32.totalorder %s30, 0
      %p140 = por %p138, %p139
      %p141 = scmp.ne.s32.totalorder %s129, %s130
      %p142 = scmp.eq.s32.totalorder %s31, 1
      %p143 = por %p141, %p142
      %p145 = scmp.ne.s32.totalorder %s130, %s144
      %p146 = scmp.eq.s32.totalorder %s31, 0
      %p147 = por %p145, %p146
      %s149 = sadd.s32 %s148, 1
      %p152 = scmp.eq.s32.totalorder %s25, 1
      %p153 = scmp.ne.s32.totalorder %s148, %s150
      %p154 = scmp.eq.s32.totalorder %s25, 0
      %p155 = por %p153, %p154
      %p156 = scmp.ne.s32.totalorder %s148, %s150
      %p157 = scmp.eq.s32.totalorder %s30, 1
      %p158 = por %p156, %p157
      %p159 = scmp.ne.s32.totalorder %s150, %s151
      %p160 = scmp.eq.s32.totalorder %s30, 0
      %p161 = por %p159, %p160
      %p162 = scmp.ne.s32.totalorder %s150, %s151
      %p163 = scmp.eq.s32.totalorder %s31, 1
      %p164 = por %p162, %p163
      %p166 = scmp.ne.s32.totalorder %s151, %s165
      %p167 = scmp.eq.s32.totalorder %s31, 0
      %p168 = por %p166, %p167
      %s170 = sadd.s32 %s169, 1
      %p173 = scmp.eq.s32.totalorder %s25, 1
      %p174 = scmp.ne.s32.totalorder %s169, %s171
      %p175 = scmp.eq.s32.totalorder %s25, 0
      %p176 = por %p174, %p175
      %p177 = scmp.ne.s32.totalorder %s169, %s171
      %p178 = scmp.eq.s32.totalorder %s30, 1
      %p179 = por %p177, %p178
      %p180 = scmp.ne.s32.totalorder %s171, %s172
      %p181 = scmp.eq.s32.totalorder %s30, 0
      %p182 = por %p180, %p181
      %p183 = scmp.ne.s32.totalorder %s171, %s172
      %p184 = scmp.eq.s32.totalorder %s31, 1
      %p185 = por %p183, %p184
      %p187 = scmp.ne.s32.totalorder %s172, %s186
      %p188 = scmp.eq.s32.totalorder %s31, 0
      %p189 = por %p187, %p188
      %s191 = sadd.s32 %s190, 1
      %p194 = scmp.eq.s32.totalorder %s25, 1
      %p195 = scmp.ne.s32.totalorder %s190, %s192
      %p196 = scmp.eq.s32.totalorder %s25, 0
      %p197 = por %p195, %p196
      %p198 = scmp.ne.s32.totalorder %s190, %s192
      %p199 = scmp.eq.s32.totalorder %s30, 1
      %p200 = por %p198, %p199
      %p201 = scmp.ne.s32.totalorder %s192, %s193
      %p202 = scmp.eq.s32.totalorder %s30, 0
      %p203 = por %p201, %p202
      %p204 = scmp.ne.s32.totalorder %s192, %s193
      %p205 = scmp.eq.s32.totalorder %s31, 1
      %p206 = por %p204, %p205
      %p208 = scmp.ne.s32.totalorder %s193, %s207
      %p209 = scmp.eq.s32.totalorder %s31, 0
      %p210 = por %p208, %p209
      %s212 = sadd.s32 %s211, 1
      %p215 = scmp.eq.s32.totalorder %s25, 1
      %p216 = scmp.ne.s32.totalorder %s211, %s213
      %p217 = scmp.eq.s32.totalorder %s25, 0
      %p218 = por %p216, %p217
      %p219 = scmp.ne.s32.totalorder %s211, %s213
      %p220 = scmp.eq.s32.totalorder %s30, 1
      %p221 = por %p219, %p220
      %p222 = scmp.ne.s32.totalorder %s213, %s214
      %p223 = scmp.eq.s32.totalorder %s30, 0
      %p224 = por %p222, %p223
      %p225 = scmp.ne.s32.totalorder %s213, %s214
      %p226 = scmp.eq.s32.totalorder %s31, 1
      %p227 = por %p225, %p226
      %p229 = scmp.ne.s32.totalorder %s214, %s228
      %p230 = scmp.eq.s32.totalorder %s31, 0
      %p231 = por %p229, %p230
      %s233 = sadd.s32 %s232, 1
      %p236 = scmp.eq.s32.totalorder %s25, 1
      %p237 = scmp.ne.s32.totalorder %s232, %s234
      %p238 = scmp.eq.s32.totalorder %s25, 0
      %p239 = por %p237, %p238
      %p240 = scmp.ne.s32.totalorder %s232, %s234
      %p241 = scmp.eq.s32.totalorder %s30, 1
      %p242 = por %p240, %p241
      %p243 = scmp.ne.s32.totalorder %s234, %s235
      %p244 = scmp.eq.s32.totalorder %s30, 0
      %p245 = por %p243, %p244
      %p246 = scmp.ne.s32.totalorder %s234, %s235
      %p247 = scmp.eq.s32.totalorder %s31, 1
      %p248 = por %p246, %p247
      %p250 = scmp.ne.s32.totalorder %s235, %s249
      %p251 = scmp.eq.s32.totalorder %s31, 0
      %p252 = por %p250, %p251
      %s253 = ssub.s32 %s25, %s32
      %p254 = scmp.eq.s32.totalorder %s253, 0
      %s256 = sadd.s32 %s255, 1
      %s257 = scalar_select %p254, %s255, %s256
      %p260 = pneg %p254
      %p261 = scmp.eq.s32.totalorder %s25, 1
      %p262 = por %p260, %p261
      %p263 = scmp.ne.s32.totalorder %s255, %s258
      %p264 = scmp.eq.s32.totalorder %s25, 0
      %p265 = por %p263, %p264
      %p266 = scmp.ne.s32.totalorder %s255, %s258
      %p267 = scmp.eq.s32.totalorder %s30, 1
      %p268 = por %p266, %p267
      %p269 = scmp.ne.s32.totalorder %s258, %s259
      %p270 = scmp.eq.s32.totalorder %s30, 0
      %p271 = por %p269, %p270
      %p272 = scmp.ne.s32.totalorder %s258, %s259
      %p273 = scmp.eq.s32.totalorder %s31, 1
      %p274 = por %p272, %p273
      %p276 = scmp.ne.s32.totalorder %s259, %s275
      %p277 = scmp.eq.s32.totalorder %s31, 0
      %p278 = por %p276, %p277
      %p279 = scmp.le.s32.totalorder 1, %s25
      %p280 = scmp.lt.s32.totalorder %s25, 3
      %p281 = pnand %p279, %p280
      %p282 = pneg %p281
      // Predicated region
      $region9: #{tpu_custom_call.1} parent=5 // pred_check
        _
      $region10: #{tpu_custom_call.1} parent=5 // pred_check_branch
        %284 = sbr.rel (%p281) target = $region12
      $region11: #{tpu_custom_call.1} parent=5 // pred_region
        %s285 = ssub.s32 %s25, 1
        // Predicated region
        $region13: #{tpu_custom_call.1} parent=11 // pred_check
          %p286 = pneg %p98
        $region14: #{tpu_custom_call.1} parent=11 // pred_check_branch
          %288 = sbr.rel (%p286) target = $region16
        $region15: #{tpu_custom_call.1} parent=11 // pred_region
          _
        $region16: #{tpu_custom_call.1} parent=11 // pred_fallthru
          _
        // Predicated region
        $region17: #{tpu_custom_call.1} parent=11 // pred_check
          %p289 = pneg %p119
        $region18: #{tpu_custom_call.1} parent=11 // pred_check_branch
          %291 = sbr.rel (%p289) target = $region20
        $region19: #{tpu_custom_call.1} parent=11 // pred_region
          _
        $region20: #{tpu_custom_call.1} parent=11 // pred_fallthru
          _
        // Predicated region
        $region21: #{tpu_custom_call.1} parent=11 // pred_check
          %p292 = pneg %p140
        $region22: #{tpu_custom_call.1} parent=11 // pred_check_branch
          %294 = sbr.rel (%p292) target = $region24
        $region23: #{tpu_custom_call.1} parent=11 // pred_region
          _
        $region24: #{tpu_custom_call.1} parent=11 // pred_fallthru
          _
        // Predicated region
        $region25: #{tpu_custom_call.1} parent=11 // pred_check
          %p295 = pneg %p161
        $region26: #{tpu_custom_call.1} parent=11 // pred_check_branch
          %297 = sbr.rel (%p295) target = $region28
        $region27: #{tpu_custom_call.1} parent=11 // pred_region
          _
        $region28: #{tpu_custom_call.1} parent=11 // pred_fallthru
          _
        // Predicated region
        $region29: #{tpu_custom_call.1} parent=11 // pred_check
          %p298 = pneg %p182
        $region30: #{tpu_custom_call.1} parent=11 // pred_check_branch
          %300 = sbr.rel (%p298) target = $region32
        $region31: #{tpu_custom_call.1} parent=11 // pred_region
          _
        $region32: #{tpu_custom_call.1} parent=11 // pred_fallthru
          _
        // Predicated region
        $region33: #{tpu_custom_call.1} parent=11 // pred_check
          %p301 = pneg %p203
        $region34: #{tpu_custom_call.1} parent=11 // pred_check_branch
          %303 = sbr.rel (%p301) target = $region36
        $region35: #{tpu_custom_call.1} parent=11 // pred_region
          _
        $region36: #{tpu_custom_call.1} parent=11 // pred_fallthru
          _
        // Predicated region
        $region37: #{tpu_custom_call.1} parent=11 // pred_check
          %p304 = pneg %p224
        $region38: #{tpu_custom_call.1} parent=11 // pred_check_branch
          %306 = sbr.rel (%p304) target = $region40
        $region39: #{tpu_custom_call.1} parent=11 // pred_region
          _
        $region40: #{tpu_custom_call.1} parent=11 // pred_fallthru
          _
        // Predicated region
        $region41: #{tpu_custom_call.1} parent=11 // pred_check
          %p307 = pneg %p245
        $region42: #{tpu_custom_call.1} parent=11 // pred_check_branch
          %309 = sbr.rel (%p307) target = $region44
        $region43: #{tpu_custom_call.1} parent=11 // pred_region
          _
        $region44: #{tpu_custom_call.1} parent=11 // pred_fallthru
          _
      $region12: #{tpu_custom_call.1} parent=5 // pred_fallthru
        _
      %p310 = scmp.lt.s32.totalorder %s25, 2
      // Predicated region
      $region45: #{tpu_custom_call.1} parent=5 // pred_check
        %p311 = pneg %p310
      $region46: #{tpu_custom_call.1} parent=5 // pred_check_branch
        %313 = sbr.rel (%p311) target = $region48
      $region47: #{tpu_custom_call.1} parent=5 // pred_region
        // Predicated region
        $region49: #{tpu_custom_call.1} parent=47 // pred_check
          %p314 = pneg %p45
        $region50: #{tpu_custom_call.1} parent=47 // pred_check_branch
          %316 = sbr.rel (%p314) target = $region52
        $region51: #{tpu_custom_call.1} parent=47 // pred_region
          %s317 = sand.u32 %s35, 1
          %s318 = scalar_lea.sflag [#allocation3], %s317
          %s319 = sand.u32 %s35, 1
          %s320 = smul.addr %s319, 8
          %s321 = scalar_lea.vmem [#allocation2], %s320
          %s323 = ssub.s32 128, 128
          %324 = vsyncadd %s318, %s323
          %s325 = smul.addr %s25, 128
          %s326 = scalar_lea.hbm %s0, %s325
          %s328 = sshll.u32 %s321, 4
          %s329 = int_to_ptr.vmem [resolvable:$true] %s328
          %331 = dma.hbm_to_vmem [thread:$0]  %s326, 128, %s329, %s318
        $region52: #{tpu_custom_call.1} parent=47 // pred_fallthru
          _
        // Predicated region
        $region53: #{tpu_custom_call.1} parent=47 // pred_check
          %p332 = pneg %p71
        $region54: #{tpu_custom_call.1} parent=47 // pred_check_branch
          %334 = sbr.rel (%p332) target = $region56
        $region55: #{tpu_custom_call.1} parent=47 // pred_region
          %s335 = sand.u32 %s61, 1
          %s336 = scalar_lea.sflag [#allocation6], %s335
          %s337 = sand.u32 %s61, 1
          %s338 = smul.addr %s337, 2
          %s339 = scalar_lea.vmem [#allocation5], %s338
          %s341 = ssub.s32 32, 32
          %342 = vsyncadd %s336, %s341
          %s343 = smul.addr %s25, 32
          %s344 = scalar_lea.hbm %s1, %s343
          %s346 = sshll.u32 %s339, 4
          %s347 = int_to_ptr.vmem [resolvable:$true] %s346
          %349 = dma.hbm_to_vmem [thread:$0]  %s344, 32, %s347, %s336
        $region56: #{tpu_custom_call.1} parent=47 // pred_fallthru
          _
      $region48: #{tpu_custom_call.1} parent=5 // pred_fallthru
        _
      %p350 = scmp.le.s32.totalorder 1, %s25
      %p351 = scmp.lt.s32.totalorder %s25, 3
      %p352 = pnand %p350, %p351
      %p353 = pneg %p352
      // Predicated region
      $region57: #{tpu_custom_call.1} parent=5 // pred_check
        _
      $region58: #{tpu_custom_call.1} parent=5 // pred_check_branch
        %355 = sbr.rel (%p352) target = $region60
      $region59: #{tpu_custom_call.1} parent=5 // pred_region
        %s356 = ssub.s32 %s25, 1
        %s357 = sand.u32 %s38, 1
        %s358 = scalar_lea.sflag [#allocation3], %s357
        %s359 = sand.u32 %s38, 1
        %s360 = smul.addr %s359, 8
        %s361 = scalar_lea.vmem [#allocation2], %s360
        // Predicated region
        $region61: #{tpu_custom_call.1} parent=59 // pred_check
          %p362 = pneg %p51
        $region62: #{tpu_custom_call.1} parent=59 // pred_check_branch
          %364 = sbr.rel (%p362) target = $region64
        $region63: #{tpu_custom_call.1} parent=59 // pred_region
          %365 = dma.done %s358, 128
        $region64: #{tpu_custom_call.1} parent=59 // pred_fallthru
          _
        %s366 = sand.u32 %s64, 1
        %s367 = scalar_lea.sflag [#allocation6], %s366
        %s368 = sand.u32 %s64, 1
        %s369 = smul.addr %s368, 2
        %s370 = scalar_lea.vmem [#allocation5], %s369
        // Predicated region
        $region65: #{tpu_custom_call.1} parent=59 // pred_check
          %p371 = pneg %p77
        $region66: #{tpu_custom_call.1} parent=59 // pred_check_branch
          %373 = sbr.rel (%p371) target = $region68
        $region67: #{tpu_custom_call.1} parent=59 // pred_region
          %374 = dma.done %s367, 32
        $region68: #{tpu_custom_call.1} parent=59 // pred_fallthru
          _
        %s375 = sand.u32 %s38, 1
        %s376 = scalar_lea.sflag [#allocation3], %s375
        %s377 = sand.u32 %s38, 1
        %s378 = smul.addr %s377, 8
        %s379 = scalar_lea.vmem [#allocation2], %s378
        %p380 = pneg %p51
        %p381 = pneg %p48
        %s382 = sand.u32 %s64, 1
        %s383 = scalar_lea.sflag [#allocation6], %s382
        %s384 = sand.u32 %s64, 1
        %s385 = smul.addr %s384, 2
        %s386 = scalar_lea.vmem [#allocation5], %s385
        %p387 = pneg %p77
        %p388 = pneg %p74
        %p389 = pneg %p98
        %p390 = pneg %p95
        %p391 = pneg %p119
        %p392 = pneg %p116
        %p393 = pneg %p140
        %p394 = pneg %p137
        %p395 = pneg %p161
        %p396 = pneg %p158
        %p397 = pneg %p182
        %p398 = pneg %p179
        %p399 = pneg %p203
        %p400 = pneg %p200
        %p401 = pneg %p224
        %p402 = pneg %p221
        %p403 = pneg %p245
        %p404 = pneg %p242
        %p405 = pneg %p271
        %p406 = pneg %p268
        %s407 = sand.u32 %s258, 1
        %s408 = scalar_lea.sflag [#allocation4], %s407
        %s409 = sand.u32 %s258, 1
        %s410 = smul.addr %s409, 8
        %s411 = scalar_lea.vmem [#allocation7], %s410
        %v414 = vld [vmem:[%s361] sm:$0xff]
        %v415 = vld [vmem:[%s2] sm:$0xff]
        %v416 = vld [vmem:[%s2 + $0x8] sm:$0xff]
        %v417 = vld [vmem:[%s2 + $0x10] sm:$0xff]
        %v418 = vld [vmem:[%s2 + $0x18] sm:$0xff]
        %v419 = vld [vmem:[%s3] sm:$0x1]
        %v421 = vlaneseq
        %v422 = vshrl.u32 %v421, 7
        %v423 = vsub.s32 0, %v422
        %v424 = vrot.slane %v419, %v423
        %vm426 = vcmask 261120
        %v428 = vsel %vm426, %v414, 0
        %430 = vmatprep.subr.mxu0 0.0
        %431 = vmatpush1.msra.mxu0 %v415
        %432 = vmatprep.subr.mxu0 0.0
        %433 = vmatpush1.msra.mxu0 %v416
        %434 = vmatprep.subr.mxu0 0.0
        %435 = vmatpush1.msra.mxu0 %v417
        %436 = vmatprep.subr.mxu0 0.0
        %437 = vmatpush1.msra.mxu0 %v418
        %438 = vmatprep.subr.mxu0 0.0
        %439 = vmatpush1.msra.mxu0 0.0
        %440 = vmatprep.subr.mxu0 0.0
        %441 = vmatpush1.msra.mxu0 0.0
        %442 = vmatprep.subr.mxu0 0.0
        %443 = vmatpush1.msra.mxu0 0.0
        %444 = vmatprep.subr.mxu0 0.0
        %445 = vmatpush1.msra.mxu0 0.0
        %446 = vmatprep.subr.mxu0 0.0
        %447 = vmatpush1.msra.mxu0 0.0
        %448 = vmatprep.subr.mxu0 0.0
        %449 = vmatpush1.msra.mxu0 0.0
        %450 = vmatprep.subr.mxu0 0.0
        %451 = vmatpush1.msra.mxu0 0.0
        %452 = vmatprep.subr.mxu0 0.0
        %453 = vmatpush1.msra.mxu0 0.0
        %454 = vmatprep.subr.mxu0 0.0
        %455 = vmatpush1.msra.mxu0 0.0
        %456 = vmatprep.subr.mxu0 0.0
        %457 = vmatpush1.msra.mxu0 0.0
        %458 = vmatprep.subr.mxu0 0.0
        %459 = vmatpush1.msra.mxu0 0.0
        %460 = vmatprep.subr.mxu0 0.0
        %461 = vmatpush1.msra.mxu0 0.0
        %462 = vmatprep.subr.mxu0 0.0
        %463 = vmatpush1.msra.mxu0 0.0
        %464 = vmatprep.subr.mxu0 0.0
        %465 = vmatpush1.msra.mxu0 0.0
        %466 = vmatprep.subr.mxu0 0.0
        %467 = vmatpush1.msra.mxu0 0.0
        %468 = vmatprep.subr.mxu0 0.0
        %469 = vmatpush1.msra.mxu0 0.0
        %470 = vmatprep.subr.mxu0 0.0
        %471 = vmatpush1.msra.mxu0 0.0
        %472 = vmatprep.subr.mxu0 0.0
        %473 = vmatpush1.msra.mxu0 0.0
        %474 = vmatprep.subr.mxu0 0.0
        %475 = vmatpush1.msra.mxu0 0.0
        %476 = vmatprep.subr.mxu0 0.0
        %477 = vmatpush1.msra.mxu0 0.0
        %478 = vmatprep.subr.mxu0 0.0
        %479 = vmatpush1.msra.mxu0 0.0
        %480 = vmatprep.subr.mxu0 0.0
        %481 = vmatpush1.msra.mxu0 0.0
        %482 = vmatprep.subr.mxu0 0.0
        %483 = vmatpush1.msra.mxu0 0.0
        %484 = vmatprep.subr.mxu0 0.0
        %485 = vmatpush1.msra.mxu0 0.0
        %486 = vmatprep.subr.mxu0 0.0
        %487 = vmatpush1.msra.mxu0 0.0
        %488 = vmatprep.subr.mxu0 0.0
        %489 = vmatpush1.msra.mxu0 0.0
        %490 = vmatprep.subr.mxu0 0.0
        %491 = vmatpush1.msra.mxu0 0.0
        %492 = vmatprep.subr.mxu0 0.0
        %493 = vmatpush1.msra.mxu0 0.0
        %494 = vmatprep.mubr.f32.mxu0 0.0
        %495 = vmatmul.mubr.f32.gmra.mrb[0].mxu0 %v428
        %v496 = vpop.f32.mrb[0].mxu0
        %v497 = vadd.f32 %v424, %v496
        %v498 = vpop.f32.mrb[0].mxu0
        %499 = vdwg.mxu0
        %v500 = vld [vmem:[%s370] sm:$0x3]
        %vm501 = vnez %v500
        %503 = vrot.lane.b32.xlu0 %v497, 96
        %v504 = vpop.permute.xlu0 %503
        %vm505 = vcmask 64512
        %v506 = vsel %vm505, %v497, 0
        %v508 = vsel %vm505, %v504, 0
        %510 = vmatprep.subr.mxu0 0.0
        %511 = vmatpush1.xpose.msra.mxu0 %v508
        %512 = vmatprep.subr.mxu0 0.0
        %513 = vmatpush1.xpose.msra.mxu0 0.0
        %514 = vmatprep.subr.mxu0 0.0
        %515 = vmatpush1.xpose.msra.mxu0 0.0
        %516 = vmatprep.subr.mxu0 0.0
        %517 = vmatpush1.xpose.msra.mxu0 0.0
        %518 = vmatprep.subr.mxu0 0.0
        %519 = vmatpush1.xpose.msra.mxu0 0.0
        %520 = vmatprep.subr.mxu0 0.0
        %521 = vmatpush1.xpose.msra.mxu0 0.0
        %522 = vmatprep.subr.mxu0 0.0
        %523 = vmatpush1.xpose.msra.mxu0 0.0
        %524 = vmatprep.subr.mxu0 0.0
        %525 = vmatpush1.xpose.msra.mxu0 0.0
        %526 = vmatprep.subr.mxu0 0.0
        %527 = vmatpush1.xpose.msra.mxu0 0.0
        %528 = vmatprep.subr.mxu0 0.0
        %529 = vmatpush1.xpose.msra.mxu0 0.0
        %530 = vmatprep.subr.mxu0 0.0
        %531 = vmatpush1.xpose.msra.mxu0 0.0
        %532 = vmatprep.subr.mxu0 0.0
        %533 = vmatpush1.xpose.msra.mxu0 0.0
        %534 = vmatprep.subr.mxu0 0.0
        %535 = vmatpush1.xpose.msra.mxu0 0.0
        %536 = vmatprep.subr.mxu0 0.0
        %537 = vmatpush1.xpose.msra.mxu0 0.0
        %538 = vmatprep.subr.mxu0 0.0
        %539 = vmatpush1.xpose.msra.mxu0 0.0
        %540 = vmatprep.subr.mxu0 0.0
        %541 = vmatpush1.xpose.msra.mxu0 0.0
        %542 = vmatprep.subr.mxu0 0.0
        %543 = vmatpush1.xpose.msra.mxu0 0.0
        %544 = vmatprep.subr.mxu0 0.0
        %545 = vmatpush1.xpose.msra.mxu0 0.0
        %546 = vmatprep.subr.mxu0 0.0
        %547 = vmatpush1.xpose.msra.mxu0 0.0
        %548 = vmatprep.subr.mxu0 0.0
        %549 = vmatpush1.xpose.msra.mxu0 0.0
        %550 = vmatprep.subr.mxu0 0.0
        %551 = vmatpush1.xpose.msra.mxu0 0.0
        %552 = vmatprep.subr.mxu0 0.0
        %553 = vmatpush1.xpose.msra.mxu0 0.0
        %554 = vmatprep.subr.mxu0 0.0
        %555 = vmatpush1.xpose.msra.mxu0 0.0
        %556 = vmatprep.subr.mxu0 0.0
        %557 = vmatpush1.xpose.msra.mxu0 0.0
        %558 = vmatprep.subr.mxu0 0.0
        %559 = vmatpush1.xpose.msra.mxu0 0.0
        %560 = vmatprep.subr.mxu0 0.0
        %561 = vmatpush1.xpose.msra.mxu0 0.0
        %562 = vmatprep.subr.mxu0 0.0
        %563 = vmatpush1.xpose.msra.mxu0 0.0
        %564 = vmatprep.subr.mxu0 0.0
        %565 = vmatpush1.xpose.msra.mxu0 0.0
        %566 = vmatprep.subr.mxu0 0.0
        %567 = vmatpush1.xpose.msra.mxu0 0.0
        %568 = vmatprep.subr.mxu0 0.0
        %569 = vmatpush1.xpose.msra.mxu0 0.0
        %570 = vmatprep.subr.mxu0 0.0
        %571 = vmatpush1.xpose.msra.mxu0 0.0
        %572 = vmatprep.subr.mxu0 0.0
        %573 = vmatpush1.xpose.msra.mxu0 0.0
        %574 = vmatprep.mubr.f32.mxu0 0.0
        %575 = vmatmul.mubr.f32.gmra.mrb[0].mxu0 %v506
        %v576 = vpop.f32.mrb[0].mxu0
        %v577 = vadd.f32 0.0, %v576
        %v578 = vpop.f32.mrb[0].mxu0
        %579 = vdwg.mxu0
        %v580 = vsel %vm501, 16843009, 0
        %v581 = vunpack.c.0.s8 %v580
        %vm582 = vcmp.ne.s32.totalorder %v581, 0
        %v583 = vsel %vm582, -1e+09, %v577
        %v584 = vsel %vm505, %v583, -inf
        %585 = vmax.xlane.f32.xlu0 %v584
        %v586 = vpop.xlane.xlu0 %585
        %v587 = vsub.f32 %v583, %v586
        %v588 = vmul.f32 %v587, 1.442695
        %v589 = vpow.pop %v588
        %v590 = vsel %vm505, %v589, 0.0
        %591 = vadd.xlane.f32.xlu0 %v590
        %v592 = vpop.xlane.xlu0 %591
        %v593 = vrcp.pop %v592
        %v594 = vmul.f32 %v589, %v593
        %595 = vrot.lane.b32.xlu0 %v497, 64
        %v596 = vpop.permute.xlu0 %595
        %v599 = vsel %vm505, %v594, 0
        %601 = vmatprep.subr.mxu0 0.0
        %602 = vmatpush1.msra.mxu0 %v596
        %603 = vmatprep.subr.mxu0 0.0
        %604 = vmatpush1.msra.mxu0 0.0
        %605 = vmatprep.subr.mxu0 0.0
        %606 = vmatpush1.msra.mxu0 0.0
        %607 = vmatprep.subr.mxu0 0.0
        %608 = vmatpush1.msra.mxu0 0.0
        %609 = vmatprep.subr.mxu0 0.0
        %610 = vmatpush1.msra.mxu0 0.0
        %611 = vmatprep.subr.mxu0 0.0
        %612 = vmatpush1.msra.mxu0 0.0
        %613 = vmatprep.subr.mxu0 0.0
        %614 = vmatpush1.msra.mxu0 0.0
        %615 = vmatprep.subr.mxu0 0.0
        %616 = vmatpush1.msra.mxu0 0.0
        %617 = vmatprep.subr.mxu0 0.0
        %618 = vmatpush1.msra.mxu0 0.0
        %619 = vmatprep.subr.mxu0 0.0
        %620 = vmatpush1.msra.mxu0 0.0
        %621 = vmatprep.subr.mxu0 0.0
        %622 = vmatpush1.msra.mxu0 0.0
        %623 = vmatprep.subr.mxu0 0.0
        %624 = vmatpush1.msra.mxu0 0.0
        %625 = vmatprep.subr.mxu0 0.0
        %626 = vmatpush1.msra.mxu0 0.0
        %627 = vmatprep.subr.mxu0 0.0
        %628 = vmatpush1.msra.mxu0 0.0
        %629 = vmatprep.subr.mxu0 0.0
        %630 = vmatpush1.msra.mxu0 0.0
        %631 = vmatprep.subr.mxu0 0.0
        %632 = vmatpush1.msra.mxu0 0.0
        %633 = vmatprep.subr.mxu0 0.0
        %634 = vmatpush1.msra.mxu0 0.0
        %635 = vmatprep.subr.mxu0 0.0
        %636 = vmatpush1.msra.mxu0 0.0
        %637 = vmatprep.subr.mxu0 0.0
        %638 = vmatpush1.msra.mxu0 0.0
        %639 = vmatprep.subr.mxu0 0.0
        %640 = vmatpush1.msra.mxu0 0.0
        %641 = vmatprep.subr.mxu0 0.0
        %642 = vmatpush1.msra.mxu0 0.0
        %643 = vmatprep.subr.mxu0 0.0
        %644 = vmatpush1.msra.mxu0 0.0
        %645 = vmatprep.subr.mxu0 0.0
        %646 = vmatpush1.msra.mxu0 0.0
        %647 = vmatprep.subr.mxu0 0.0
        %648 = vmatpush1.msra.mxu0 0.0
        %649 = vmatprep.subr.mxu0 0.0
        %650 = vmatpush1.msra.mxu0 0.0
        %651 = vmatprep.subr.mxu0 0.0
        %652 = vmatpush1.msra.mxu0 0.0
        %653 = vmatprep.subr.mxu0 0.0
        %654 = vmatpush1.msra.mxu0 0.0
        %655 = vmatprep.subr.mxu0 0.0
        %656 = vmatpush1.msra.mxu0 0.0
        %657 = vmatprep.subr.mxu0 0.0
        %658 = vmatpush1.msra.mxu0 0.0
        %659 = vmatprep.subr.mxu0 0.0
        %660 = vmatpush1.msra.mxu0 0.0
        %661 = vmatprep.subr.mxu0 0.0
        %662 = vmatpush1.msra.mxu0 0.0
        %663 = vmatprep.subr.mxu0 0.0
        %664 = vmatpush1.msra.mxu0 0.0
        %665 = vmatprep.mubr.f32.mxu0 0.0
        %666 = vmatmul.mubr.f32.gmra.mrb[0].mxu0 %v599
        %v667 = vpop.f32.mrb[0].mxu0
        %v668 = vadd.f32 0.0, %v667
        %v669 = vpop.f32.mrb[0].mxu0
        %670 = vdwg.mxu0
        %671 = vrot.lane.b32.xlu0 %v497, 120
        %v672 = vpop.permute.xlu0 %671
        %673 = vrot.lane.b32.xlu0 %v497, 88
        %v674 = vpop.permute.xlu0 %673
        %v675 = vsel %vm505, %v672, 0
        %v677 = vsel %vm505, %v674, 0
        %679 = vmatprep.subr.mxu0 0.0
        %680 = vmatpush1.xpose.msra.mxu0 %v677
        %681 = vmatprep.subr.mxu0 0.0
        %682 = vmatpush1.xpose.msra.mxu0 0.0
        %683 = vmatprep.subr.mxu0 0.0
        %684 = vmatpush1.xpose.msra.mxu0 0.0
        %685 = vmatprep.subr.mxu0 0.0
        %686 = vmatpush1.xpose.msra.mxu0 0.0
        %687 = vmatprep.subr.mxu0 0.0
        %688 = vmatpush1.xpose.msra.mxu0 0.0
        %689 = vmatprep.subr.mxu0 0.0
        %690 = vmatpush1.xpose.msra.mxu0 0.0
        %691 = vmatprep.subr.mxu0 0.0
        %692 = vmatpush1.xpose.msra.mxu0 0.0
        %693 = vmatprep.subr.mxu0 0.0
        %694 = vmatpush1.xpose.msra.mxu0 0.0
        %695 = vmatprep.subr.mxu0 0.0
        %696 = vmatpush1.xpose.msra.mxu0 0.0
        %697 = vmatprep.subr.mxu0 0.0
        %698 = vmatpush1.xpose.msra.mxu0 0.0
        %699 = vmatprep.subr.mxu0 0.0
        %700 = vmatpush1.xpose.msra.mxu0 0.0
        %701 = vmatprep.subr.mxu0 0.0
        %702 = vmatpush1.xpose.msra.mxu0 0.0
        %703 = vmatprep.subr.mxu0 0.0
        %704 = vmatpush1.xpose.msra.mxu0 0.0
        %705 = vmatprep.subr.mxu0 0.0
        %706 = vmatpush1.xpose.msra.mxu0 0.0
        %707 = vmatprep.subr.mxu0 0.0
        %708 = vmatpush1.xpose.msra.mxu0 0.0
        %709 = vmatprep.subr.mxu0 0.0
        %710 = vmatpush1.xpose.msra.mxu0 0.0
        %711 = vmatprep.subr.mxu0 0.0
        %712 = vmatpush1.xpose.msra.mxu0 0.0
        %713 = vmatprep.subr.mxu0 0.0
        %714 = vmatpush1.xpose.msra.mxu0 0.0
        %715 = vmatprep.subr.mxu0 0.0
        %716 = vmatpush1.xpose.msra.mxu0 0.0
        %717 = vmatprep.subr.mxu0 0.0
        %718 = vmatpush1.xpose.msra.mxu0 0.0
        %719 = vmatprep.subr.mxu0 0.0
        %720 = vmatpush1.xpose.msra.mxu0 0.0
        %721 = vmatprep.subr.mxu0 0.0
        %722 = vmatpush1.xpose.msra.mxu0 0.0
        %723 = vmatprep.subr.mxu0 0.0
        %724 = vmatpush1.xpose.msra.mxu0 0.0
        %725 = vmatprep.subr.mxu0 0.0
        %726 = vmatpush1.xpose.msra.mxu0 0.0
        %727 = vmatprep.subr.mxu0 0.0
        %728 = vmatpush1.xpose.msra.mxu0 0.0
        %729 = vmatprep.subr.mxu0 0.0
        %730 = vmatpush1.xpose.msra.mxu0 0.0
        %731 = vmatprep.subr.mxu0 0.0
        %732 = vmatpush1.xpose.msra.mxu0 0.0
        %733 = vmatprep.subr.mxu0 0.0
        %734 = vmatpush1.xpose.msra.mxu0 0.0
        %735 = vmatprep.subr.mxu0 0.0
        %736 = vmatpush1.xpose.msra.mxu0 0.0
        %737 = vmatprep.subr.mxu0 0.0
        %738 = vmatpush1.xpose.msra.mxu0 0.0
        %739 = vmatprep.subr.mxu0 0.0
        %740 = vmatpush1.xpose.msra.mxu0 0.0
        %741 = vmatprep.subr.mxu0 0.0
        %742 = vmatpush1.xpose.msra.mxu0 0.0
        %743 = vmatprep.mubr.f32.mxu0 0.0
        %744 = vmatmul.mubr.f32.gmra.mrb[0].mxu0 %v675
        %v745 = vpop.f32.mrb[0].mxu0
        %v746 = vadd.f32 0.0, %v745
        %v747 = vpop.f32.mrb[0].mxu0
        %748 = vdwg.mxu0
        %v749 = vsel %vm582, -1e+09, %v746
        %v750 = vsel %vm505, %v749, -inf
        %751 = vmax.xlane.f32.xlu0 %v750
        %v752 = vpop.xlane.xlu0 %751
        %v753 = vsub.f32 %v749, %v752
        %v754 = vmul.f32 %v753, 1.442695
        %v755 = vpow.pop %v754
        %v756 = vsel %vm505, %v755, 0.0
        %757 = vadd.xlane.f32.xlu0 %v756
        %v758 = vpop.xlane.xlu0 %757
        %v759 = vrcp.pop %v758
        %v760 = vmul.f32 %v755, %v759
        %761 = vrot.lane.b32.xlu0 %v497, 56
        %v762 = vpop.permute.xlu0 %761
        %v765 = vsel %vm505, %v760, 0
        %767 = vmatprep.subr.mxu0 0.0
        %768 = vmatpush1.msra.mxu0 %v762
        %769 = vmatprep.subr.mxu0 0.0
        %770 = vmatpush1.msra.mxu0 0.0
        %771 = vmatprep.subr.mxu0 0.0
        %772 = vmatpush1.msra.mxu0 0.0
        %773 = vmatprep.subr.mxu0 0.0
        %774 = vmatpush1.msra.mxu0 0.0
        %775 = vmatprep.subr.mxu0 0.0
        %776 = vmatpush1.msra.mxu0 0.0
        %777 = vmatprep.subr.mxu0 0.0
        %778 = vmatpush1.msra.mxu0 0.0
        %779 = vmatprep.subr.mxu0 0.0
        %780 = vmatpush1.msra.mxu0 0.0
        %781 = vmatprep.subr.mxu0 0.0
        %782 = vmatpush1.msra.mxu0 0.0
        %783 = vmatprep.subr.mxu0 0.0
        %784 = vmatpush1.msra.mxu0 0.0
        %785 = vmatprep.subr.mxu0 0.0
        %786 = vmatpush1.msra.mxu0 0.0
        %787 = vmatprep.subr.mxu0 0.0
        %788 = vmatpush1.msra.mxu0 0.0
        %789 = vmatprep.subr.mxu0 0.0
        %790 = vmatpush1.msra.mxu0 0.0
        %791 = vmatprep.subr.mxu0 0.0
        %792 = vmatpush1.msra.mxu0 0.0
        %793 = vmatprep.subr.mxu0 0.0
        %794 = vmatpush1.msra.mxu0 0.0
        %795 = vmatprep.subr.mxu0 0.0
        %796 = vmatpush1.msra.mxu0 0.0
        %797 = vmatprep.subr.mxu0 0.0
        %798 = vmatpush1.msra.mxu0 0.0
        %799 = vmatprep.subr.mxu0 0.0
        %800 = vmatpush1.msra.mxu0 0.0
        %801 = vmatprep.subr.mxu0 0.0
        %802 = vmatpush1.msra.mxu0 0.0
        %803 = vmatprep.subr.mxu0 0.0
        %804 = vmatpush1.msra.mxu0 0.0
        %805 = vmatprep.subr.mxu0 0.0
        %806 = vmatpush1.msra.mxu0 0.0
        %807 = vmatprep.subr.mxu0 0.0
        %808 = vmatpush1.msra.mxu0 0.0
        %809 = vmatprep.subr.mxu0 0.0
        %810 = vmatpush1.msra.mxu0 0.0
        %811 = vmatprep.subr.mxu0 0.0
        %812 = vmatpush1.msra.mxu0 0.0
        %813 = vmatprep.subr.mxu0 0.0
        %814 = vmatpush1.msra.mxu0 0.0
        %815 = vmatprep.subr.mxu0 0.0
        %816 = vmatpush1.msra.mxu0 0.0
        %817 = vmatprep.subr.mxu0 0.0
        %818 = vmatpush1.msra.mxu0 0.0
        %819 = vmatprep.subr.mxu0 0.0
        %820 = vmatpush1.msra.mxu0 0.0
        %821 = vmatprep.subr.mxu0 0.0
        %822 = vmatpush1.msra.mxu0 0.0
        %823 = vmatprep.subr.mxu0 0.0
        %824 = vmatpush1.msra.mxu0 0.0
        %825 = vmatprep.subr.mxu0 0.0
        %826 = vmatpush1.msra.mxu0 0.0
        %827 = vmatprep.subr.mxu0 0.0
        %828 = vmatpush1.msra.mxu0 0.0
        %829 = vmatprep.subr.mxu0 0.0
        %830 = vmatpush1.msra.mxu0 0.0
        %831 = vmatprep.mubr.f32.mxu0 0.0
        %832 = vmatmul.mubr.f32.gmra.mrb[0].mxu0 %v765
        %v833 = vpop.f32.mrb[0].mxu0
        %v834 = vadd.f32 0.0, %v833
        %v835 = vpop.f32.mrb[0].mxu0
        %836 = vdwg.mxu0
        %837 = vrot.lane.b32.xlu0 %v497, 112
        %v838 = vpop.permute.xlu0 %837
        %839 = vrot.lane.b32.xlu0 %v497, 80
        %v840 = vpop.permute.xlu0 %839
        %v841 = vsel %vm505, %v838, 0
        %v843 = vsel %vm505, %v840, 0
        %845 = vmatprep.subr.mxu0 0.0
        %846 = vmatpush1.xpose.msra.mxu0 %v843
        %847 = vmatprep.subr.mxu0 0.0
        %848 = vmatpush1.xpose.msra.mxu0 0.0
        %849 = vmatprep.subr.mxu0 0.0
        %850 = vmatpush1.xpose.msra.mxu0 0.0
        %851 = vmatprep.subr.mxu0 0.0
        %852 = vmatpush1.xpose.msra.mxu0 0.0
        %853 = vmatprep.subr.mxu0 0.0
        %854 = vmatpush1.xpose.msra.mxu0 0.0
        %855 = vmatprep.subr.mxu0 0.0
        %856 = vmatpush1.xpose.msra.mxu0 0.0
        %857 = vmatprep.subr.mxu0 0.0
        %858 = vmatpush1.xpose.msra.mxu0 0.0
        %859 = vmatprep.subr.mxu0 0.0
        %860 = vmatpush1.xpose.msra.mxu0 0.0
        %861 = vmatprep.subr.mxu0 0.0
        %862 = vmatpush1.xpose.msra.mxu0 0.0
        %863 = vmatprep.subr.mxu0 0.0
        %864 = vmatpush1.xpose.msra.mxu0 0.0
        %865 = vmatprep.subr.mxu0 0.0
        %866 = vmatpush1.xpose.msra.mxu0 0.0
        %867 = vmatprep.subr.mxu0 0.0
        %868 = vmatpush1.xpose.msra.mxu0 0.0
        %869 = vmatprep.subr.mxu0 0.0
        %870 = vmatpush1.xpose.msra.mxu0 0.0
        %871 = vmatprep.subr.mxu0 0.0
        %872 = vmatpush1.xpose.msra.mxu0 0.0
        %873 = vmatprep.subr.mxu0 0.0
        %874 = vmatpush1.xpose.msra.mxu0 0.0
        %875 = vmatprep.subr.mxu0 0.0
        %876 = vmatpush1.xpose.msra.mxu0 0.0
        %877 = vmatprep.subr.mxu0 0.0
        %878 = vmatpush1.xpose.msra.mxu0 0.0
        %879 = vmatprep.subr.mxu0 0.0
        %880 = vmatpush1.xpose.msra.mxu0 0.0
        %881 = vmatprep.subr.mxu0 0.0
        %882 = vmatpush1.xpose.msra.mxu0 0.0
        %883 = vmatprep.subr.mxu0 0.0
        %884 = vmatpush1.xpose.msra.mxu0 0.0
        %885 = vmatprep.subr.mxu0 0.0
        %886 = vmatpush1.xpose.msra.mxu0 0.0
        %887 = vmatprep.subr.mxu0 0.0
        %888 = vmatpush1.xpose.msra.mxu0 0.0
        %889 = vmatprep.subr.mxu0 0.0
        %890 = vmatpush1.xpose.msra.mxu0 0.0
        %891 = vmatprep.subr.mxu0 0.0
        %892 = vmatpush1.xpose.msra.mxu0 0.0
        %893 = vmatprep.subr.mxu0 0.0
        %894 = vmatpush1.xpose.msra.mxu0 0.0
        %895 = vmatprep.subr.mxu0 0.0
        %896 = vmatpush1.xpose.msra.mxu0 0.0
        %897 = vmatprep.subr.mxu0 0.0
        %898 = vmatpush1.xpose.msra.mxu0 0.0
        %899 = vmatprep.subr.mxu0 0.0
        %900 = vmatpush1.xpose.msra.mxu0 0.0
        %901 = vmatprep.subr.mxu0 0.0
        %902 = vmatpush1.xpose.msra.mxu0 0.0
        %903 = vmatprep.subr.mxu0 0.0
        %904 = vmatpush1.xpose.msra.mxu0 0.0
        %905 = vmatprep.subr.mxu0 0.0
        %906 = vmatpush1.xpose.msra.mxu0 0.0
        %907 = vmatprep.subr.mxu0 0.0
        %908 = vmatpush1.xpose.msra.mxu0 0.0
        %909 = vmatprep.mubr.f32.mxu0 0.0
        %910 = vmatmul.mubr.f32.gmra.mrb[0].mxu0 %v841
        %v911 = vpop.f32.mrb[0].mxu0
        %v912 = vadd.f32 0.0, %v911
        %v913 = vpop.f32.mrb[0].mxu0
        %914 = vdwg.mxu0
        %v915 = vsel %vm582, -1e+09, %v912
        %v916 = vsel %vm505, %v915, -inf
        %917 = vmax.xlane.f32.xlu0 %v916
        %v918 = vpop.xlane.xlu0 %917
        %v919 = vsub.f32 %v915, %v918
        %v920 = vmul.f32 %v919, 1.442695
        %v921 = vpow.pop %v920
        %v922 = vsel %vm505, %v921, 0.0
        %923 = vadd.xlane.f32.xlu0 %v922
        %v924 = vpop.xlane.xlu0 %923
        %v925 = vrcp.pop %v924
        %v926 = vmul.f32 %v921, %v925
        %927 = vrot.lane.b32.xlu0 %v497, 48
        %v928 = vpop.permute.xlu0 %927
        %v931 = vsel %vm505, %v926, 0
        %933 = vmatprep.subr.mxu0 0.0
        %934 = vmatpush1.msra.mxu0 %v928
        %935 = vmatprep.subr.mxu0 0.0
        %936 = vmatpush1.msra.mxu0 0.0
        %937 = vmatprep.subr.mxu0 0.0
        %938 = vmatpush1.msra.mxu0 0.0
        %939 = vmatprep.subr.mxu0 0.0
        %940 = vmatpush1.msra.mxu0 0.0
        %941 = vmatprep.subr.mxu0 0.0
        %942 = vmatpush1.msra.mxu0 0.0
        %943 = vmatprep.subr.mxu0 0.0
        %944 = vmatpush1.msra.mxu0 0.0
        %945 = vmatprep.subr.mxu0 0.0
        %946 = vmatpush1.msra.mxu0 0.0
        %947 = vmatprep.subr.mxu0 0.0
        %948 = vmatpush1.msra.mxu0 0.0
        %949 = vmatprep.subr.mxu0 0.0
        %950 = vmatpush1.msra.mxu0 0.0
        %951 = vmatprep.subr.mxu0 0.0
        %952 = vmatpush1.msra.mxu0 0.0
        %953 = vmatprep.subr.mxu0 0.0
        %954 = vmatpush1.msra.mxu0 0.0
        %955 = vmatprep.subr.mxu0 0.0
        %956 = vmatpush1.msra.mxu0 0.0
        %957 = vmatprep.subr.mxu0 0.0
        %958 = vmatpush1.msra.mxu0 0.0
        %959 = vmatprep.subr.mxu0 0.0
        %960 = vmatpush1.msra.mxu0 0.0
        %961 = vmatprep.subr.mxu0 0.0
        %962 = vmatpush1.msra.mxu0 0.0
        %963 = vmatprep.subr.mxu0 0.0
        %964 = vmatpush1.msra.mxu0 0.0
        %965 = vmatprep.subr.mxu0 0.0
        %966 = vmatpush1.msra.mxu0 0.0
        %967 = vmatprep.subr.mxu0 0.0
        %968 = vmatpush1.msra.mxu0 0.0
        %969 = vmatprep.subr.mxu0 0.0
        %970 = vmatpush1.msra.mxu0 0.0
        %971 = vmatprep.subr.mxu0 0.0
        %972 = vmatpush1.msra.mxu0 0.0
        %973 = vmatprep.subr.mxu0 0.0
        %974 = vmatpush1.msra.mxu0 0.0
        %975 = vmatprep.subr.mxu0 0.0
        %976 = vmatpush1.msra.mxu0 0.0
        %977 = vmatprep.subr.mxu0 0.0
        %978 = vmatpush1.msra.mxu0 0.0
        %979 = vmatprep.subr.mxu0 0.0
        %980 = vmatpush1.msra.mxu0 0.0
        %981 = vmatprep.subr.mxu0 0.0
        %982 = vmatpush1.msra.mxu0 0.0
        %983 = vmatprep.subr.mxu0 0.0
        %984 = vmatpush1.msra.mxu0 0.0
        %985 = vmatprep.subr.mxu0 0.0
        %986 = vmatpush1.msra.mxu0 0.0
        %987 = vmatprep.subr.mxu0 0.0
        %988 = vmatpush1.msra.mxu0 0.0
        %989 = vmatprep.subr.mxu0 0.0
        %990 = vmatpush1.msra.mxu0 0.0
        %991 = vmatprep.subr.mxu0 0.0
        %992 = vmatpush1.msra.mxu0 0.0
        %993 = vmatprep.subr.mxu0 0.0
        %994 = vmatpush1.msra.mxu0 0.0
        %995 = vmatprep.subr.mxu0 0.0
        %996 = vmatpush1.msra.mxu0 0.0
        %997 = vmatprep.mubr.f32.mxu0 0.0
        %998 = vmatmul.mubr.f32.gmra.mrb[0].mxu0 %v931
        %v999 = vpop.f32.mrb[0].mxu0
        %v1000 = vadd.f32 0.0, %v999
        %v1001 = vpop.f32.mrb[0].mxu0
        %1002 = vdwg.mxu0
        %1003 = vrot.lane.b32.xlu0 %v497, 104
        %v1004 = vpop.permute.xlu0 %1003
        %1005 = vrot.lane.b32.xlu0 %v497, 72
        %v1006 = vpop.permute.xlu0 %1005
        %v1007 = vsel %vm505, %v1004, 0
        %v1009 = vsel %vm505, %v1006, 0
        %1011 = vmatprep.subr.mxu0 0.0
        %1012 = vmatpush1.xpose.msra.mxu0 %v1009
        %1013 = vmatprep.subr.mxu0 0.0
        %1014 = vmatpush1.xpose.msra.mxu0 0.0
        %1015 = vmatprep.subr.mxu0 0.0
        %1016 = vmatpush1.xpose.msra.mxu0 0.0
        %1017 = vmatprep.subr.mxu0 0.0
        %1018 = vmatpush1.xpose.msra.mxu0 0.0
        %1019 = vmatprep.subr.mxu0 0.0
        %1020 = vmatpush1.xpose.msra.mxu0 0.0
        %1021 = vmatprep.subr.mxu0 0.0
        %1022 = vmatpush1.xpose.msra.mxu0 0.0
        %1023 = vmatprep.subr.mxu0 0.0
        %1024 = vmatpush1.xpose.msra.mxu0 0.0
        %1025 = vmatprep.subr.mxu0 0.0
        %1026 = vmatpush1.xpose.msra.mxu0 0.0
        %1027 = vmatprep.subr.mxu0 0.0
        %1028 = vmatpush1.xpose.msra.mxu0 0.0
        %1029 = vmatprep.subr.mxu0 0.0
        %1030 = vmatpush1.xpose.msra.mxu0 0.0
        %1031 = vmatprep.subr.mxu0 0.0
        %1032 = vmatpush1.xpose.msra.mxu0 0.0
        %1033 = vmatprep.subr.mxu0 0.0
        %1034 = vmatpush1.xpose.msra.mxu0 0.0
        %1035 = vmatprep.subr.mxu0 0.0
        %1036 = vmatpush1.xpose.msra.mxu0 0.0
        %1037 = vmatprep.subr.mxu0 0.0
        %1038 = vmatpush1.xpose.msra.mxu0 0.0
        %1039 = vmatprep.subr.mxu0 0.0
        %1040 = vmatpush1.xpose.msra.mxu0 0.0
        %1041 = vmatprep.subr.mxu0 0.0
        %1042 = vmatpush1.xpose.msra.mxu0 0.0
        %1043 = vmatprep.subr.mxu0 0.0
        %1044 = vmatpush1.xpose.msra.mxu0 0.0
        %1045 = vmatprep.subr.mxu0 0.0
        %1046 = vmatpush1.xpose.msra.mxu0 0.0
        %1047 = vmatprep.subr.mxu0 0.0
        %1048 = vmatpush1.xpose.msra.mxu0 0.0
        %1049 = vmatprep.subr.mxu0 0.0
        %1050 = vmatpush1.xpose.msra.mxu0 0.0
        %1051 = vmatprep.subr.mxu0 0.0
        %1052 = vmatpush1.xpose.msra.mxu0 0.0
        %1053 = vmatprep.subr.mxu0 0.0
        %1054 = vmatpush1.xpose.msra.mxu0 0.0
        %1055 = vmatprep.subr.mxu0 0.0
        %1056 = vmatpush1.xpose.msra.mxu0 0.0
        %1057 = vmatprep.subr.mxu0 0.0
        %1058 = vmatpush1.xpose.msra.mxu0 0.0
        %1059 = vmatprep.subr.mxu0 0.0
        %1060 = vmatpush1.xpose.msra.mxu0 0.0
        %1061 = vmatprep.subr.mxu0 0.0
        %1062 = vmatpush1.xpose.msra.mxu0 0.0
        %1063 = vmatprep.subr.mxu0 0.0
        %1064 = vmatpush1.xpose.msra.mxu0 0.0
        %1065 = vmatprep.subr.mxu0 0.0
        %1066 = vmatpush1.xpose.msra.mxu0 0.0
        %1067 = vmatprep.subr.mxu0 0.0
        %1068 = vmatpush1.xpose.msra.mxu0 0.0
        %1069 = vmatprep.subr.mxu0 0.0
        %1070 = vmatpush1.xpose.msra.mxu0 0.0
        %1071 = vmatprep.subr.mxu0 0.0
        %1072 = vmatpush1.xpose.msra.mxu0 0.0
        %1073 = vmatprep.subr.mxu0 0.0
        %1074 = vmatpush1.xpose.msra.mxu0 0.0
        %1075 = vmatprep.mubr.f32.mxu0 0.0
        %1076 = vmatmul.mubr.f32.gmra.mrb[0].mxu0 %v1007
        %v1077 = vpop.f32.mrb[0].mxu0
        %v1078 = vadd.f32 0.0, %v1077
        %v1079 = vpop.f32.mrb[0].mxu0
        %1080 = vdwg.mxu0
        %v1081 = vsel %vm582, -1e+09, %v1078
        %v1082 = vsel %vm505, %v1081, -inf
        %1083 = vmax.xlane.f32.xlu0 %v1082
        %v1084 = vpop.xlane.xlu0 %1083
        %v1085 = vsub.f32 %v1081, %v1084
        %v1086 = vmul.f32 %v1085, 1.442695
        %v1087 = vpow.pop %v1086
        %v1088 = vsel %vm505, %v1087, 0.0
        %1089 = vadd.xlane.f32.xlu0 %v1088
        %v1090 = vpop.xlane.xlu0 %1089
        %v1091 = vrcp.pop %v1090
        %v1092 = vmul.f32 %v1087, %v1091
        %1093 = vrot.lane.b32.xlu0 %v497, 40
        %v1094 = vpop.permute.xlu0 %1093
        %v1097 = vsel %vm505, %v1092, 0
        %1099 = vmatprep.subr.mxu0 0.0
        %1100 = vmatpush1.msra.mxu0 %v1094
        %1101 = vmatprep.subr.mxu0 0.0
        %1102 = vmatpush1.msra.mxu0 0.0
        %1103 = vmatprep.subr.mxu0 0.0
        %1104 = vmatpush1.msra.mxu0 0.0
        %1105 = vmatprep.subr.mxu0 0.0
        %1106 = vmatpush1.msra.mxu0 0.0
        %1107 = vmatprep.subr.mxu0 0.0
        %1108 = vmatpush1.msra.mxu0 0.0
        %1109 = vmatprep.subr.mxu0 0.0
        %1110 = vmatpush1.msra.mxu0 0.0
        %1111 = vmatprep.subr.mxu0 0.0
        %1112 = vmatpush1.msra.mxu0 0.0
        %1113 = vmatprep.subr.mxu0 0.0
        %1114 = vmatpush1.msra.mxu0 0.0
        %1115 = vmatprep.subr.mxu0 0.0
        %1116 = vmatpush1.msra.mxu0 0.0
        %1117 = vmatprep.subr.mxu0 0.0
        %1118 = vmatpush1.msra.mxu0 0.0
        %1119 = vmatprep.subr.mxu0 0.0
        %1120 = vmatpush1.msra.mxu0 0.0
        %1121 = vmatprep.subr.mxu0 0.0
        %1122 = vmatpush1.msra.mxu0 0.0
        %1123 = vmatprep.subr.mxu0 0.0
        %1124 = vmatpush1.msra.mxu0 0.0
        %1125 = vmatprep.subr.mxu0 0.0
        %1126 = vmatpush1.msra.mxu0 0.0
        %1127 = vmatprep.subr.mxu0 0.0
        %1128 = vmatpush1.msra.mxu0 0.0
        %1129 = vmatprep.subr.mxu0 0.0
        %1130 = vmatpush1.msra.mxu0 0.0
        %1131 = vmatprep.subr.mxu0 0.0
        %1132 = vmatpush1.msra.mxu0 0.0
        %1133 = vmatprep.subr.mxu0 0.0
        %1134 = vmatpush1.msra.mxu0 0.0
        %1135 = vmatprep.subr.mxu0 0.0
        %1136 = vmatpush1.msra.mxu0 0.0
        %1137 = vmatprep.subr.mxu0 0.0
        %1138 = vmatpush1.msra.mxu0 0.0
        %1139 = vmatprep.subr.mxu0 0.0
        %1140 = vmatpush1.msra.mxu0 0.0
        %1141 = vmatprep.subr.mxu0 0.0
        %1142 = vmatpush1.msra.mxu0 0.0
        %1143 = vmatprep.subr.mxu0 0.0
        %1144 = vmatpush1.msra.mxu0 0.0
        %1145 = vmatprep.subr.mxu0 0.0
        %1146 = vmatpush1.msra.mxu0 0.0
        %1147 = vmatprep.subr.mxu0 0.0
        %1148 = vmatpush1.msra.mxu0 0.0
        %1149 = vmatprep.subr.mxu0 0.0
        %1150 = vmatpush1.msra.mxu0 0.0
        %1151 = vmatprep.subr.mxu0 0.0
        %1152 = vmatpush1.msra.mxu0 0.0
        %1153 = vmatprep.subr.mxu0 0.0
        %1154 = vmatpush1.msra.mxu0 0.0
        %1155 = vmatprep.subr.mxu0 0.0
        %1156 = vmatpush1.msra.mxu0 0.0
        %1157 = vmatprep.subr.mxu0 0.0
        %1158 = vmatpush1.msra.mxu0 0.0
        %1159 = vmatprep.subr.mxu0 0.0
        %1160 = vmatpush1.msra.mxu0 0.0
        %1161 = vmatprep.subr.mxu0 0.0
        %1162 = vmatpush1.msra.mxu0 0.0
        %1163 = vmatprep.mubr.f32.mxu0 0.0
        %1164 = vmatmul.mubr.f32.gmra.mrb[0].mxu0 %v1097
        %v1165 = vpop.f32.mrb[0].mxu0
        %v1166 = vadd.f32 0.0, %v1165
        %v1167 = vpop.f32.mrb[0].mxu0
        %1168 = vdwg.mxu0
        %1170 = vrot.lane.b32.xlu0 %v834, 8
        %v1171 = vpop.permute.xlu0 %1170
        %1174 = vrot.lane.b32.xlu0 %v1000, 16
        %v1175 = vpop.permute.xlu0 %1174
        %1178 = vrot.lane.b32.xlu0 %v1166, 24
        %v1179 = vpop.permute.xlu0 %1178
        %v1181 = vsel %vm505, %v668, %v1171
        %vm1182 = vcmask 130048
        %v1183 = vsel %vm1182, %v1181, %v1175
        %vm1184 = vcmask 195584
        %v1185 = vsel %vm1184, %v1183, %v1179
        %v1186 = vld [vmem:[%s4] sm:$0xff]
        %v1187 = vld [vmem:[%s4 + $0x8] sm:$0xff]
        %v1188 = vld [vmem:[%s4 + $0x10] sm:$0xff]
        %v1189 = vld [vmem:[%s4 + $0x18] sm:$0xff]
        %v1190 = vld [vmem:[%s5] sm:$0x1]
        %v1192 = vlaneseq
        %v1193 = vshrl.u32 %v1192, 7
        %v1194 = vsub.s32 0, %v1193
        %v1195 = vrot.slane %v1190, %v1194
        %v1198 = vsel %vm426, %v1185, 0
        %1200 = vmatprep.subr.mxu0 0.0
        %1201 = vmatpush1.msra.mxu0 %v1186
        %1202 = vmatprep.subr.mxu0 0.0
        %1203 = vmatpush1.msra.mxu0 %v1187
        %1204 = vmatprep.subr.mxu0 0.0
        %1205 = vmatpush1.msra.mxu0 %v1188
        %1206 = vmatprep.subr.mxu0 0.0
        %1207 = vmatpush1.msra.mxu0 %v1189
        %1208 = vmatprep.subr.mxu0 0.0
        %1209 = vmatpush1.msra.mxu0 0.0
        %1210 = vmatprep.subr.mxu0 0.0
        %1211 = vmatpush1.msra.mxu0 0.0
        %1212 = vmatprep.subr.mxu0 0.0
        %1213 = vmatpush1.msra.mxu0 0.0
        %1214 = vmatprep.subr.mxu0 0.0
        %1215 = vmatpush1.msra.mxu0 0.0
        %1216 = vmatprep.subr.mxu0 0.0
        %1217 = vmatpush1.msra.mxu0 0.0
        %1218 = vmatprep.subr.mxu0 0.0
        %1219 = vmatpush1.msra.mxu0 0.0
        %1220 = vmatprep.subr.mxu0 0.0
        %1221 = vmatpush1.msra.mxu0 0.0
        %1222 = vmatprep.subr.mxu0 0.0
        %1223 = vmatpush1.msra.mxu0 0.0
        %1224 = vmatprep.subr.mxu0 0.0
        %1225 = vmatpush1.msra.mxu0 0.0
        %1226 = vmatprep.subr.mxu0 0.0
        %1227 = vmatpush1.msra.mxu0 0.0
        %1228 = vmatprep.subr.mxu0 0.0
        %1229 = vmatpush1.msra.mxu0 0.0
        %1230 = vmatprep.subr.mxu0 0.0
        %1231 = vmatpush1.msra.mxu0 0.0
        %1232 = vmatprep.subr.mxu0 0.0
        %1233 = vmatpush1.msra.mxu0 0.0
        %1234 = vmatprep.subr.mxu0 0.0
        %1235 = vmatpush1.msra.mxu0 0.0
        %1236 = vmatprep.subr.mxu0 0.0
        %1237 = vmatpush1.msra.mxu0 0.0
        %1238 = vmatprep.subr.mxu0 0.0
        %1239 = vmatpush1.msra.mxu0 0.0
        %1240 = vmatprep.subr.mxu0 0.0
        %1241 = vmatpush1.msra.mxu0 0.0
        %1242 = vmatprep.subr.mxu0 0.0
        %1243 = vmatpush1.msra.mxu0 0.0
        %1244 = vmatprep.subr.mxu0 0.0
        %1245 = vmatpush1.msra.mxu0 0.0
        %1246 = vmatprep.subr.mxu0 0.0
        %1247 = vmatpush1.msra.mxu0 0.0
        %1248 = vmatprep.subr.mxu0 0.0
        %1249 = vmatpush1.msra.mxu0 0.0
        %1250 = vmatprep.subr.mxu0 0.0
        %1251 = vmatpush1.msra.mxu0 0.0
        %1252 = vmatprep.subr.mxu0 0.0
        %1253 = vmatpush1.msra.mxu0 0.0
        %1254 = vmatprep.subr.mxu0 0.0
        %1255 = vmatpush1.msra.mxu0 0.0
        %1256 = vmatprep.subr.mxu0 0.0
        %1257 = vmatpush1.msra.mxu0 0.0
        %1258 = vmatprep.subr.mxu0 0.0
        %1259 = vmatpush1.msra.mxu0 0.0
        %1260 = vmatprep.subr.mxu0 0.0
        %1261 = vmatpush1.msra.mxu0 0.0
        %1262 = vmatprep.subr.mxu0 0.0
        %1263 = vmatpush1.msra.mxu0 0.0
        %1264 = vmatprep.mubr.f32.mxu0 0.0
        %1265 = vmatmul.mubr.f32.gmra.mrb[0].mxu0 %v1198
        %v1266 = vpop.f32.mrb[0].mxu0
        %v1267 = vadd.f32 %v1195, %v1266
        %v1268 = vpop.f32.mrb[0].mxu0
        %1269 = vdwg.mxu0
        %v1270 = vld [vmem:[%s6] sm:$0xff]
        %v1271 = vld [vmem:[%s6 + $0x8] sm:$0xff]
        %v1272 = vld [vmem:[%s6 + $0x10] sm:$0xff]
        %v1273 = vld [vmem:[%s6 + $0x18] sm:$0xff]
        %v1274 = vld [vmem:[%s7] sm:$0x1]
        %v1276 = vlaneseq
        %v1277 = vshrl.u32 %v1276, 7
        %v1278 = vsub.s32 0, %v1277
        %v1279 = vrot.slane %v1274, %v1278
        %v1282 = vsel %vm426, %v1267, 0
        %1284 = vmatprep.subr.mxu0 0.0
        %1285 = vmatpush1.msra.mxu0 %v1270
        %1286 = vmatprep.subr.mxu0 0.0
        %1287 = vmatpush1.msra.mxu0 %v1271
        %1288 = vmatprep.subr.mxu0 0.0
        %1289 = vmatpush1.msra.mxu0 %v1272
        %1290 = vmatprep.subr.mxu0 0.0
        %1291 = vmatpush1.msra.mxu0 %v1273
        %1292 = vmatprep.subr.mxu0 0.0
        %1293 = vmatpush1.msra.mxu0 0.0
        %1294 = vmatprep.subr.mxu0 0.0
        %1295 = vmatpush1.msra.mxu0 0.0
        %1296 = vmatprep.subr.mxu0 0.0
        %1297 = vmatpush1.msra.mxu0 0.0
        %1298 = vmatprep.subr.mxu0 0.0
        %1299 = vmatpush1.msra.mxu0 0.0
        %1300 = vmatprep.subr.mxu0 0.0
        %1301 = vmatpush1.msra.mxu0 0.0
        %1302 = vmatprep.subr.mxu0 0.0
        %1303 = vmatpush1.msra.mxu0 0.0
        %1304 = vmatprep.subr.mxu0 0.0
        %1305 = vmatpush1.msra.mxu0 0.0
        %1306 = vmatprep.subr.mxu0 0.0
        %1307 = vmatpush1.msra.mxu0 0.0
        %1308 = vmatprep.subr.mxu0 0.0
        %1309 = vmatpush1.msra.mxu0 0.0
        %1310 = vmatprep.subr.mxu0 0.0
        %1311 = vmatpush1.msra.mxu0 0.0
        %1312 = vmatprep.subr.mxu0 0.0
        %1313 = vmatpush1.msra.mxu0 0.0
        %1314 = vmatprep.subr.mxu0 0.0
        %1315 = vmatpush1.msra.mxu0 0.0
        %1316 = vmatprep.subr.mxu0 0.0
        %1317 = vmatpush1.msra.mxu0 0.0
        %1318 = vmatprep.subr.mxu0 0.0
        %1319 = vmatpush1.msra.mxu0 0.0
        %1320 = vmatprep.subr.mxu0 0.0
        %1321 = vmatpush1.msra.mxu0 0.0
        %1322 = vmatprep.subr.mxu0 0.0
        %1323 = vmatpush1.msra.mxu0 0.0
        %1324 = vmatprep.subr.mxu0 0.0
        %1325 = vmatpush1.msra.mxu0 0.0
        %1326 = vmatprep.subr.mxu0 0.0
        %1327 = vmatpush1.msra.mxu0 0.0
        %1328 = vmatprep.subr.mxu0 0.0
        %1329 = vmatpush1.msra.mxu0 0.0
        %1330 = vmatprep.subr.mxu0 0.0
        %1331 = vmatpush1.msra.mxu0 0.0
        %1332 = vmatprep.subr.mxu0 0.0
        %1333 = vmatpush1.msra.mxu0 0.0
        %1334 = vmatprep.subr.mxu0 0.0
        %1335 = vmatpush1.msra.mxu0 0.0
        %1336 = vmatprep.subr.mxu0 0.0
        %1337 = vmatpush1.msra.mxu0 0.0
        %1338 = vmatprep.subr.mxu0 0.0
        %1339 = vmatpush1.msra.mxu0 0.0
        %1340 = vmatprep.subr.mxu0 0.0
        %1341 = vmatpush1.msra.mxu0 0.0
        %1342 = vmatprep.subr.mxu0 0.0
        %1343 = vmatpush1.msra.mxu0 0.0
        %1344 = vmatprep.subr.mxu0 0.0
        %1345 = vmatpush1.msra.mxu0 0.0
        %1346 = vmatprep.subr.mxu0 0.0
        %1347 = vmatpush1.msra.mxu0 0.0
        %1348 = vmatprep.mubr.f32.mxu0 0.0
        %1349 = vmatmul.mubr.f32.gmra.mrb[0].mxu0 %v1282
        %v1350 = vpop.f32.mrb[0].mxu0
        %v1351 = vadd.f32 %v1279, %v1350
        %v1352 = vpop.f32.mrb[0].mxu0
        %1353 = vdwg.mxu0
        %v1354 = vmax.f32 %v1351, 0.0
        %v1355 = vld [vmem:[%s8] sm:$0xff]
        %v1356 = vld [vmem:[%s8 + $0x8] sm:$0xff]
        %v1357 = vld [vmem:[%s8 + $0x10] sm:$0xff]
        %v1358 = vld [vmem:[%s8 + $0x18] sm:$0xff]
        %v1359 = vld [vmem:[%s8 + $0x20] sm:$0xff]
        %v1360 = vld [vmem:[%s8 + $0x28] sm:$0xff]
        %v1361 = vld [vmem:[%s8 + $0x30] sm:$0xff]
        %v1362 = vld [vmem:[%s8 + $0x38] sm:$0xff]
        %v1363 = vld [vmem:[%s9] sm:$0x1]
        %v1365 = vlaneseq
        %v1366 = vshrl.u32 %v1365, 7
        %v1367 = vsub.s32 0, %v1366
        %v1368 = vrot.slane %v1363, %v1367
        %vm1370 = vcmask 523264
        %v1372 = vsel %vm1370, %v1354, 0
        %1374 = vmatprep.subr.mxu0 0.0
        %1375 = vmatpush1.msra.mxu0 %v1355
        %1376 = vmatprep.subr.mxu0 0.0
        %1377 = vmatpush1.msra.mxu0 %v1356
        %1378 = vmatprep.subr.mxu0 0.0
        %1379 = vmatpush1.msra.mxu0 %v1357
        %1380 = vmatprep.subr.mxu0 0.0
        %1381 = vmatpush1.msra.mxu0 %v1358
        %1382 = vmatprep.subr.mxu0 0.0
        %1383 = vmatpush1.msra.mxu0 %v1359
        %1384 = vmatprep.subr.mxu0 0.0
        %1385 = vmatpush1.msra.mxu0 %v1360
        %1386 = vmatprep.subr.mxu0 0.0
        %1387 = vmatpush1.msra.mxu0 %v1361
        %1388 = vmatprep.subr.mxu0 0.0
        %1389 = vmatpush1.msra.mxu0 %v1362
        %1390 = vmatprep.subr.mxu0 0.0
        %1391 = vmatpush1.msra.mxu0 0.0
        %1392 = vmatprep.subr.mxu0 0.0
        %1393 = vmatpush1.msra.mxu0 0.0
        %1394 = vmatprep.subr.mxu0 0.0
        %1395 = vmatpush1.msra.mxu0 0.0
        %1396 = vmatprep.subr.mxu0 0.0
        %1397 = vmatpush1.msra.mxu0 0.0
        %1398 = vmatprep.subr.mxu0 0.0
        %1399 = vmatpush1.msra.mxu0 0.0
        %1400 = vmatprep.subr.mxu0 0.0
        %1401 = vmatpush1.msra.mxu0 0.0
        %1402 = vmatprep.subr.mxu0 0.0
        %1403 = vmatpush1.msra.mxu0 0.0
        %1404 = vmatprep.subr.mxu0 0.0
        %1405 = vmatpush1.msra.mxu0 0.0
        %1406 = vmatprep.subr.mxu0 0.0
        %1407 = vmatpush1.msra.mxu0 0.0
        %1408 = vmatprep.subr.mxu0 0.0
        %1409 = vmatpush1.msra.mxu0 0.0
        %1410 = vmatprep.subr.mxu0 0.0
        %1411 = vmatpush1.msra.mxu0 0.0
        %1412 = vmatprep.subr.mxu0 0.0
        %1413 = vmatpush1.msra.mxu0 0.0
        %1414 = vmatprep.subr.mxu0 0.0
        %1415 = vmatpush1.msra.mxu0 0.0
        %1416 = vmatprep.subr.mxu0 0.0
        %1417 = vmatpush1.msra.mxu0 0.0
        %1418 = vmatprep.subr.mxu0 0.0
        %1419 = vmatpush1.msra.mxu0 0.0
        %1420 = vmatprep.subr.mxu0 0.0
        %1421 = vmatpush1.msra.mxu0 0.0
        %1422 = vmatprep.subr.mxu0 0.0
        %1423 = vmatpush1.msra.mxu0 0.0
        %1424 = vmatprep.subr.mxu0 0.0
        %1425 = vmatpush1.msra.mxu0 0.0
        %1426 = vmatprep.subr.mxu0 0.0
        %1427 = vmatpush1.msra.mxu0 0.0
        %1428 = vmatprep.subr.mxu0 0.0
        %1429 = vmatpush1.msra.mxu0 0.0
        %1430 = vmatprep.subr.mxu0 0.0
        %1431 = vmatpush1.msra.mxu0 0.0
        %1432 = vmatprep.subr.mxu0 0.0
        %1433 = vmatpush1.msra.mxu0 0.0
        %1434 = vmatprep.subr.mxu0 0.0
        %1435 = vmatpush1.msra.mxu0 0.0
        %1436 = vmatprep.subr.mxu0 0.0
        %1437 = vmatpush1.msra.mxu0 0.0
        %1438 = vmatprep.mubr.f32.mxu0 0.0
        %1439 = vmatmul.mubr.f32.gmra.mrb[0].mxu0 %v1372
        %v1440 = vpop.f32.mrb[0].mxu0
        %v1441 = vadd.f32 %v1368, %v1440
        %v1442 = vpop.f32.mrb[0].mxu0
        %1443 = vdwg.mxu0
        %1444 = vst.msk [vmem:[%s411] sm:$0xff] %vm426, %v1441
        %s1445 = sand.u32 %s258, 1
        %s1446 = scalar_lea.sflag [#allocation4], %s1445
        %s1447 = sand.u32 %s258, 1
        %s1448 = smul.addr %s1447, 8
        %s1449 = scalar_lea.vmem [#allocation7], %s1448
        // Predicated region
        $region69: #{tpu_custom_call.1} parent=59 // pred_check
          %p1450 = pneg %p268
        $region70: #{tpu_custom_call.1} parent=59 // pred_check_branch
          %1452 = sbr.rel (%p1450) target = $region72
        $region71: #{tpu_custom_call.1} parent=59 // pred_region
          %s1454 = ssub.s32 128, 128
          %1455 = vsyncadd %s1446, %s1454
          %s1456 = smul.addr %s30, 128
          %s1457 = scalar_lea.hbm %s10, %s1456
          %s1459 = sshll.u32 %s1449, 4
          %s1460 = int_to_ptr.vmem [resolvable:$true] %s1459
          %1462 = dma.vmem_to_hbm [thread:$0]  %s1460, 128, %s1457, %s1446
        $region72: #{tpu_custom_call.1} parent=59 // pred_fallthru
          _
      $region60: #{tpu_custom_call.1} parent=5 // pred_fallthru
        _
      %p1463 = scmp.le.s32.totalorder 2, %s25
      // Predicated region
      $region73: #{tpu_custom_call.1} parent=5 // pred_check
        %p1464 = pneg %p1463
      $region74: #{tpu_custom_call.1} parent=5 // pred_check_branch
        %1466 = sbr.rel (%p1464) target = $region76
      $region75: #{tpu_custom_call.1} parent=5 // pred_region
        %s1467 = ssub.s32 %s25, 2
        // Predicated region
        $region77: #{tpu_custom_call.1} parent=75 // pred_check
          %p1468 = pneg %p274
        $region78: #{tpu_custom_call.1} parent=75 // pred_check_branch
          %1470 = sbr.rel (%p1468) target = $region80
        $region79: #{tpu_custom_call.1} parent=75 // pred_region
          %s1471 = sand.u32 %s259, 1
          %s1472 = scalar_lea.sflag [#allocation4], %s1471
          %s1473 = sand.u32 %s259, 1
          %s1474 = smul.addr %s1473, 8
          %s1475 = scalar_lea.vmem [#allocation7], %s1474
          %1476 = dma.done %s1472, 128
        $region80: #{tpu_custom_call.1} parent=75 // pred_fallthru
          _
      $region76: #{tpu_custom_call.1} parent=5 // pred_fallthru
        _
    $region6: #{tpu_custom_call.1} parent=1 // loop_footer
      %s29 = sadd.s32 1, %s25
    $region7: #{tpu_custom_call.1} parent=1 // loop_footer_branch
      %24 = sbr.rel target = $region3
    $region8: #{tpu_custom_call.1} parent=1 // loop_exit
      _
    %1477 = vsyncpa [#allocation3], 1
    %s1478 = scalar_lea.sflag [#allocation3], 1
    %1479 = vsyncpa %s1478, 1
    %1480 = vsyncpa [#allocation6], 1
    %s1481 = scalar_lea.sflag [#allocation6], 1
    %1482 = vsyncpa %s1481, 1
    %1483 = vsyncpa [#allocation4], 1
    %s1484 = scalar_lea.sflag [#allocation4], 1
    %1485 = vsyncpa %s1484, 1

// kernel: tpu_custom_call.1
$region0: #{tpu_custom_call.1}
  #allocation0 [shape = 'u32[]', space=smem, size = 0x4, offset = 0x4, fixed_abs, tag = 'smem constant byte address 0x4 - core index']
  #allocation1 [shape = 'u32[144,128]{1,0:T(1,128)}', space=vmem, size = 0x12000, scoped, tag = 'internal scratch']
  %s0 = inlined_call_operand.hbm [shape: f32[16,32], index: 0, kind: input, shape index: {}]
  %s1 = inlined_call_operand.hbm [shape: s8[2,8,8], index: 1, kind: input, shape index: {}]
  %s2 = inlined_call_operand.vmem [shape: f32[32,96], index: 2, kind: input, shape index: {}]
  %s3 = inlined_call_operand.vmem [shape: f32[1,96], index: 3, kind: input, shape index: {}]
  %s4 = inlined_call_operand.vmem [shape: f32[32,32], index: 4, kind: input, shape index: {}]
  %s5 = inlined_call_operand.vmem [shape: f32[1,32], index: 5, kind: input, shape index: {}]
  %s6 = inlined_call_operand.vmem [shape: f32[32,64], index: 6, kind: input, shape index: {}]
  %s7 = inlined_call_operand.vmem [shape: f32[1,64], index: 7, kind: input, shape index: {}]
  %s8 = inlined_call_operand.vmem [shape: f32[64,32], index: 8, kind: input, shape index: {}]
  %s9 = inlined_call_operand.vmem [shape: f32[1,32], index: 9, kind: input, shape index: {}]
  %s10 = inlined_call_operand.hbm [shape: f32[16,32], index: 10, kind: output, shape index: {}]
  %s11 = sld [smem:[#allocation0]]
  $region81: #{tpu_custom_call.1} parent=0
    _
  %s13 = ssub.s32 1, %s11
  %s14 = scalar_select 0, %s13, %s11
  $region1: #{tpu_custom_call.1} parent=0
    #allocation2 [shape = 'u8[8192]{0}', space=vmem, size = 0x2000, scoped, tag = 'input window, operand 0']
    #allocation3 [shape = 's32[2]{0}', space=sflag, size = 0x8, scoped, tag = 'scoped memory for tpu_custom_call.1']
    #allocation4 [shape = 's32[2]{0}', space=sflag, size = 0x8, scoped, tag = 'scoped memory for tpu_custom_call.1']
    #allocation5 [shape = 'u8[2048]{0}', space=vmem, size = 0x800, scoped, tag = 'input window, operand 1']
    #allocation6 [shape = 's32[2]{0}', space=sflag, size = 0x8, scoped, tag = 'scoped memory for tpu_custom_call.1']
    #allocation7 [shape = 'u8[8192]{0}', space=vmem, size = 0x2000, scoped, tag = 'output window, operand 0']
    %15 = vsyncpa [#allocation3], 0
    %s16 = scalar_lea.sflag [#allocation3], 1
    %17 = vsyncpa %s16, 0
    %18 = vsyncpa [#allocation6], 0
    %s19 = scalar_lea.sflag [#allocation6], 1
    %20 = vsyncpa %s19, 0
    %21 = vsyncpa [#allocation4], 0
    %s22 = scalar_lea.sflag [#allocation4], 1
    %23 = vsyncpa %s22, 0
    loop: start=0, step=1, limit=4
    $region2: #{tpu_custom_call.1} parent=1 // loop_pre_header
      _
    $region3: #{tpu_custom_call.1} parent=1 // loop_header
      %s25 = sphi 0, %s29
      %p26 = scmp.ge.s32.totalorder %s25, 4
      %s35 = sphi 0, %s37
      %s38 = sphi 0, %s35
      %s39 = sphi 0, %s38
      %s55 = sphi 0, %s39
      %s61 = sphi 0, %s63
      %s64 = sphi 0, %s61
      %s65 = sphi 0, %s64
      %s81 = sphi 0, %s65
      %s85 = sphi 0, %s85
      %s87 = sphi 0, %s85
      %s88 = sphi 0, %s87
      %s102 = sphi 0, %s88
      %s106 = sphi 0, %s106
      %s108 = sphi 0, %s106
      %s109 = sphi 0, %s108
      %s123 = sphi 0, %s109
      %s127 = sphi 0, %s127
      %s129 = sphi 0, %s127
      %s130 = sphi 0, %s129
      %s144 = sphi 0, %s130
      %s148 = sphi 0, %s148
      %s150 = sphi 0, %s148
      %s151 = sphi 0, %s150
      %s165 = sphi 0, %s151
      %s169 = sphi 0, %s169
      %s171 = sphi 0, %s169
      %s172 = sphi 0, %s171
      %s186 = sphi 0, %s172
      %s190 = sphi 0, %s190
      %s192 = sphi 0, %s190
      %s193 = sphi 0, %s192
      %s207 = sphi 0, %s193
      %s211 = sphi 0, %s211
      %s213 = sphi 0, %s211
      %s214 = sphi 0, %s213
      %s228 = sphi 0, %s214
      %s232 = sphi 0, %s232
      %s234 = sphi 0, %s232
      %s235 = sphi 0, %s234
      %s249 = sphi 0, %s235
      %s255 = sphi 0, %s257
      %s258 = sphi 0, %s255
      %s259 = sphi 0, %s258
      %s275 = sphi 0, %s259
    $region4: #{tpu_custom_call.1} parent=1 // loop_header_branch
      %28 = sbr.rel (%p26) target = $region8
    $region5: #{tpu_custom_call.1} parent=1 // loop_body
      %s30 = ssub.s32 %s25, 1
      %s31 = ssub.s32 %s25, 2
      %s32 = sadd.s32 %s25, 1
      %s33 = ssub.s32 %s25, %s32
      %p34 = scmp.eq.s32.totalorder %s33, 0
      %s36 = sadd.s32 %s35, 1
      %s37 = scalar_select %p34, %s35, %s36
      %p40 = pneg %p34
      %p41 = scmp.eq.s32.totalorder %s25, 1
      %p42 = por %p40, %p41
      %p43 = scmp.ne.s32.totalorder %s35, %s38
      %p44 = scmp.eq.s32.totalorder %s25, 0
      %p45 = por %p43, %p44
      %p46 = scmp.ne.s32.totalorder %s35, %s38
      %p47 = scmp.eq.s32.totalorder %s30, 1
      %p48 = por %p46, %p47
      %p49 = scmp.ne.s32.totalorder %s38, %s39
      %p50 = scmp.eq.s32.totalorder %s30, 0
      %p51 = por %p49, %p50
      %p52 = scmp.ne.s32.totalorder %s38, %s39
      %p53 = scmp.eq.s32.totalorder %s31, 1
      %p54 = por %p52, %p53
      %p56 = scmp.ne.s32.totalorder %s39, %s55
      %p57 = scmp.eq.s32.totalorder %s31, 0
      %p58 = por %p56, %p57
      %s59 = ssub.s32 %s25, %s32
      %p60 = scmp.eq.s32.totalorder %s59, 0
      %s62 = sadd.s32 %s61, 1
      %s63 = scalar_select %p60, %s61, %s62
      %p66 = pneg %p60
      %p67 = scmp.eq.s32.totalorder %s25, 1
      %p68 = por %p66, %p67
      %p69 = scmp.ne.s32.totalorder %s61, %s64
      %p70 = scmp.eq.s32.totalorder %s25, 0
      %p71 = por %p69, %p70
      %p72 = scmp.ne.s32.totalorder %s61, %s64
      %p73 = scmp.eq.s32.totalorder %s30, 1
      %p74 = por %p72, %p73
      %p75 = scmp.ne.s32.totalorder %s64, %s65
      %p76 = scmp.eq.s32.totalorder %s30, 0
      %p77 = por %p75, %p76
      %p78 = scmp.ne.s32.totalorder %s64, %s65
      %p79 = scmp.eq.s32.totalorder %s31, 1
      %p80 = por %p78, %p79
      %p82 = scmp.ne.s32.totalorder %s65, %s81
      %p83 = scmp.eq.s32.totalorder %s31, 0
      %p84 = por %p82, %p83
      %s86 = sadd.s32 %s85, 1
      %p89 = scmp.eq.s32.totalorder %s25, 1
      %p90 = scmp.ne.s32.totalorder %s85, %s87
      %p91 = scmp.eq.s32.totalorder %s25, 0
      %p92 = por %p90, %p91
      %p93 = scmp.ne.s32.totalorder %s85, %s87
      %p94 = scmp.eq.s32.totalorder %s30, 1
      %p95 = por %p93, %p94
      %p96 = scmp.ne.s32.totalorder %s87, %s88
      %p97 = scmp.eq.s32.totalorder %s30, 0
      %p98 = por %p96, %p97
      %p99 = scmp.ne.s32.totalorder %s87, %s88
      %p100 = scmp.eq.s32.totalorder %s31, 1
      %p101 = por %p99, %p100
      %p103 = scmp.ne.s32.totalorder %s88, %s102
      %p104 = scmp.eq.s32.totalorder %s31, 0
      %p105 = por %p103, %p104
      %s107 = sadd.s32 %s106, 1
      %p110 = scmp.eq.s32.totalorder %s25, 1
      %p111 = scmp.ne.s32.totalorder %s106, %s108
      %p112 = scmp.eq.s32.totalorder %s25, 0
      %p113 = por %p111, %p112
      %p114 = scmp.ne.s32.totalorder %s106, %s108
      %p115 = scmp.eq.s32.totalorder %s30, 1
      %p116 = por %p114, %p115
      %p117 = scmp.ne.s32.totalorder %s108, %s109
      %p118 = scmp.eq.s32.totalorder %s30, 0
      %p119 = por %p117, %p118
      %p120 = scmp.ne.s32.totalorder %s108, %s109
      %p121 = scmp.eq.s32.totalorder %s31, 1
      %p122 = por %p120, %p121
      %p124 = scmp.ne.s32.totalorder %s109, %s123
      %p125 = scmp.eq.s32.totalorder %s31, 0
      %p126 = por %p124, %p125
      %s128 = sadd.s32 %s127, 1
      %p131 = scmp.eq.s32.totalorder %s25, 1
      %p132 = scmp.ne.s32.totalorder %s127, %s129
      %p133 = scmp.eq.s32.totalorder %s25, 0
      %p134 = por %p132, %p133
      %p135 = scmp.ne.s32.totalorder %s127, %s129
      %p136 = scmp.eq.s32.totalorder %s30, 1
      %p137 = por %p135, %p136
      %p138 = scmp.ne.s32.totalorder %s129, %s130
      %p139 = scmp.eq.s32.totalorder %s30, 0
      %p140 = por %p138, %p139
      %p141 = scmp.ne.s32.totalorder %s129, %s130
      %p142 = scmp.eq.s32.totalorder %s31, 1
      %p143 = por %p141, %p142
      %p145 = scmp.ne.s32.totalorder %s130, %s144
      %p146 = scmp.eq.s32.totalorder %s31, 0
      %p147 = por %p145, %p146
      %s149 = sadd.s32 %s148, 1
      %p152 = scmp.eq.s32.totalorder %s25, 1
      %p153 = scmp.ne.s32.totalorder %s148, %s150
      %p154 = scmp.eq.s32.totalorder %s25, 0
      %p155 = por %p153, %p154
      %p156 = scmp.ne.s32.totalorder %s148, %s150
      %p157 = scmp.eq.s32.totalorder %s30, 1
      %p158 = por %p156, %p157
      %p159 = scmp.ne.s32.totalorder %s150, %s151
      %p160 = scmp.eq.s32.totalorder %s30, 0
      %p161 = por %p159, %p160
      %p162 = scmp.ne.s32.totalorder %s150, %s151
      %p163 = scmp.eq.s32.totalorder %s31, 1
      %p164 = por %p162, %p163
      %p166 = scmp.ne.s32.totalorder %s151, %s165
      %p167 = scmp.eq.s32.totalorder %s31, 0
      %p168 = por %p166, %p167
      %s170 = sadd.s32 %s169, 1
      %p173 = scmp.eq.s32.totalorder %s25, 1
      %p174 = scmp.ne.s32.totalorder %s169, %s171
      %p175 = scmp.eq.s32.totalorder %s25, 0
      %p176 = por %p174, %p175
      %p177 = scmp.ne.s32.totalorder %s169, %s171
      %p178 = scmp.eq.s32.totalorder %s30, 1
      %p179 = por %p177, %p178
      %p180 = scmp.ne.s32.totalorder %s171, %s172
      %p181 = scmp.eq.s32.totalorder %s30, 0
      %p182 = por %p180, %p181
      %p183 = scmp.ne.s32.totalorder %s171, %s172
      %p184 = scmp.eq.s32.totalorder %s31, 1
      %p185 = por %p183, %p184
      %p187 = scmp.ne.s32.totalorder %s172, %s186
      %p188 = scmp.eq.s32.totalorder %s31, 0
      %p189 = por %p187, %p188
      %s191 = sadd.s32 %s190, 1
      %p194 = scmp.eq.s32.totalorder %s25, 1
      %p195 = scmp.ne.s32.totalorder %s190, %s192
      %p196 = scmp.eq.s32.totalorder %s25, 0
      %p197 = por %p195, %p196
      %p198 = scmp.ne.s32.totalorder %s190, %s192
      %p199 = scmp.eq.s32.totalorder %s30, 1
      %p200 = por %p198, %p199
      %p201 = scmp.ne.s32.totalorder %s192, %s193
      %p202 = scmp.eq.s32.totalorder %s30, 0
      %p203 = por %p201, %p202
      %p204 = scmp.ne.s32.totalorder %s192, %s193
      %p205 = scmp.eq.s32.totalorder %s31, 1
      %p206 = por %p204, %p205
      %p208 = scmp.ne.s32.totalorder %s193, %s207
      %p209 = scmp.eq.s32.totalorder %s31, 0
      %p210 = por %p208, %p209
      %s212 = sadd.s32 %s211, 1
      %p215 = scmp.eq.s32.totalorder %s25, 1
      %p216 = scmp.ne.s32.totalorder %s211, %s213
      %p217 = scmp.eq.s32.totalorder %s25, 0
      %p218 = por %p216, %p217
      %p219 = scmp.ne.s32.totalorder %s211, %s213
      %p220 = scmp.eq.s32.totalorder %s30, 1
      %p221 = por %p219, %p220
      %p222 = scmp.ne.s32.totalorder %s213, %s214
      %p223 = scmp.eq.s32.totalorder %s30, 0
      %p224 = por %p222, %p223
      %p225 = scmp.ne.s32.totalorder %s213, %s214
      %p226 = scmp.eq.s32.totalorder %s31, 1
      %p227 = por %p225, %p226
      %p229 = scmp.ne.s32.totalorder %s214, %s228
      %p230 = scmp.eq.s32.totalorder %s31, 0
      %p231 = por %p229, %p230
      %s233 = sadd.s32 %s232, 1
      %p236 = scmp.eq.s32.totalorder %s25, 1
      %p237 = scmp.ne.s32.totalorder %s232, %s234
      %p238 = scmp.eq.s32.totalorder %s25, 0
      %p239 = por %p237, %p238
      %p240 = scmp.ne.s32.totalorder %s232, %s234
      %p241 = scmp.eq.s32.totalorder %s30, 1
      %p242 = por %p240, %p241
      %p243 = scmp.ne.s32.totalorder %s234, %s235
      %p244 = scmp.eq.s32.totalorder %s30, 0
      %p245 = por %p243, %p244
      %p246 = scmp.ne.s32.totalorder %s234, %s235
      %p247 = scmp.eq.s32.totalorder %s31, 1
      %p248 = por %p246, %p247
      %p250 = scmp.ne.s32.totalorder %s235, %s249
      %p251 = scmp.eq.s32.totalorder %s31, 0
      %p252 = por %p250, %p251
      %s253 = ssub.s32 %s25, %s32
      %p254 = scmp.eq.s32.totalorder %s253, 0
      %s256 = sadd.s32 %s255, 1
      %s257 = scalar_select %p254, %s255, %s256
      %p260 = pneg %p254
      %p261 = scmp.eq.s32.totalorder %s25, 1
      %p262 = por %p260, %p261
      %p263 = scmp.ne.s32.totalorder %s255, %s258
      %p264 = scmp.eq.s32.totalorder %s25, 0
      %p265 = por %p263, %p264
      %p266 = scmp.ne.s32.totalorder %s255, %s258
      %p267 = scmp.eq.s32.totalorder %s30, 1
      %p268 = por %p266, %p267
      %p269 = scmp.ne.s32.totalorder %s258, %s259
      %p270 = scmp.eq.s32.totalorder %s30, 0
      %p271 = por %p269, %p270
      %p272 = scmp.ne.s32.totalorder %s258, %s259
      %p273 = scmp.eq.s32.totalorder %s31, 1
      %p274 = por %p272, %p273
      %p276 = scmp.ne.s32.totalorder %s259, %s275
      %p277 = scmp.eq.s32.totalorder %s31, 0
      %p278 = por %p276, %p277
      %p279 = scmp.le.s32.totalorder 1, %s25
      %p280 = scmp.lt.s32.totalorder %s25, 3
      %p281 = pnand %p279, %p280
      %p282 = pneg %p281
      // Predicated region
      $region9: #{tpu_custom_call.1} parent=5 // pred_check
        _
      $region10: #{tpu_custom_call.1} parent=5 // pred_check_branch
        %284 = sbr.rel (%p281) target = $region12
      $region11: #{tpu_custom_call.1} parent=5 // pred_region
        %s285 = ssub.s32 %s25, 1
        // Predicated region
        $region13: #{tpu_custom_call.1} parent=11 // pred_check
          %p286 = pneg %p98
        $region14: #{tpu_custom_call.1} parent=11 // pred_check_branch
          %288 = sbr.rel (%p286) target = $region16
        $region15: #{tpu_custom_call.1} parent=11 // pred_region
          _
        $region16: #{tpu_custom_call.1} parent=11 // pred_fallthru
          _
        // Predicated region
        $region17: #{tpu_custom_call.1} parent=11 // pred_check
          %p289 = pneg %p119
        $region18: #{tpu_custom_call.1} parent=11 // pred_check_branch
          %291 = sbr.rel (%p289) target = $region20
        $region19: #{tpu_custom_call.1} parent=11 // pred_region
          _
        $region20: #{tpu_custom_call.1} parent=11 // pred_fallthru
          _
        // Predicated region
        $region21: #{tpu_custom_call.1} parent=11 // pred_check
          %p292 = pneg %p140
        $region22: #{tpu_custom_call.1} parent=11 // pred_check_branch
          %294 = sbr.rel (%p292) target = $region24
        $region23: #{tpu_custom_call.1} parent=11 // pred_region
          _
        $region24: #{tpu_custom_call.1} parent=11 // pred_fallthru
          _
        // Predicated region
        $region25: #{tpu_custom_call.1} parent=11 // pred_check
          %p295 = pneg %p161
        $region26: #{tpu_custom_call.1} parent=11 // pred_check_branch
          %297 = sbr.rel (%p295) target = $region28
        $region27: #{tpu_custom_call.1} parent=11 // pred_region
          _
        $region28: #{tpu_custom_call.1} parent=11 // pred_fallthru
          _
        // Predicated region
        $region29: #{tpu_custom_call.1} parent=11 // pred_check
          %p298 = pneg %p182
        $region30: #{tpu_custom_call.1} parent=11 // pred_check_branch
          %300 = sbr.rel (%p298) target = $region32
        $region31: #{tpu_custom_call.1} parent=11 // pred_region
          _
        $region32: #{tpu_custom_call.1} parent=11 // pred_fallthru
          _
        // Predicated region
        $region33: #{tpu_custom_call.1} parent=11 // pred_check
          %p301 = pneg %p203
        $region34: #{tpu_custom_call.1} parent=11 // pred_check_branch
          %303 = sbr.rel (%p301) target = $region36
        $region35: #{tpu_custom_call.1} parent=11 // pred_region
          _
        $region36: #{tpu_custom_call.1} parent=11 // pred_fallthru
          _
        // Predicated region
        $region37: #{tpu_custom_call.1} parent=11 // pred_check
          %p304 = pneg %p224
        $region38: #{tpu_custom_call.1} parent=11 // pred_check_branch
          %306 = sbr.rel (%p304) target = $region40
        $region39: #{tpu_custom_call.1} parent=11 // pred_region
          _
        $region40: #{tpu_custom_call.1} parent=11 // pred_fallthru
          _
        // Predicated region
        $region41: #{tpu_custom_call.1} parent=11 // pred_check
          %p307 = pneg %p245
        $region42: #{tpu_custom_call.1} parent=11 // pred_check_branch
          %309 = sbr.rel (%p307) target = $region44
        $region43: #{tpu_custom_call.1} parent=11 // pred_region
          _
        $region44: #{tpu_custom_call.1} parent=11 // pred_fallthru
          _
      $region12: #{tpu_custom_call.1} parent=5 // pred_fallthru
        _
      %p310 = scmp.lt.s32.totalorder %s25, 2
      // Predicated region
      $region45: #{tpu_custom_call.1} parent=5 // pred_check
        %p311 = pneg %p310
      $region46: #{tpu_custom_call.1} parent=5 // pred_check_branch
        %313 = sbr.rel (%p311) target = $region48
      $region47: #{tpu_custom_call.1} parent=5 // pred_region
        // Predicated region
        $region49: #{tpu_custom_call.1} parent=47 // pred_check
          %p314 = pneg %p45
        $region50: #{tpu_custom_call.1} parent=47 // pred_check_branch
          %316 = sbr.rel (%p314) target = $region52
        $region51: #{tpu_custom_call.1} parent=47 // pred_region
          %s317 = sand.u32 %s35, 1
          %s318 = scalar_lea.sflag [#allocation3], %s317
          %s319 = sand.u32 %s35, 1
          %s320 = smul.addr %s319, 8
          %s321 = scalar_lea.vmem [#allocation2], %s320
          %s323 = ssub.s32 128, 128
          %324 = vsyncadd %s318, %s323
          %s325 = smul.addr %s25, 128
          %s326 = scalar_lea.hbm %s0, %s325
          %s328 = sshll.u32 %s321, 4
          %s329 = int_to_ptr.vmem [resolvable:$true] %s328
          %331 = dma.hbm_to_vmem [thread:$0]  %s326, 128, %s329, %s318
        $region52: #{tpu_custom_call.1} parent=47 // pred_fallthru
          _
        // Predicated region
        $region53: #{tpu_custom_call.1} parent=47 // pred_check
          %p332 = pneg %p71
        $region54: #{tpu_custom_call.1} parent=47 // pred_check_branch
          %334 = sbr.rel (%p332) target = $region56
        $region55: #{tpu_custom_call.1} parent=47 // pred_region
          %s335 = sand.u32 %s61, 1
          %s336 = scalar_lea.sflag [#allocation6], %s335
          %s337 = sand.u32 %s61, 1
          %s338 = smul.addr %s337, 2
          %s339 = scalar_lea.vmem [#allocation5], %s338
          %s341 = ssub.s32 32, 32
          %342 = vsyncadd %s336, %s341
          %s343 = smul.addr %s25, 32
          %s344 = scalar_lea.hbm %s1, %s343
          %s346 = sshll.u32 %s339, 4
          %s347 = int_to_ptr.vmem [resolvable:$true] %s346
          %349 = dma.hbm_to_vmem [thread:$0]  %s344, 32, %s347, %s336
        $region56: #{tpu_custom_call.1} parent=47 // pred_fallthru
          _
      $region48: #{tpu_custom_call.1} parent=5 // pred_fallthru
        _
      %p350 = scmp.le.s32.totalorder 1, %s25
      %p351 = scmp.lt.s32.totalorder %s25, 3
      %p352 = pnand %p350, %p351
      %p353 = pneg %p352
      // Predicated region
      $region57: #{tpu_custom_call.1} parent=5 // pred_check
        _
      $region58: #{tpu_custom_call.1} parent=5 // pred_check_branch
        %355 = sbr.rel (%p352) target = $region60
      $region59: #{tpu_custom_call.1} parent=5 // pred_region
        %s356 = ssub.s32 %s25, 1
        %s357 = sand.u32 %s38, 1
        %s358 = scalar_lea.sflag [#allocation3], %s357
        %s359 = sand.u32 %s38, 1
        %s360 = smul.addr %s359, 8
        %s361 = scalar_lea.vmem [#allocation2], %s360
        // Predicated region
        $region61: #{tpu_custom_call.1} parent=59 // pred_check
          %p362 = pneg %p51
        $region62: #{tpu_custom_call.1} parent=59 // pred_check_branch
          %364 = sbr.rel (%p362) target = $region64
        $region63: #{tpu_custom_call.1} parent=59 // pred_region
          %365 = dma.done %s358, 128
        $region64: #{tpu_custom_call.1} parent=59 // pred_fallthru
          _
        %s366 = sand.u32 %s64, 1
        %s367 = scalar_lea.sflag [#allocation6], %s366
        %s368 = sand.u32 %s64, 1
        %s369 = smul.addr %s368, 2
        %s370 = scalar_lea.vmem [#allocation5], %s369
        // Predicated region
        $region65: #{tpu_custom_call.1} parent=59 // pred_check
          %p371 = pneg %p77
        $region66: #{tpu_custom_call.1} parent=59 // pred_check_branch
          %373 = sbr.rel (%p371) target = $region68
        $region67: #{tpu_custom_call.1} parent=59 // pred_region
          %374 = dma.done %s367, 32
        $region68: #{tpu_custom_call.1} parent=59 // pred_fallthru
          _
        %s375 = sand.u32 %s38, 1
        %s376 = scalar_lea.sflag [#allocation3], %s375
        %s377 = sand.u32 %s38, 1
        %s378 = smul.addr %s377, 8
        %s379 = scalar_lea.vmem [#allocation2], %s378
        %p380 = pneg %p51
        %p381 = pneg %p48
        %s382 = sand.u32 %s64, 1
        %s383 = scalar_lea.sflag [#allocation6], %s382
        %s384 = sand.u32 %s64, 1
        %s385 = smul.addr %s384, 2
        %s386 = scalar_lea.vmem [#allocation5], %s385
        %p387 = pneg %p77
        %p388 = pneg %p74
        %p389 = pneg %p98
        %p390 = pneg %p95
        %p391 = pneg %p119
        %p392 = pneg %p116
        %p393 = pneg %p140
        %p394 = pneg %p137
        %p395 = pneg %p161
        %p396 = pneg %p158
        %p397 = pneg %p182
        %p398 = pneg %p179
        %p399 = pneg %p203
        %p400 = pneg %p200
        %p401 = pneg %p224
        %p402 = pneg %p221
        %p403 = pneg %p245
        %p404 = pneg %p242
        %p405 = pneg %p271
        %p406 = pneg %p268
        %s407 = sand.u32 %s258, 1
        %s408 = scalar_lea.sflag [#allocation4], %s407
        %s409 = sand.u32 %s258, 1
        %s410 = smul.addr %s409, 8
        %s411 = scalar_lea.vmem [#allocation7], %s410
        %v414 = vld [vmem:[%s361] sm:$0xff]
        %v415 = vld [vmem:[%s2] sm:$0xff]
        %v416 = vld [vmem:[%s2 + $0x8] sm:$0xff]
        %v417 = vld [vmem:[%s2 + $0x10] sm:$0xff]
        %v418 = vld [vmem:[%s2 + $0x18] sm:$0xff]
        %v419 = vld [vmem:[%s3] sm:$0x1]
        %v421 = vlaneseq
        %v422 = vshrl.u32 %v421, 7
        %v423 = vsub.s32 0, %v422
        %v424 = vrot.slane %v419, %v423
        %vm426 = vcmask 261120
        %v428 = vsel %vm426, %v414, 0
        %430 = vmatprep.subr.mxu0 0.0
        %431 = vmatpush1.msra.mxu0 %v415
        %432 = vmatprep.subr.mxu0 0.0
        %433 = vmatpush1.msra.mxu0 %v416
        %434 = vmatprep.subr.mxu0 0.0
        %435 = vmatpush1.msra.mxu0 %v417
        %436 = vmatprep.subr.mxu0 0.0
        %437 = vmatpush1.msra.mxu0 %v418
        %438 = vmatprep.subr.mxu0 0.0
        %439 = vmatpush1.msra.mxu0 0.0
        %440 = vmatprep.subr.mxu0 0.0
        %441 = vmatpush1.msra.mxu0 0.0
        %442 = vmatprep.subr.mxu0 0.0
        %443 = vmatpush1.msra.mxu0 0.0
        %444 = vmatprep.subr.mxu0 0.0
        %445 = vmatpush1.msra.mxu0 0.0
        %446 = vmatprep.subr.mxu0 0.0
        %447 = vmatpush1.msra.mxu0 0.0
        %448 = vmatprep.subr.mxu0 0.0
        %449 = vmatpush1.msra.mxu0 0.0
        %450 = vmatprep.subr.mxu0 0.0
        %451 = vmatpush1.msra.mxu0 0.0
        %452 = vmatprep.subr.mxu0 0.0
        %453 = vmatpush1.msra.mxu0 0.0
        %454 = vmatprep.subr.mxu0 0.0
        %455 = vmatpush1.msra.mxu0 0.0
        %456 = vmatprep.subr.mxu0 0.0
        %457 = vmatpush1.msra.mxu0 0.0
        %458 = vmatprep.subr.mxu0 0.0
        %459 = vmatpush1.msra.mxu0 0.0
        %460 = vmatprep.subr.mxu0 0.0
        %461 = vmatpush1.msra.mxu0 0.0
        %462 = vmatprep.subr.mxu0 0.0
        %463 = vmatpush1.msra.mxu0 0.0
        %464 = vmatprep.subr.mxu0 0.0
        %465 = vmatpush1.msra.mxu0 0.0
        %466 = vmatprep.subr.mxu0 0.0
        %467 = vmatpush1.msra.mxu0 0.0
        %468 = vmatprep.subr.mxu0 0.0
        %469 = vmatpush1.msra.mxu0 0.0
        %470 = vmatprep.subr.mxu0 0.0
        %471 = vmatpush1.msra.mxu0 0.0
        %472 = vmatprep.subr.mxu0 0.0
        %473 = vmatpush1.msra.mxu0 0.0
        %474 = vmatprep.subr.mxu0 0.0
        %475 = vmatpush1.msra.mxu0 0.0
        %476 = vmatprep.subr.mxu0 0.0
        %477 = vmatpush1.msra.mxu0 0.0
        %478 = vmatprep.subr.mxu0 0.0
        %479 = vmatpush1.msra.mxu0 0.0
        %480 = vmatprep.subr.mxu0 0.0
        %481 = vmatpush1.msra.mxu0 0.0
        %482 = vmatprep.subr.mxu0 0.0
        %483 = vmatpush1.msra.mxu0 0.0
        %484 = vmatprep.subr.mxu0 0.0
        %485 = vmatpush1.msra.mxu0 0.0
        %486 = vmatprep.subr.mxu0 0.0
        %487 = vmatpush1.msra.mxu0 0.0
        %488 = vmatprep.subr.mxu0 0.0
        %489 = vmatpush1.msra.mxu0 0.0
        %490 = vmatprep.subr.mxu0 0.0
        %491 = vmatpush1.msra.mxu0 0.0
        %492 = vmatprep.subr.mxu0 0.0
        %493 = vmatpush1.msra.mxu0 0.0
        %494 = vmatprep.mubr.f32.mxu0 0.0
        %495 = vmatmul.mubr.f32.gmra.mrb[0].mxu0 %v428
        %v496 = vpop.f32.mrb[0].mxu0
        %v497 = vadd.f32 %v424, %v496
        %v498 = vpop.f32.mrb[0].mxu0
        %499 = vdwg.mxu0
        %v500 = vld [vmem:[%s370] sm:$0x3]
        %vm501 = vnez %v500
        %503 = vrot.lane.b32.xlu0 %v497, 96
        %v504 = vpop.permute.xlu0 %503
        %vm505 = vcmask 64512
        %v506 = vsel %vm505, %v497, 0
        %v508 = vsel %vm505, %v504, 0
        %510 = vmatprep.subr.mxu0 0.0
        %511 = vmatpush1.xpose.msra.mxu0 %v508
        %512 = vmatprep.subr.mxu0 0.0
        %513 = vmatpush1.xpose.msra.mxu0 0.0
        %514 = vmatprep.subr.mxu0 0.0
        %515 = vmatpush1.xpose.msra.mxu0 0.0
        %516 = vmatprep.subr.mxu0 0.0
        %517 = vmatpush1.xpose.msra.mxu0 0.0
        %518 = vmatprep.subr.mxu0 0.0
        %519 = vmatpush1.xpose.msra.mxu0 0.0
        %520 = vmatprep.subr.mxu0 0.0
        %521 = vmatpush1.xpose.msra.mxu0 0.0
        %522 = vmatprep.subr.mxu0 0.0
        %523 = vmatpush1.xpose.msra.mxu0 0.0
        %524 = vmatprep.subr.mxu0 0.0
        %525 = vmatpush1.xpose.msra.mxu0 0.0
        %526 = vmatprep.subr.mxu0 0.0
        %527 = vmatpush1.xpose.msra.mxu0 0.0
        %528 = vmatprep.subr.mxu0 0.0
        %529 = vmatpush1.xpose.msra.mxu0 0.0
        %530 = vmatprep.subr.mxu0 0.0
        %531 = vmatpush1.xpose.msra.mxu0 0.0
        %532 = vmatprep.subr.mxu0 0.0
        %533 = vmatpush1.xpose.msra.mxu0 0.0
        %534 = vmatprep.subr.mxu0 0.0
        %535 = vmatpush1.xpose.msra.mxu0 0.0
        %536 = vmatprep.subr.mxu0 0.0
        %537 = vmatpush1.xpose.msra.mxu0 0.0
        %538 = vmatprep.subr.mxu0 0.0
        %539 = vmatpush1.xpose.msra.mxu0 0.0
        %540 = vmatprep.subr.mxu0 0.0
        %541 = vmatpush1.xpose.msra.mxu0 0.0
        %542 = vmatprep.subr.mxu0 0.0
        %543 = vmatpush1.xpose.msra.mxu0 0.0
        %544 = vmatprep.subr.mxu0 0.0
        %545 = vmatpush1.xpose.msra.mxu0 0.0
        %546 = vmatprep.subr.mxu0 0.0
        %547 = vmatpush1.xpose.msra.mxu0 0.0
        %548 = vmatprep.subr.mxu0 0.0
        %549 = vmatpush1.xpose.msra.mxu0 0.0
        %550 = vmatprep.subr.mxu0 0.0
        %551 = vmatpush1.xpose.msra.mxu0 0.0
        %552 = vmatprep.subr.mxu0 0.0
        %553 = vmatpush1.xpose.msra.mxu0 0.0
        %554 = vmatprep.subr.mxu0 0.0
        %555 = vmatpush1.xpose.msra.mxu0 0.0
        %556 = vmatprep.subr.mxu0 0.0
        %557 = vmatpush1.xpose.msra.mxu0 0.0
        %558 = vmatprep.subr.mxu0 0.0
        %559 = vmatpush1.xpose.msra.mxu0 0.0
        %560 = vmatprep.subr.mxu0 0.0
        %561 = vmatpush1.xpose.msra.mxu0 0.0
        %562 = vmatprep.subr.mxu0 0.0
        %563 = vmatpush1.xpose.msra.mxu0 0.0
        %564 = vmatprep.subr.mxu0 0.0
        %565 = vmatpush1.xpose.msra.mxu0 0.0
        %566 = vmatprep.subr.mxu0 0.0
        %567 = vmatpush1.xpose.msra.mxu0 0.0
        %568 = vmatprep.subr.mxu0 0.0
        %569 = vmatpush1.xpose.msra.mxu0 0.0
        %570 = vmatprep.subr.mxu0 0.0
        %571 = vmatpush1.xpose.msra.mxu0 0.0
        %572 = vmatprep.subr.mxu0 0.0
        %573 = vmatpush1.xpose.msra.mxu0 0.0
        %574 = vmatprep.mubr.f32.mxu0 0.0
        %575 = vmatmul.mubr.f32.gmra.mrb[0].mxu0 %v506
        %v576 = vpop.f32.mrb[0].mxu0
        %v577 = vadd.f32 0.0, %v576
        %v578 = vpop.f32.mrb[0].mxu0
        %579 = vdwg.mxu0
        %v580 = vsel %vm501, 16843009, 0
        %v581 = vunpack.c.0.s8 %v580
        %vm582 = vcmp.ne.s32.totalorder %v581, 0
        %v583 = vsel %vm582, -1e+09, %v577
        %v584 = vsel %vm505, %v583, -inf
        %585 = vmax.xlane.f32.xlu0 %v584
        %v586 = vpop.xlane.xlu0 %585
        %v587 = vsub.f32 %v583, %v586
        %v588 = vmul.f32 %v587, 1.442695
        %v589 = vpow.pop %v588
        %v590 = vsel %vm505, %v589, 0.0
        %591 = vadd.xlane.f32.xlu0 %v590
        %v592 = vpop.xlane.xlu0 %591
        %v593 = vrcp.pop %v592
        %v594 = vmul.f32 %v589, %v593
        %595 = vrot.lane.b32.xlu0 %v497, 64
        %v596 = vpop.permute.xlu0 %595
        %v599 = vsel %vm505, %v594, 0
        %601 = vmatprep.subr.mxu0 0.0
        %602 = vmatpush1.msra.mxu0 %v596
        %603 = vmatprep.subr.mxu0 0.0
        %604 = vmatpush1.msra.mxu0 0.0
        %605 = vmatprep.subr.mxu0 0.0
        %606 = vmatpush1.msra.mxu0 0.0
        %607 = vmatprep.subr.mxu0 0.0
        %608 = vmatpush1.msra.mxu0 0.0
        %609 = vmatprep.subr.mxu0 0.0
        %610 = vmatpush1.msra.mxu0 0.0
        %611 = vmatprep.subr.mxu0 0.0
        %612 = vmatpush1.msra.mxu0 0.0
        %613 = vmatprep.subr.mxu0 0.0
        %614 = vmatpush1.msra.mxu0 0.0
        %615 = vmatprep.subr.mxu0 0.0
        %616 = vmatpush1.msra.mxu0 0.0
        %617 = vmatprep.subr.mxu0 0.0
        %618 = vmatpush1.msra.mxu0 0.0
        %619 = vmatprep.subr.mxu0 0.0
        %620 = vmatpush1.msra.mxu0 0.0
        %621 = vmatprep.subr.mxu0 0.0
        %622 = vmatpush1.msra.mxu0 0.0
        %623 = vmatprep.subr.mxu0 0.0
        %624 = vmatpush1.msra.mxu0 0.0
        %625 = vmatprep.subr.mxu0 0.0
        %626 = vmatpush1.msra.mxu0 0.0
        %627 = vmatprep.subr.mxu0 0.0
        %628 = vmatpush1.msra.mxu0 0.0
        %629 = vmatprep.subr.mxu0 0.0
        %630 = vmatpush1.msra.mxu0 0.0
        %631 = vmatprep.subr.mxu0 0.0
        %632 = vmatpush1.msra.mxu0 0.0
        %633 = vmatprep.subr.mxu0 0.0
        %634 = vmatpush1.msra.mxu0 0.0
        %635 = vmatprep.subr.mxu0 0.0
        %636 = vmatpush1.msra.mxu0 0.0
        %637 = vmatprep.subr.mxu0 0.0
        %638 = vmatpush1.msra.mxu0 0.0
        %639 = vmatprep.subr.mxu0 0.0
        %640 = vmatpush1.msra.mxu0 0.0
        %641 = vmatprep.subr.mxu0 0.0
        %642 = vmatpush1.msra.mxu0 0.0
        %643 = vmatprep.subr.mxu0 0.0
        %644 = vmatpush1.msra.mxu0 0.0
        %645 = vmatprep.subr.mxu0 0.0
        %646 = vmatpush1.msra.mxu0 0.0
        %647 = vmatprep.subr.mxu0 0.0
        %648 = vmatpush1.msra.mxu0 0.0
        %649 = vmatprep.subr.mxu0 0.0
        %650 = vmatpush1.msra.mxu0 0.0
        %651 = vmatprep.subr.mxu0 0.0
        %652 = vmatpush1.msra.mxu0 0.0
        %653 = vmatprep.subr.mxu0 0.0
        %654 = vmatpush1.msra.mxu0 0.0
        %655 = vmatprep.subr.mxu0 0.0
        %656 = vmatpush1.msra.mxu0 0.0
        %657 = vmatprep.subr.mxu0 0.0
        %658 = vmatpush1.msra.mxu0 0.0
        %659 = vmatprep.subr.mxu0 0.0
        %660 = vmatpush1.msra.mxu0 0.0
        %661 = vmatprep.subr.mxu0 0.0
        %662 = vmatpush1.msra.mxu0 0.0
        %663 = vmatprep.subr.mxu0 0.0
        %664 = vmatpush1.msra.mxu0 0.0
        %665 = vmatprep.mubr.f32.mxu0 0.0
        %666 = vmatmul.mubr.f32.gmra.mrb[0].mxu0 %v599
        %v667 = vpop.f32.mrb[0].mxu0
        %v668 = vadd.f32 0.0, %v667
        %v669 = vpop.f32.mrb[0].mxu0
        %670 = vdwg.mxu0
        %671 = vrot.lane.b32.xlu0 %v497, 120
        %v672 = vpop.permute.xlu0 %671
        %673 = vrot.lane.b32.xlu0 %v497, 88
        %v674 = vpop.permute.xlu0 %673
        %v675 = vsel %vm505, %v672, 0
        %v677 = vsel %vm505, %v674, 0
        %679 = vmatprep.subr.mxu0 0.0
        %680 = vmatpush1.xpose.msra.mxu0 %v677
        %681 = vmatprep.subr.mxu0 0.0
        %682 = vmatpush1.xpose.msra.mxu0 0.0
        %683 = vmatprep.subr.mxu0 0.0
        %684 = vmatpush1.xpose.msra.mxu0 0.0
        %685 = vmatprep.subr.mxu0 0.0
        %686 = vmatpush1.xpose.msra.mxu0 0.0
        %687 = vmatprep.subr.mxu0 0.0
        %688 = vmatpush1.xpose.msra.mxu0 0.0
        %689 = vmatprep.subr.mxu0 0.0
        %690 = vmatpush1.xpose.msra.mxu0 0.0
        %691 = vmatprep.subr.mxu0 0.0
        %692 = vmatpush1.xpose.msra.mxu0 0.0
        %693 = vmatprep.subr.mxu0 0.0
        %694 = vmatpush1.xpose.msra.mxu0 0.0
        %695 = vmatprep.subr.mxu0 0.0
        %696 = vmatpush1.xpose.msra.mxu0 0.0
        %697 = vmatprep.subr.mxu0 0.0
        %698 = vmatpush1.xpose.msra.mxu0 0.0
        %699 = vmatprep.subr.mxu0 0.0
        %700 = vmatpush1.xpose.msra.mxu0 0.0
        %701 = vmatprep.subr.mxu0 0.0
        %702 = vmatpush1.xpose.msra.mxu0 0.0
        %703 = vmatprep.subr.mxu0 0.0
        %704 = vmatpush1.xpose.msra.mxu0 0.0
        %705 = vmatprep.subr.mxu0 0.0
        %706 = vmatpush1.xpose.msra.mxu0 0.0
        %707 = vmatprep.subr.mxu0 0.0
        %708 = vmatpush1.xpose.msra.mxu0 0.0
        %709 = vmatprep.subr.mxu0 0.0
        %710 = vmatpush1.xpose.msra.mxu0 0.0
        %711 = vmatprep.subr.mxu0 0.0
        %712 = vmatpush1.xpose.msra.mxu0 0.0
        %713 = vmatprep.subr.mxu0 0.0
        %714 = vmatpush1.xpose.msra.mxu0 0.0
        %715 = vmatprep.subr.mxu0 0.0
        %716 = vmatpush1.xpose.msra.mxu0 0.0
        %717 = vmatprep.subr.mxu0 0.0
        %718 = vmatpush1.xpose.msra.mxu0 0.0
        %719 = vmatprep.subr.mxu0 0.0
        %720 = vmatpush1.xpose.msra.mxu0 0.0
        %721 = vmatprep.subr.mxu0 0.0
        %722 = vmatpush1.xpose.msra.mxu0 0.0
        %723 = vmatprep.subr.mxu0 0.0
        %724 = vmatpush1.xpose.msra.mxu0 0.0
        %725 = vmatprep.subr.mxu0 0.0
        %726 = vmatpush1.xpose.msra.mxu0 0.0
        %727 = vmatprep.subr.mxu0 0.0
        %728 = vmatpush1.xpose.msra.mxu0 0.0
        %729 = vmatprep.subr.mxu0 0.0
        %730 = vmatpush1.xpose.msra.mxu0 0.0
        %731 = vmatprep.subr.mxu0 0.0
        %732 = vmatpush1.xpose.msra.mxu0 0.0
        %733 = vmatprep.subr.mxu0 0.0
        %734 = vmatpush1.xpose.msra.mxu0 0.0
        %735 = vmatprep.subr.mxu0 0.0
        %736 = vmatpush1.xpose.msra.mxu0 0.0
        %737 = vmatprep.subr.mxu0 0.0
        %738 = vmatpush1.xpose.msra.mxu0 0.0
        %739 = vmatprep.subr.mxu0 0.0
        %740 = vmatpush1.xpose.msra.mxu0 0.0
        %741 = vmatprep.subr.mxu0 0.0
        %742 = vmatpush1.xpose.msra.mxu0 0.0
        %743 = vmatprep.mubr.f32.mxu0 0.0
        %744 = vmatmul.mubr.f32.gmra.mrb[0].mxu0 %v675
        %v745 = vpop.f32.mrb[0].mxu0
        %v746 = vadd.f32 0.0, %v745
        %v747 = vpop.f32.mrb[0].mxu0
        %748 = vdwg.mxu0
        %v749 = vsel %vm582, -1e+09, %v746
        %v750 = vsel %vm505, %v749, -inf
        %751 = vmax.xlane.f32.xlu0 %v750
        %v752 = vpop.xlane.xlu0 %751
        %v753 = vsub.f32 %v749, %v752
        %v754 = vmul.f32 %v753, 1.442695
        %v755 = vpow.pop %v754
        %v756 = vsel %vm505, %v755, 0.0
        %757 = vadd.xlane.f32.xlu0 %v756
        %v758 = vpop.xlane.xlu0 %757
        %v759 = vrcp.pop %v758
        %v760 = vmul.f32 %v755, %v759
        %761 = vrot.lane.b32.xlu0 %v497, 56
        %v762 = vpop.permute.xlu0 %761
        %v765 = vsel %vm505, %v760, 0
        %767 = vmatprep.subr.mxu0 0.0
        %768 = vmatpush1.msra.mxu0 %v762
        %769 = vmatprep.subr.mxu0 0.0
        %770 = vmatpush1.msra.mxu0 0.0
        %771 = vmatprep.subr.mxu0 0.0
        %772 = vmatpush1.msra.mxu0 0.0
        %773 = vmatprep.subr.mxu0 0.0
        %774 = vmatpush1.msra.mxu0 0.0
        %775 = vmatprep.subr.mxu0 0.0
        %776 = vmatpush1.msra.mxu0 0.0
        %777 = vmatprep.subr.mxu0 0.0
        %778 = vmatpush1.msra.mxu0 0.0
        %779 = vmatprep.subr.mxu0 0.0
        %780 = vmatpush1.msra.mxu0 0.0
        %781 = vmatprep.subr.mxu0 0.0
        %782 = vmatpush1.msra.mxu0 0.0
        %783 = vmatprep.subr.mxu0 0.0
        %784 = vmatpush1.msra.mxu0 0.0
        %785 = vmatprep.subr.mxu0 0.0
        %786 = vmatpush1.msra.mxu0 0.0
        %787 = vmatprep.subr.mxu0 0.0
        %788 = vmatpush1.msra.mxu0 0.0
        %789 = vmatprep.subr.mxu0 0.0
        %790 = vmatpush1.msra.mxu0 0.0
        %791 = vmatprep.subr.mxu0 0.0
        %792 = vmatpush1.msra.mxu0 0.0
        %793 = vmatprep.subr.mxu0 0.0
        %794 = vmatpush1.msra.mxu0 0.0
        %795 = vmatprep.subr.mxu0 0.0
        %796 = vmatpush1.msra.mxu0 0.0
        %797 = vmatprep.subr.mxu0 0.0
        %798 = vmatpush1.msra.mxu0 0.0
        %799 = vmatprep.subr.mxu0 0.0
        %800 = vmatpush1.msra.mxu0 0.0
        %801 = vmatprep.subr.mxu0 0.0
        %802 = vmatpush1.msra.mxu0 0.0
        %803 = vmatprep.subr.mxu0 0.0
        %804 = vmatpush1.msra.mxu0 0.0
        %805 = vmatprep.subr.mxu0 0.0
        %806 = vmatpush1.msra.mxu0 0.0
        %807 = vmatprep.subr.mxu0 0.0
        %808 = vmatpush1.msra.mxu0 0.0
        %809 = vmatprep.subr.mxu0 0.0
        %810 = vmatpush1.msra.mxu0 0.0
        %811 = vmatprep.subr.mxu0 0.0
        %812 = vmatpush1.msra.mxu0 0.0
        %813 = vmatprep.subr.mxu0 0.0
        %814 = vmatpush1.msra.mxu0 0.0
        %815 = vmatprep.subr.mxu0 0.0
        %816 = vmatpush1.msra.mxu0 0.0
        %817 = vmatprep.subr.mxu0 0.0
        %818 = vmatpush1.msra.mxu0 0.0
        %819 = vmatprep.subr.mxu0 0.0
        %820 = vmatpush1.msra.mxu0 0.0
        %821 = vmatprep.subr.mxu0 0.0
        %822 = vmatpush1.msra.mxu0 0.0
        %823 = vmatprep.subr.mxu0 0.0
        %824 = vmatpush1.msra.mxu0 0.0
        %825 = vmatprep.subr.mxu0 0.0
        %826 = vmatpush1.msra.mxu0 0.0
        %827 = vmatprep.subr.mxu0 0.0
        %828 = vmatpush1.msra.mxu0 0.0
        %829 = vmatprep.subr.mxu0 0.0
        %830 = vmatpush1.msra.mxu0 0.0
        %831 = vmatprep.mubr.f32.mxu0 0.0
        %832 = vmatmul.mubr.f32.gmra.mrb[0].mxu0 %v765
        %v833 = vpop.f32.mrb[0].mxu0
        %v834 = vadd.f32 0.0, %v833
        %v835 = vpop.f32.mrb[0].mxu0
        %836 = vdwg.mxu0
        %837 = vrot.lane.b32.xlu0 %v497, 112
        %v838 = vpop.permute.xlu0 %837
        %839 = vrot.lane.b32.xlu0 %v497, 80
        %v840 = vpop.permute.xlu0 %839
        %v841 = vsel %vm505, %v838, 0
        %v843 = vsel %vm505, %v840, 0
        %845 = vmatprep.subr.mxu0 0.0
        %846 = vmatpush1.xpose.msra.mxu0 %v843
        %847 = vmatprep.subr.mxu0 0.0
        %848 = vmatpush1.xpose.msra.mxu0 0.0
        %849 = vmatprep.subr.mxu0 0.0
        %850 = vmatpush1.xpose.msra.mxu0 0.0
        %851 = vmatprep.subr.mxu0 0.0
        %852 = vmatpush1.xpose.msra.mxu0 0.0
        %853 = vmatprep.subr.mxu0 0.0
        %854 = vmatpush1.xpose.msra.mxu0 0.0
        %855 = vmatprep.subr.mxu0 0.0
        %856 = vmatpush1.xpose.msra.mxu0 0.0
        %857 = vmatprep.subr.mxu0 0.0
        %858 = vmatpush1.xpose.msra.mxu0 0.0
        %859 = vmatprep.subr.mxu0 0.0
        %860 = vmatpush1.xpose.msra.mxu0 0.0
        %861 = vmatprep.subr.mxu0 0.0
        %862 = vmatpush1.xpose.msra.mxu0 0.0
        %863 = vmatprep.subr.mxu0 0.0
        %864 = vmatpush1.xpose.msra.mxu0 0.0
        %865 = vmatprep.subr.mxu0 0.0
        %866 = vmatpush1.xpose.msra.mxu0 0.0
        %867 = vmatprep.subr.mxu0 0.0
        %868 = vmatpush1.xpose.msra.mxu0 0.0
        %869 = vmatprep.subr.mxu0 0.0
        %870 = vmatpush1.xpose.msra.mxu0 0.0
        %871 = vmatprep.subr.mxu0 0.0
        %872 = vmatpush1.xpose.msra.mxu0 0.0
        %873 = vmatprep.subr.mxu0 0.0
        %874 = vmatpush1.xpose.msra.mxu0 0.0
        %875 = vmatprep.subr.mxu0 0.0
        %876 = vmatpush1.xpose.msra.mxu0 0.0
        %877 = vmatprep.subr.mxu0 0.0
        %878 = vmatpush1.xpose.msra.mxu0 0.0
        %879 = vmatprep.subr.mxu0 0.0
        %880 = vmatpush1.xpose.msra.mxu0 0.0
        %881 = vmatprep.subr.mxu0 0.0
        %882 = vmatpush1.xpose.msra.mxu0 0.0
        %883 = vmatprep.subr.mxu0 0.0
        %884 = vmatpush1.xpose.msra.mxu0 0.0
        %885 = vmatprep.subr.mxu0 0.0
        %886 = vmatpush1.xpose.msra.mxu0 0.0
        %887 = vmatprep.subr.mxu0 0.0
        %888 = vmatpush1.xpose.msra.mxu0 0.0
        %889 = vmatprep.subr.mxu0 0.0
        %890 = vmatpush1.xpose.msra.mxu0 0.0
        %891 = vmatprep.subr.mxu0 0.0
        %892 = vmatpush1.xpose.msra.mxu0 0.0
        %893 = vmatprep.subr.mxu0 0.0
        %894 = vmatpush1.xpose.msra.mxu0 0.0
        %895 = vmatprep.subr.mxu0 0.0
        %896 = vmatpush1.xpose.msra.mxu0 0.0
        %897 = vmatprep.subr.mxu0 0.0
        %898 = vmatpush1.xpose.msra.mxu0 0.0
        %899 = vmatprep.subr.mxu0 0.0
        %900 = vmatpush1.xpose.msra.mxu0 0.0
        %901 = vmatprep.subr.mxu0 0.0
        %902 = vmatpush1.xpose.msra.mxu0 0.0
        %903 = vmatprep.subr.mxu0 0.0
        %904 = vmatpush1.xpose.msra.mxu0 0.0
        %905 = vmatprep.subr.mxu0 0.0
        %906 = vmatpush1.xpose.msra.mxu0 0.0
        %907 = vmatprep.subr.mxu0 0.0
        %908 = vmatpush1.xpose.msra.mxu0 0.0
        %909 = vmatprep.mubr.f32.mxu0 0.0
        %910 = vmatmul.mubr.f32.gmra.mrb[0].mxu0 %v841
        %v911 = vpop.f32.mrb[0].mxu0
        %v912 = vadd.f32 0.0, %v911
        %v913 = vpop.f32.mrb[0].mxu0
        %914 = vdwg.mxu0
        %v915 = vsel %vm582, -1e+09, %v912
        %v916 = vsel %vm505, %v915, -inf
        %917 = vmax.xlane.f32.xlu0 %v916
        %v918 = vpop.xlane.xlu0 %917
        %v919 = vsub.f32 %v915, %v918
        %v920 = vmul.f32 %v919, 1.442695
        %v921 = vpow.pop %v920
        %v922 = vsel %vm505, %v921, 0.0
        %923 = vadd.xlane.f32.xlu0 %v922
        %v924 = vpop.xlane.xlu0 %923
        %v925 = vrcp.pop %v924
        %v926 = vmul.f32 %v921, %v925
        %927 = vrot.lane.b32.xlu0 %v497, 48
        %v928 = vpop.permute.xlu0 %927
        %v931 = vsel %vm505, %v926, 0
        %933 = vmatprep.subr.mxu0 0.0
        %934 = vmatpush1.msra.mxu0 %v928
        %935 = vmatprep.subr.mxu0 0.0
        %936 = vmatpush1.msra.mxu0 0.0
        %937 = vmatprep.subr.mxu0 0.0
        %938 = vmatpush1.msra.mxu0 0.0
        %939 = vmatprep.subr.mxu0 0.0
        %940 = vmatpush1.msra.mxu0 0.0
        %941 = vmatprep.subr.mxu0 0.0
        %942 = vmatpush1.msra.mxu0 0.0
        %943 = vmatprep.subr.mxu0 0.0
        %944 = vmatpush1.msra.mxu0 0.0
        %945 = vmatprep.subr.mxu0 0.0
        %946 = vmatpush1.msra.mxu0 0.0
        %947 = vmatprep.subr.mxu0 0.0
        %948 = vmatpush1.msra.mxu0 0.0
        %949 = vmatprep.subr.mxu0 0.0
        %950 = vmatpush1.msra.mxu0 0.0
        %951 = vmatprep.subr.mxu0 0.0
        %952 = vmatpush1.msra.mxu0 0.0
        %953 = vmatprep.subr.mxu0 0.0
        %954 = vmatpush1.msra.mxu0 0.0
        %955 = vmatprep.subr.mxu0 0.0
        %956 = vmatpush1.msra.mxu0 0.0
        %957 = vmatprep.subr.mxu0 0.0
        %958 = vmatpush1.msra.mxu0 0.0
        %959 = vmatprep.subr.mxu0 0.0
        %960 = vmatpush1.msra.mxu0 0.0
        %961 = vmatprep.subr.mxu0 0.0
        %962 = vmatpush1.msra.mxu0 0.0
        %963 = vmatprep.subr.mxu0 0.0
        %964 = vmatpush1.msra.mxu0 0.0
        %965 = vmatprep.subr.mxu0 0.0
        %966 = vmatpush1.msra.mxu0 0.0
        %967 = vmatprep.subr.mxu0 0.0
        %968 = vmatpush1.msra.mxu0 0.0
        %969 = vmatprep.subr.mxu0 0.0
        %970 = vmatpush1.msra.mxu0 0.0
        %971 = vmatprep.subr.mxu0 0.0
        %972 = vmatpush1.msra.mxu0 0.0
        %973 = vmatprep.subr.mxu0 0.0
        %974 = vmatpush1.msra.mxu0 0.0
        %975 = vmatprep.subr.mxu0 0.0
        %976 = vmatpush1.msra.mxu0 0.0
        %977 = vmatprep.subr.mxu0 0.0
        %978 = vmatpush1.msra.mxu0 0.0
        %979 = vmatprep.subr.mxu0 0.0
        %980 = vmatpush1.msra.mxu0 0.0
        %981 = vmatprep.subr.mxu0 0.0
        %982 = vmatpush1.msra.mxu0 0.0
        %983 = vmatprep.subr.mxu0 0.0
        %984 = vmatpush1.msra.mxu0 0.0
        %985 = vmatprep.subr.mxu0 0.0
        %986 = vmatpush1.msra.mxu0 0.0
        %987 = vmatprep.subr.mxu0 0.0
        %988 = vmatpush1.msra.mxu0 0.0
        %989 = vmatprep.subr.mxu0 0.0
        %990 = vmatpush1.msra.mxu0 0.0
        %991 = vmatprep.subr.mxu0 0.0
        %992 = vmatpush1.msra.mxu0 0.0
        %993 = vmatprep.subr.mxu0 0.0
        %994 = vmatpush1.msra.mxu0 0.0
        %995 = vmatprep.subr.mxu0 0.0
        %996 = vmatpush1.msra.mxu0 0.0
        %997 = vmatprep.mubr.f32.mxu0 0.0
        %998 = vmatmul.mubr.f32.gmra.mrb[0].mxu0 %v931
        %v999 = vpop.f32.mrb[0].mxu0
        %v1000 = vadd.f32 0.0, %v999
        %v1001 = vpop.f32.mrb[0].mxu0
        %1002 = vdwg.mxu0
        %1003 = vrot.lane.b32.xlu0 %v497, 104
        %v1004 = vpop.permute.xlu0 %1003
        %1005 = vrot.lane.b32.xlu0 %v497, 72
        %v1006 = vpop.permute.xlu0 %1005
        %v1007 = vsel %vm505, %v1004, 0
        %v1009 = vsel %vm505, %v1006, 0
        %1011 = vmatprep.subr.mxu0 0.0
        %1012 = vmatpush1.xpose.msra.mxu0 %v1009
        %1013 = vmatprep.subr.mxu0 0.0
        %1014 = vmatpush1.xpose.msra.mxu0 0.0
        %1015 = vmatprep.subr.mxu0 0.0
        %1016 = vmatpush1.xpose.msra.mxu0 0.0
        %1017 = vmatprep.subr.mxu0 0.0
        %1018 = vmatpush1.xpose.msra.mxu0 0.0
        %1019 = vmatprep.subr.mxu0 0.0
        %1020 = vmatpush1.xpose.msra.mxu0 0.0
        %1021 = vmatprep.subr.mxu0 0.0
        %1022 = vmatpush1.xpose.msra.mxu0 0.0
        %1023 = vmatprep.subr.mxu0 0.0
        %1024 = vmatpush1.xpose.msra.mxu0 0.0
        %1025 = vmatprep.subr.mxu0 0.0
        %1026 = vmatpush1.xpose.msra.mxu0 0.0
        %1027 = vmatprep.subr.mxu0 0.0
        %1028 = vmatpush1.xpose.msra.mxu0 0.0
        %1029 = vmatprep.subr.mxu0 0.0
        %1030 = vmatpush1.xpose.msra.mxu0 0.0
        %1031 = vmatprep.subr.mxu0 0.0
        %1032 = vmatpush1.xpose.msra.mxu0 0.0
        %1033 = vmatprep.subr.mxu0 0.0
        %1034 = vmatpush1.xpose.msra.mxu0 0.0
        %1035 = vmatprep.subr.mxu0 0.0
        %1036 = vmatpush1.xpose.msra.mxu0 0.0
        %1037 = vmatprep.subr.mxu0 0.0
        %1038 = vmatpush1.xpose.msra.mxu0 0.0
        %1039 = vmatprep.subr.mxu0 0.0
        %1040 = vmatpush1.xpose.msra.mxu0 0.0
        %1041 = vmatprep.subr.mxu0 0.0
        %1042 = vmatpush1.xpose.msra.mxu0 0.0
        %1043 = vmatprep.subr.mxu0 0.0
        %1044 = vmatpush1.xpose.msra.mxu0 0.0
        %1045 = vmatprep.subr.mxu0 0.0
        %1046 = vmatpush1.xpose.msra.mxu0 0.0
        %1047 = vmatprep.subr.mxu0 0.0
        %1048 = vmatpush1.xpose.msra.mxu0 0.0
        %1049 = vmatprep.subr.mxu0 0.0
        %1050 = vmatpush1.xpose.msra.mxu0 0.0
        %1051 = vmatprep.subr.mxu0 0.0
        %1052 = vmatpush1.xpose.msra.mxu0 0.0
        %1053 = vmatprep.subr.mxu0 0.0
        %1054 = vmatpush1.xpose.msra.mxu0 0.0
        %1055 = vmatprep.subr.mxu0 0.0
        %1056 = vmatpush1.xpose.msra.mxu0 0.0
        %1057 = vmatprep.subr.mxu0 0.0
        %1058 = vmatpush1.xpose.msra.mxu0 0.0
        %1059 = vmatprep.subr.mxu0 0.0
        %1060 = vmatpush1.xpose.msra.mxu0 0.0
        %1061 = vmatprep.subr.mxu0 0.0
        %1062 = vmatpush1.xpose.msra.mxu0 0.0
        %1063 = vmatprep.subr.mxu0 0.0
        %1064 = vmatpush1.xpose.msra.mxu0 0.0
        %1065 = vmatprep.subr.mxu0 0.0
        %1066 = vmatpush1.xpose.msra.mxu0 0.0
        %1067 = vmatprep.subr.mxu0 0.0
        %1068 = vmatpush1.xpose.msra.mxu0 0.0
        %1069 = vmatprep.subr.mxu0 0.0
        %1070 = vmatpush1.xpose.msra.mxu0 0.0
        %1071 = vmatprep.subr.mxu0 0.0
        %1072 = vmatpush1.xpose.msra.mxu0 0.0
        %1073 = vmatprep.subr.mxu0 0.0
        %1074 = vmatpush1.xpose.msra.mxu0 0.0
        %1075 = vmatprep.mubr.f32.mxu0 0.0
        %1076 = vmatmul.mubr.f32.gmra.mrb[0].mxu0 %v1007
        %v1077 = vpop.f32.mrb[0].mxu0
        %v1078 = vadd.f32 0.0, %v1077
        %v1079 = vpop.f32.mrb[0].mxu0
        %1080 = vdwg.mxu0
        %v1081 = vsel %vm582, -1e+09, %v1078
        %v1082 = vsel %vm505, %v1081, -inf
        %1083 = vmax.xlane.f32.xlu0 %v1082
        %v1084 = vpop.xlane.xlu0 %1083
        %v1085 = vsub.f32 %v1081, %v1084
        %v1086 = vmul.f32 %v1085, 1.442695
        %v1087 = vpow.pop %v1086
        %v1088 = vsel %vm505, %v1087, 0.0
        %1089 = vadd.xlane.f32.xlu0 %v1088
        %v1090 = vpop.xlane.xlu0 %1089
        %v1091 = vrcp.pop %v1090
        %v1092 = vmul.f32 %v1087, %v1091
        %1093 = vrot.lane.b32.xlu0 %v497, 40
        %v1094 = vpop.permute.xlu0 %1093
        %v1097 = vsel %vm505, %v1092, 0
        %1099 = vmatprep.subr.mxu0 0.0
        %1100 = vmatpush1.msra.mxu0 %v1094
        %1101 = vmatprep.subr.mxu0 0.0
        %1102 = vmatpush1.msra.mxu0 0.0
        %1103 = vmatprep.subr.mxu0 0.0
        %1104 = vmatpush1.msra.mxu0 0.0
        %1105 = vmatprep.subr.mxu0 0.0
        %1106 = vmatpush1.msra.mxu0 0.0
        %1107 = vmatprep.subr.mxu0 0.0
        %1108 = vmatpush1.msra.mxu0 0.0
        %1109 = vmatprep.subr.mxu0 0.0
        %1110 = vmatpush1.msra.mxu0 0.0
        %1111 = vmatprep.subr.mxu0 0.0
        %1112 = vmatpush1.msra.mxu0 0.0
        %1113 = vmatprep.subr.mxu0 0.0
        %1114 = vmatpush1.msra.mxu0 0.0
        %1115 = vmatprep.subr.mxu0 0.0
        %1116 = vmatpush1.msra.mxu0 0.0
        %1117 = vmatprep.subr.mxu0 0.0
        %1118 = vmatpush1.msra.mxu0 0.0
        %1119 = vmatprep.subr.mxu0 0.0
        %1120 = vmatpush1.msra.mxu0 0.0
        %1121 = vmatprep.subr.mxu0 0.0
        %1122 = vmatpush1.msra.mxu0 0.0
        %1123 = vmatprep.subr.mxu0 0.0
        %1124 = vmatpush1.msra.mxu0 0.0
        %1125 = vmatprep.subr.mxu0 0.0
        %1126 = vmatpush1.msra.mxu0 0.0
        %1127 = vmatprep.subr.mxu0 0.0
        %1128 = vmatpush1.msra.mxu0 0.0
        %1129 = vmatprep.subr.mxu0 0.0
        %1130 = vmatpush1.msra.mxu0 0.0
        %1131 = vmatprep.subr.mxu0 0.0
        %1132 = vmatpush1.msra.mxu0 0.0
        %1133 = vmatprep.subr.mxu0 0.0
        %1134 = vmatpush1.msra.mxu0 0.0
        %1135 = vmatprep.subr.mxu0 0.0
        %1136 = vmatpush1.msra.mxu0 0.0
        %1137 = vmatprep.subr.mxu0 0.0
        %1138 = vmatpush1.msra.mxu0 0.0
        %1139 = vmatprep.subr.mxu0 0.0
        %1140 = vmatpush1.msra.mxu0 0.0
        %1141 = vmatprep.subr.mxu0 0.0
        %1142 = vmatpush1.msra.mxu0 0.0
        %1143 = vmatprep.subr.mxu0 0.0
        %1144 = vmatpush1.msra.mxu0 0.0
        %1145 = vmatprep.subr.mxu0 0.0
        %1146 = vmatpush1.msra.mxu0 0.0
        %1147 = vmatprep.subr.mxu0 0.0
        %1148 = vmatpush1.msra.mxu0 0.0
        %1149 = vmatprep.subr.mxu0 0.0
        %1150 = vmatpush1.msra.mxu0 0.0
        %1151 = vmatprep.subr.mxu0 0.0
        %1152 = vmatpush1.msra.mxu0 0.0
        %1153 = vmatprep.subr.mxu0 0.0
        %1154 = vmatpush1.msra.mxu0 0.0
        %1155 = vmatprep.subr.mxu0 0.0
        %1156 = vmatpush1.msra.mxu0 0.0
        %1157 = vmatprep.subr.mxu0 0.0
        %1158 = vmatpush1.msra.mxu0 0.0
        %1159 = vmatprep.subr.mxu0 0.0
        %1160 = vmatpush1.msra.mxu0 0.0
        %1161 = vmatprep.subr.mxu0 0.0
        %1162 = vmatpush1.msra.mxu0 0.0
        %1163 = vmatprep.mubr.f32.mxu0 0.0
        %1164 = vmatmul.mubr.f32.gmra.mrb[0].mxu0 %v1097
        %v1165 = vpop.f32.mrb[0].mxu0
        %v1166 = vadd.f32 0.0, %v1165
        %v1167 = vpop.f32.mrb[0].mxu0
        %1168 = vdwg.mxu0
        %1170 = vrot.lane.b32.xlu0 %v834, 8
        %v1171 = vpop.permute.xlu0 %1170
        %1174 = vrot.lane.b32.xlu0 %v1000, 16
        %v1175 = vpop.permute.xlu0 %1174
        %1178 = vrot.lane.b32.xlu0 %v1166, 24
        %v1179 = vpop.permute.xlu0 %1178
        %v1181 = vsel %vm505, %v668, %v1171
        %vm1182 = vcmask 130048
        %v1183 = vsel %vm1182, %v1181, %v1175
        %vm1184 = vcmask 195584
        %v1185 = vsel %vm1184, %v1183, %v1179
        %v1186 = vld [vmem:[%s4] sm:$0xff]
        %v1187 = vld [vmem:[%s4 + $0x8] sm:$0xff]
        %v1188 = vld [vmem:[%s4 + $0x10] sm:$0xff]
        %v1189 = vld [vmem:[%s4 + $0x18] sm:$0xff]
        %v1190 = vld [vmem:[%s5] sm:$0x1]
        %v1192 = vlaneseq
        %v1193 = vshrl.u32 %v1192, 7
        %v1194 = vsub.s32 0, %v1193
        %v1195 = vrot.slane %v1190, %v1194
        %v1198 = vsel %vm426, %v1185, 0
        %1200 = vmatprep.subr.mxu0 0.0
        %1201 = vmatpush1.msra.mxu0 %v1186
        %1202 = vmatprep.subr.mxu0 0.0
        %1203 = vmatpush1.msra.mxu0 %v1187
        %1204 = vmatprep.subr.mxu0 0.0
        %1205 = vmatpush1.msra.mxu0 %v1188
        %1206 = vmatprep.subr.mxu0 0.0
        %1207 = vmatpush1.msra.mxu0 %v1189
        %1208 = vmatprep.subr.mxu0 0.0
        %1209 = vmatpush1.msra.mxu0 0.0
        %1210 = vmatprep.subr.mxu0 0.0
        %1211 = vmatpush1.msra.mxu0 0.0
        %1212 = vmatprep.subr.mxu0 0.0
        %1213 = vmatpush1.msra.mxu0 0.0
        %1214 = vmatprep.subr.mxu0 0.0
        %1215 = vmatpush1.msra.mxu0 0.0
        %1216 = vmatprep.subr.mxu0 0.0
        %1217 = vmatpush1.msra.mxu0 0.0
        %1218 = vmatprep.subr.mxu0 0.0
        %1219 = vmatpush1.msra.mxu0 0.0
        %1220 = vmatprep.subr.mxu0 0.0
        %1221 = vmatpush1.msra.mxu0 0.0
        %1222 = vmatprep.subr.mxu0 0.0
        %1223 = vmatpush1.msra.mxu0 0.0
        %1224 = vmatprep.subr.mxu0 0.0
        %1225 = vmatpush1.msra.mxu0 0.0
        %1226 = vmatprep.subr.mxu0 0.0
        %1227 = vmatpush1.msra.mxu0 0.0
        %1228 = vmatprep.subr.mxu0 0.0
        %1229 = vmatpush1.msra.mxu0 0.0
        %1230 = vmatprep.subr.mxu0 0.0
        %1231 = vmatpush1.msra.mxu0 0.0
        %1232 = vmatprep.subr.mxu0 0.0
        %1233 = vmatpush1.msra.mxu0 0.0
        %1234 = vmatprep.subr.mxu0 0.0
        %1235 = vmatpush1.msra.mxu0 0.0
        %1236 = vmatprep.subr.mxu0 0.0
        %1237 = vmatpush1.msra.mxu0 0.0
        %1238 = vmatprep.subr.mxu0 0.0
        %1239 = vmatpush1.msra.mxu0 0.0
        %1240 = vmatprep.subr.mxu0 0.0
        %1241 = vmatpush1.msra.mxu0 0.0
        %1242 = vmatprep.subr.mxu0 0.0
        %1243 = vmatpush1.msra.mxu0 0.0
        %1244 = vmatprep.subr.mxu0 0.0
        %1245 = vmatpush1.msra.mxu0 0.0
        %1246 = vmatprep.subr.mxu0 0.0
        %1247 = vmatpush1.msra.mxu0 0.0
        %1248 = vmatprep.subr.mxu0 0.0
        %1249 = vmatpush1.msra.mxu0 0.0
        %1250 = vmatprep.subr.mxu0 0.0
        %1251 = vmatpush1.msra.mxu0 0.0
        %1252 = vmatprep.subr.mxu0 0.0
        %1253 = vmatpush1.msra.mxu0 0.0
        %1254 = vmatprep.subr.mxu0 0.0
        %1255 = vmatpush1.msra.mxu0 0.0
        %1256 = vmatprep.subr.mxu0 0.0
        %1257 = vmatpush1.msra.mxu0 0.0
        %1258 = vmatprep.subr.mxu0 0.0
        %1259 = vmatpush1.msra.mxu0 0.0
        %1260 = vmatprep.subr.mxu0 0.0
        %1261 = vmatpush1.msra.mxu0 0.0
        %1262 = vmatprep.subr.mxu0 0.0
        %1263 = vmatpush1.msra.mxu0 0.0
        %1264 = vmatprep.mubr.f32.mxu0 0.0
        %1265 = vmatmul.mubr.f32.gmra.mrb[0].mxu0 %v1198
        %v1266 = vpop.f32.mrb[0].mxu0
        %v1267 = vadd.f32 %v1195, %v1266
        %v1268 = vpop.f32.mrb[0].mxu0
        %1269 = vdwg.mxu0
        %v1270 = vld [vmem:[%s6] sm:$0xff]
        %v1271 = vld [vmem:[%s6 + $0x8] sm:$0xff]
        %v1272 = vld [vmem:[%s6 + $0x10] sm:$0xff]
        %v1273 = vld [vmem:[%s6 + $0x18] sm:$0xff]
        %v1274 = vld [vmem:[%s7] sm:$0x1]
        %v1276 = vlaneseq
        %v1277 = vshrl.u32 %v1276, 7
        %v1278 = vsub.s32 0, %v1277
        %v1279 = vrot.slane %v1274, %v1278
        %v1282 = vsel %vm426, %v1267, 0
        %1284 = vmatprep.subr.mxu0 0.0
        %1285 = vmatpush1.msra.mxu0 %v1270
        %1286 = vmatprep.subr.mxu0 0.0
        %1287 = vmatpush1.msra.mxu0 %v1271
        %1288 = vmatprep.subr.mxu0 0.0
        %1289 = vmatpush1.msra.mxu0 %v1272
        %1290 = vmatprep.subr.mxu0 0.0
        %1291 = vmatpush1.msra.mxu0 %v1273
        %1292 = vmatprep.subr.mxu0 0.0
        %1293 = vmatpush1.msra.mxu0 0.0
        %1294 = vmatprep.subr.mxu0 0.0
        %1295 = vmatpush1.msra.mxu0 0.0
        %1296 = vmatprep.subr.mxu0 0.0
        %1297 = vmatpush1.msra.mxu0 0.0
        %1298 = vmatprep.subr.mxu0 0.0
        %1299 = vmatpush1.msra.mxu0 0.0
        %1300 = vmatprep.subr.mxu0 0.0
        %1301 = vmatpush1.msra.mxu0 0.0
        %1302 = vmatprep.subr.mxu0 0.0
        %1303 = vmatpush1.msra.mxu0 0.0
        %1304 = vmatprep.subr.mxu0 0.0
        %1305 = vmatpush1.msra.mxu0 0.0
        %1306 = vmatprep.subr.mxu0 0.0
        %1307 = vmatpush1.msra.mxu0 0.0
        %1308 = vmatprep.subr.mxu0 0.0
        %1309 = vmatpush1.msra.mxu0 0.0
        %1310 = vmatprep.subr.mxu0 0.0
        %1311 = vmatpush1.msra.mxu0 0.0
        %1312 = vmatprep.subr.mxu0 0.0
        %1313 = vmatpush1.msra.mxu0 0.0
        %1314 = vmatprep.subr.mxu0 0.0
        %1315 = vmatpush1.msra.mxu0 0.0
        %1316 = vmatprep.subr.mxu0 0.0
        %1317 = vmatpush1.msra.mxu0 0.0
        %1318 = vmatprep.subr.mxu0 0.0
        %1319 = vmatpush1.msra.mxu0 0.0
        %1320 = vmatprep.subr.mxu0 0.0
        %1321 = vmatpush1.msra.mxu0 0.0
        %1322 = vmatprep.subr.mxu0 0.0
        %1323 = vmatpush1.msra.mxu0 0.0
        %1324 = vmatprep.subr.mxu0 0.0
        %1325 = vmatpush1.msra.mxu0 0.0
        %1326 = vmatprep.subr.mxu0 0.0
        %1327 = vmatpush1.msra.mxu0 0.0
        %1328 = vmatprep.subr.mxu0 0.0
        %1329 = vmatpush1.msra.mxu0 0.0
        %1330 = vmatprep.subr.mxu0 0.0
        %1331 = vmatpush1.msra.mxu0 0.0
        %1332 = vmatprep.subr.mxu0 0.0
        %1333 = vmatpush1.msra.mxu0 0.0
        %1334 = vmatprep.subr.mxu0 0.0
        %1335 = vmatpush1.msra.mxu0 0.0
        %1336 = vmatprep.subr.mxu0 0.0
        %1337 = vmatpush1.msra.mxu0 0.0
        %1338 = vmatprep.subr.mxu0 0.0
        %1339 = vmatpush1.msra.mxu0 0.0
        %1340 = vmatprep.subr.mxu0 0.0
        %1341 = vmatpush1.msra.mxu0 0.0
        %1342 = vmatprep.subr.mxu0 0.0
        %1343 = vmatpush1.msra.mxu0 0.0
        %1344 = vmatprep.subr.mxu0 0.0
        %1345 = vmatpush1.msra.mxu0 0.0
        %1346 = vmatprep.subr.mxu0 0.0
        %1347 = vmatpush1.msra.mxu0 0.0
        %1348 = vmatprep.mubr.f32.mxu0 0.0
        %1349 = vmatmul.mubr.f32.gmra.mrb[0].mxu0 %v1282
        %v1350 = vpop.f32.mrb[0].mxu0
        %v1351 = vadd.f32 %v1279, %v1350
        %v1352 = vpop.f32.mrb[0].mxu0
        %1353 = vdwg.mxu0
        %v1354 = vmax.f32 %v1351, 0.0
        %v1355 = vld [vmem:[%s8] sm:$0xff]
        %v1356 = vld [vmem:[%s8 + $0x8] sm:$0xff]
        %v1357 = vld [vmem:[%s8 + $0x10] sm:$0xff]
        %v1358 = vld [vmem:[%s8 + $0x18] sm:$0xff]
        %v1359 = vld [vmem:[%s8 + $0x20] sm:$0xff]
        %v1360 = vld [vmem:[%s8 + $0x28] sm:$0xff]
        %v1361 = vld [vmem:[%s8 + $0x30] sm:$0xff]
        %v1362 = vld [vmem:[%s8 + $0x38] sm:$0xff]
        %v1363 = vld [vmem:[%s9] sm:$0x1]
        %v1365 = vlaneseq
        %v1366 = vshrl.u32 %v1365, 7
        %v1367 = vsub.s32 0, %v1366
        %v1368 = vrot.slane %v1363, %v1367
        %vm1370 = vcmask 523264
        %v1372 = vsel %vm1370, %v1354, 0
        %1374 = vmatprep.subr.mxu0 0.0
        %1375 = vmatpush1.msra.mxu0 %v1355
        %1376 = vmatprep.subr.mxu0 0.0
        %1377 = vmatpush1.msra.mxu0 %v1356
        %1378 = vmatprep.subr.mxu0 0.0
        %1379 = vmatpush1.msra.mxu0 %v1357
        %1380 = vmatprep.subr.mxu0 0.0
        %1381 = vmatpush1.msra.mxu0 %v1358
        %1382 = vmatprep.subr.mxu0 0.0
        %1383 = vmatpush1.msra.mxu0 %v1359
        %1384 = vmatprep.subr.mxu0 0.0
        %1385 = vmatpush1.msra.mxu0 %v1360
        %1386 = vmatprep.subr.mxu0 0.0
        %1387 = vmatpush1.msra.mxu0 %v1361
        %1388 = vmatprep.subr.mxu0 0.0
        %1389 = vmatpush1.msra.mxu0 %v1362
        %1390 = vmatprep.subr.mxu0 0.0
        %1391 = vmatpush1.msra.mxu0 0.0
        %1392 = vmatprep.subr.mxu0 0.0
        %1393 = vmatpush1.msra.mxu0 0.0
        %1394 = vmatprep.subr.mxu0 0.0
        %1395 = vmatpush1.msra.mxu0 0.0
        %1396 = vmatprep.subr.mxu0 0.0
        %1397 = vmatpush1.msra.mxu0 0.0
        %1398 = vmatprep.subr.mxu0 0.0
        %1399 = vmatpush1.msra.mxu0 0.0
        %1400 = vmatprep.subr.mxu0 0.0
        %1401 = vmatpush1.msra.mxu0 0.0
        %1402 = vmatprep.subr.mxu0 0.0
        %1403 = vmatpush1.msra.mxu0 0.0
        %1404 = vmatprep.subr.mxu0 0.0
        %1405 = vmatpush1.msra.mxu0 0.0
        %1406 = vmatprep.subr.mxu0 0.0
        %1407 = vmatpush1.msra.mxu0 0.0
        %1408 = vmatprep.subr.mxu0 0.0
        %1409 = vmatpush1.msra.mxu0 0.0
        %1410 = vmatprep.subr.mxu0 0.0
        %1411 = vmatpush1.msra.mxu0 0.0
        %1412 = vmatprep.subr.mxu0 0.0
        %1413 = vmatpush1.msra.mxu0 0.0
        %1414 = vmatprep.subr.mxu0 0.0
        %1415 = vmatpush1.msra.mxu0 0.0
        %1416 = vmatprep.subr.mxu0 0.0
        %1417 = vmatpush1.msra.mxu0 0.0
        %1418 = vmatprep.subr.mxu0 0.0
        %1419 = vmatpush1.msra.mxu0 0.0
        %1420 = vmatprep.subr.mxu0 0.0
        %1421 = vmatpush1.msra.mxu0 0.0
        %1422 = vmatprep.subr.mxu0 0.0
        %1423 = vmatpush1.msra.mxu0 0.0
        %1424 = vmatprep.subr.mxu0 0.0
        %1425 = vmatpush1.msra.mxu0 0.0
        %1426 = vmatprep.subr.mxu0 0.0
        %1427 = vmatpush1.msra.mxu0 0.0
        %1428 = vmatprep.subr.mxu0 0.0
        %1429 = vmatpush1.msra.mxu0 0.0
        %1430 = vmatprep.subr.mxu0 0.0
        %1431 = vmatpush1.msra.mxu0 0.0
        %1432 = vmatprep.subr.mxu0 0.0
        %1433 = vmatpush1.msra.mxu0 0.0
        %1434 = vmatprep.subr.mxu0 0.0
        %1435 = vmatpush1.msra.mxu0 0.0
        %1436 = vmatprep.subr.mxu0 0.0
        %1437 = vmatpush1.msra.mxu0 0.0
        %1438 = vmatprep.mubr.f32.mxu0 0.0
        %1439 = vmatmul.mubr.f32.gmra.mrb[0].mxu0 %v1372
        %v1440 = vpop.f32.mrb[0].mxu0
        %v1441 = vadd.f32 %v1368, %v1440
        %v1442 = vpop.f32.mrb[0].mxu0
        %1443 = vdwg.mxu0
        %1444 = vst.msk [vmem:[%s411] sm:$0xff] %vm426, %v1441
        %s1445 = sand.u32 %s258, 1
        %s1446 = scalar_lea.sflag [#allocation4], %s1445
        %s1447 = sand.u32 %s258, 1
        %s1448 = smul.addr %s1447, 8
        %s1449 = scalar_lea.vmem [#allocation7], %s1448
        // Predicated region
        $region69: #{tpu_custom_call.1} parent=59 // pred_check
          %p1450 = pneg %p268
        $region70: #{tpu_custom_call.1} parent=59 // pred_check_branch
          %1452 = sbr.rel (%p1450) target = $region72
        $region71: #{tpu_custom_call.1} parent=59 // pred_region
          %s1454 = ssub.s32 128, 128
          %1455 = vsyncadd %s1446, %s1454
          %s1456 = smul.addr %s30, 128
          %s1457 = scalar_lea.hbm %s10, %s1456
          %s1459 = sshll.u32 %s1449, 4
          %s1460 = int_to_ptr.vmem [resolvable:$true] %s1459
          %1462 = dma.vmem_to_hbm [thread:$0]  %s1460, 128, %s1457, %s1446
        $region72: #{tpu_custom_call.1} parent=59 // pred_fallthru
          _
      $region60: #{tpu_custom_call.1} parent=5 // pred_fallthru
        _
      %p1463 = scmp.le.s32.totalorder 2, %s25
      // Predicated region
      $region73: #{tpu_custom_call.1} parent=5 // pred_check
        %p1464 = pneg %p1463
      $region74: #{tpu_custom_call.1} parent=5 // pred_check_branch
        %1466 = sbr.rel (%p1464) target = $region76
      $region75: #{tpu_custom_call.1} parent=5 // pred_region
        %s1467 = ssub.s32 %s25, 2
        // Predicated region
        $region77: #{tpu_custom_call.1} parent=75 // pred_check
          %p1468 = pneg %p274
        $region78: #{tpu_custom_call.1} parent=75 // pred_check_branch
          %1470 = sbr.rel (%p1468) target = $region80
        $region79: #{tpu_custom_call.1} parent=75 // pred_region
          %s1471 = sand.u32 %s259, 1
          %s1472 = scalar_lea.sflag [#allocation4], %s1471
          %s1473 = sand.u32 %s259, 1
          %s1474 = smul.addr %s1473, 8
          %s1475 = scalar_lea.vmem [#allocation7], %s1474
          %1476 = dma.done %s1472, 128
        $region80: #{tpu_custom_call.1} parent=75 // pred_fallthru
          _
      $region76: #{tpu_custom_call.1} parent=5 // pred_fallthru
        _
    $region6: #{tpu_custom_call.1} parent=1 // loop_footer
      %s29 = sadd.s32 1, %s25
    $region7: #{tpu_custom_call.1} parent=1 // loop_footer_branch
      %24 = sbr.rel target = $region3
    $region8: #{tpu_custom_call.1} parent=1 // loop_exit
      _
    %1477 = vsyncpa [#allocation3], 1
    %s1478 = scalar_lea.sflag [#allocation3], 1
    %1479 = vsyncpa %s1478, 1
    %1480 = vsyncpa [#allocation6], 1
    %s1481 = scalar_lea.sflag [#allocation6], 1
    %1482 = vsyncpa %s1481, 1
    %1483 = vsyncpa [#allocation4], 1
    %s1484 = scalar_lea.sflag [#allocation4], 1
    %1485 = vsyncpa %s1484, 1

</llo_original>
